<compile_context>
chip_gen: v7x
topology: tpu7x:2x2x1
jax: 0.10.0
libtpu: 0.0.40
codegen_flags: <defaults>
</compile_context>

<pallas_src>
import jax
import jax.numpy as jnp
from jax.experimental import pallas as pl
from jax.experimental.pallas import tpu as pltpu

D_IN = 784
DIMS = [784, 256, 128, 64, 128, 256, 784]
BOTTLENECK_PAD = 128  # pad the 64-wide bottleneck to a full vreg lane width


def _round_up(x, m):
    return (x + m - 1) // m * m


def _make_denoiser_kernel(compute_dtype):
    def denoiser_kernel(x_ref,
                        w1, b1, w2, b2, w3, b3,   # encoder
                        w4, b4, w5, b5, w6, b6,   # decoder
                        o_ref):
        def linear(h, w_ref, b_ref):
            # MXU matmul with f32 accumulation; f32 bias add.
            return jnp.dot(h, w_ref[...],
                           preferred_element_type=jnp.float32) + b_ref[...]

        h = x_ref[...].astype(compute_dtype)
        # encoder (ReLU on the f32 accumulator, recast between layers)
        h = jnp.maximum(linear(h, w1, b1), 0.0).astype(compute_dtype)
        h = jnp.maximum(linear(h, w2, b2), 0.0).astype(compute_dtype)
        h = jnp.maximum(linear(h, w3, b3), 0.0).astype(compute_dtype)
        # decoder
        h = jnp.maximum(linear(h, w4, b4), 0.0).astype(compute_dtype)
        h = jnp.maximum(linear(h, w5, b5), 0.0).astype(compute_dtype)
        h = linear(h, w6, b6)                      # (TB, 784) f32
        # sigmoid(h) == 0.5 * tanh(0.5 * h) + 0.5  -> one EUP op, no divide.
        o_ref[...] = (jnp.tanh(h * 0.5) * 0.5 + 0.5).astype(o_ref.dtype)

    return denoiser_kernel


def denoiser_forward(x, params, *, tb=512, compute_dtype=jnp.bfloat16,
                     out_dtype=jnp.float32,
                     vmem_limit_bytes=48 * 1024 * 1024):
    """x: (B, 784). params: list of 6 (W (in,out) f32, b (1,out) f32)."""
    B, F = x.shape
    assert F == D_IN

    # Batch tile: at most tb, but never so large that the grid collapses to a
    # single step (keeps both v7x TensorCores busy for small batches).
    half_b = _round_up(-(-B // 2), 8)
    tb_eff = max(8, min(tb, half_b))
    Bp = _round_up(B, tb_eff)

    # Only the batch tail (if any) costs a wrapper pad pass; no dtype cast
    # pass (the kernel casts in VMEM) and no output column pad/slice pass.
    if Bp != B:
        x = jnp.pad(x, ((0, Bp - B), (0, 0)))

    # Flatten params: compute-dtype weights, f32 biases.  Layers 3/4 are
    # zero-padded so the 64-wide bottleneck occupies a full 128-lane vreg
    # (numerically exact: extra activations are ReLU(0)=0 and meet zero rows).
    flat_params = []
    param_specs = []
    for li, (w, b) in enumerate(params):
        w = w.astype(compute_dtype)
        b = b.astype(jnp.float32).reshape(1, -1)
        if li == 2:   # 128 -> 64 : pad out-features to 128
            w = jnp.pad(w, ((0, 0), (0, BOTTLENECK_PAD - DIMS[3])))
            b = jnp.pad(b, ((0, 0), (0, BOTTLENECK_PAD - DIMS[3])))
        if li == 3:   # 64 -> 128 : pad in-features to 128
            w = jnp.pad(w, ((0, BOTTLENECK_PAD - DIMS[3]), (0, 0)))
        flat_params.extend([w, b])
        # Constant index maps: each weight/bias is DMA'd to VMEM once and
        # stays resident across all batch tiles.
        param_specs.append(pl.BlockSpec(w.shape, lambda i: (0, 0)))
        param_specs.append(pl.BlockSpec(b.shape, lambda i: (0, 0)))

    x_spec = pl.BlockSpec((tb_eff, D_IN), lambda i: (i, 0))
    out_spec = pl.BlockSpec((tb_eff, D_IN), lambda i: (i, 0))

    flops = 2 * Bp * sum(DIMS[i] * DIMS[i + 1] for i in range(6))
    transcendentals = Bp * DIMS[-1]
    bytes_accessed = (x.size * x.dtype.itemsize
                      + sum(p.size * p.dtype.itemsize for p in flat_params)
                      + Bp * D_IN * jnp.dtype(out_dtype).itemsize)

    out = pl.pallas_call(
        _make_denoiser_kernel(compute_dtype),
        out_shape=jax.ShapeDtypeStruct((Bp, D_IN), out_dtype),
        grid_spec=pltpu.PrefetchScalarGridSpec(
            num_scalar_prefetch=0,
            grid=(Bp // tb_eff,),
            in_specs=[x_spec] + param_specs,
            out_specs=out_spec,
        ),
        compiler_params=pltpu.CompilerParams(
            dimension_semantics=("parallel",),   # batch tiles shard across TCs
            vmem_limit_bytes=vmem_limit_bytes,
        ),
        cost_estimate=pl.CostEstimate(
            flops=flops,
            transcendentals=transcendentals,
            bytes_accessed=bytes_accessed,
        ),
    )(x, *flat_params)

    return out[:B] if Bp != B else out


def init_params(key):
    """Deterministic init matching PyTorch Linear shapes, stored as (in, out)."""
    params = []
    for li in range(6):
        fan_in, fan_out = DIMS[li], DIMS[li + 1]
        key, kw, kb = jax.random.split(key, 3)
        bound = 1.0 / jnp.sqrt(fan_in)
        w = jax.random.uniform(kw, (fan_in, fan_out), jnp.float32, -bound, bound)
        b = jax.random.uniform(kb, (1, fan_out), jnp.float32, -bound, bound)
        params.append((w, b))
    return params


def reference_forward(x, params):
    h = x
    for li, (w, b) in enumerate(params):
        h = h @ w + b
        h = jax.nn.sigmoid(h) if li == 5 else jnp.maximum(h, 0.0)
    return h


if __name__ == "__main__":
    key = jax.random.PRNGKey(0)
    key, kx = jax.random.split(key)

    # Non-multiple batch exercises the pad/slice tail path; tb_eff becomes 256
    # so the grid has 2 parallel steps (one per v7x TensorCore).
    B = 500
    x = jax.random.uniform(kx, (B, D_IN), jnp.float32)

    params = init_params(jax.random.PRNGKey(0))

    out = denoiser_forward(x, params)
    out = jax.block_until_ready(out)

    ref = reference_forward(x, params)  # f32 reference

    assert out.shape == (B, D_IN)
    assert out.dtype == jnp.float32
    # bf16 weights/activations => looser tolerance than a pure-f32 pipeline.
    err = float(jnp.max(jnp.abs(out - ref)))
    assert err < 2e-2, err

    print("KERNEL_OK")
</pallas_src>

<mosaic_0001>
module attributes {stable_mosaic.version = 11 : i64} {
  func.func @denoiser_kernel(%arg0: i32, %arg1: memref<256x784xf32, #tpu.memory_space<vmem>>, %arg2: memref<784x256xbf16, #tpu.memory_space<vmem>>, %arg3: memref<1x256xf32, #tpu.memory_space<vmem>>, %arg4: memref<256x128xbf16, #tpu.memory_space<vmem>>, %arg5: memref<1x128xf32, #tpu.memory_space<vmem>>, %arg6: memref<128x128xbf16, #tpu.memory_space<vmem>>, %arg7: memref<1x128xf32, #tpu.memory_space<vmem>>, %arg8: memref<128x128xbf16, #tpu.memory_space<vmem>>, %arg9: memref<1x128xf32, #tpu.memory_space<vmem>>, %arg10: memref<128x256xbf16, #tpu.memory_space<vmem>>, %arg11: memref<1x256xf32, #tpu.memory_space<vmem>>, %arg12: memref<256x784xbf16, #tpu.memory_space<vmem>>, %arg13: memref<1x784xf32, #tpu.memory_space<vmem>>, %arg14: memref<256x784xf32, #tpu.memory_space<vmem>>) attributes {dimension_semantics = [#tpu.dimension_semantics<parallel>], iteration_bounds = array<i64: 2>, scalar_prefetch = 0 : i64, scratch_operands = 0 : i64, tpu.core_type = #tpu.core_type<tc>, window_params = [{transform_indices = @transform_0, window_bounds = array<i64: 256, 784>}, {pipeline_mode = #tpu.pipeline_mode<synchronous>, transform_indices = @transform_1, window_bounds = array<i64: 784, 256>}, {pipeline_mode = #tpu.pipeline_mode<synchronous>, transform_indices = @transform_2, window_bounds = array<i64: 1, 256>}, {pipeline_mode = #tpu.pipeline_mode<synchronous>, transform_indices = @transform_3, window_bounds = array<i64: 256, 128>}, {pipeline_mode = #tpu.pipeline_mode<synchronous>, transform_indices = @transform_4, window_bounds = array<i64: 1, 128>}, {pipeline_mode = #tpu.pipeline_mode<synchronous>, transform_indices = @transform_5, window_bounds = array<i64: 128, 128>}, {pipeline_mode = #tpu.pipeline_mode<synchronous>, transform_indices = @transform_6, window_bounds = array<i64: 1, 128>}, {pipeline_mode = #tpu.pipeline_mode<synchronous>, transform_indices = @transform_7, window_bounds = array<i64: 128, 128>}, {pipeline_mode = #tpu.pipeline_mode<synchronous>, transform_indices = @transform_8, window_bounds = array<i64: 1, 128>}, {pipeline_mode = #tpu.pipeline_mode<synchronous>, transform_indices = @transform_9, window_bounds = array<i64: 128, 256>}, {pipeline_mode = #tpu.pipeline_mode<synchronous>, transform_indices = @transform_10, window_bounds = array<i64: 1, 256>}, {pipeline_mode = #tpu.pipeline_mode<synchronous>, transform_indices = @transform_11, window_bounds = array<i64: 256, 784>}, {pipeline_mode = #tpu.pipeline_mode<synchronous>, transform_indices = @transform_12, window_bounds = array<i64: 1, 784>}, {transform_indices = @transform_13, window_bounds = array<i64: 256, 784>}]} {
    %c0 = arith.constant 0 : index
    %c0_0 = arith.constant 0 : index
    %0 = vector.load %arg1[%c0, %c0_0] : memref<256x784xf32, #tpu.memory_space<vmem>>, vector<256x784xf32>
    %1 = arith.truncf %0 : vector<256x784xf32> to vector<256x784xbf16>
    %c0_1 = arith.constant 0 : index
    %c0_2 = arith.constant 0 : index
    %2 = vector.load %arg2[%c0_1, %c0_2] : memref<784x256xbf16, #tpu.memory_space<vmem>>, vector<784x256xbf16>
    %cst = arith.constant dense<0.000000e+00> : vector<256x256xf32>
    %3 = tpu.matmul %1, %2, %cst {dimension_numbers = #tpu.dot_dimension_numbers<[1], [0], [0], [1], [0, 0, 1, 1], [], []>} : vector<256x784xbf16>, vector<784x256xbf16>, vector<256x256xf32> -> vector<256x256xf32>
    %c0_3 = arith.constant 0 : index
    %c0_4 = arith.constant 0 : index
    %4 = vector.load %arg3[%c0_3, %c0_4] : memref<1x256xf32, #tpu.memory_space<vmem>>, vector<1x256xf32>
    %5 = vector.broadcast %4 : vector<1x256xf32> to vector<256x256xf32>
    %6 = arith.addf %3, %5 : vector<256x256xf32>
    %cst_5 = arith.constant 0.000000e+00 : f32
    %7 = vector.broadcast %cst_5 : f32 to vector<256x256xf32>
    %8 = arith.maximumf %6, %7 : vector<256x256xf32>
    %9 = arith.truncf %8 : vector<256x256xf32> to vector<256x256xbf16>
    %c0_6 = arith.constant 0 : index
    %c0_7 = arith.constant 0 : index
    %10 = vector.load %arg4[%c0_6, %c0_7] : memref<256x128xbf16, #tpu.memory_space<vmem>>, vector<256x128xbf16>
    %cst_8 = arith.constant dense<0.000000e+00> : vector<256x128xf32>
    %11 = tpu.matmul %9, %10, %cst_8 {dimension_numbers = #tpu.dot_dimension_numbers<[1], [0], [0], [1], [0, 0, 1, 1], [], []>} : vector<256x256xbf16>, vector<256x128xbf16>, vector<256x128xf32> -> vector<256x128xf32>
    %c0_9 = arith.constant 0 : index
    %c0_10 = arith.constant 0 : index
    %12 = vector.load %arg5[%c0_9, %c0_10] : memref<1x128xf32, #tpu.memory_space<vmem>>, vector<1x128xf32>
    %13 = vector.broadcast %12 : vector<1x128xf32> to vector<256x128xf32>
    %14 = arith.addf %11, %13 : vector<256x128xf32>
    %cst_11 = arith.constant 0.000000e+00 : f32
    %15 = vector.broadcast %cst_11 : f32 to vector<256x128xf32>
    %16 = arith.maximumf %14, %15 : vector<256x128xf32>
    %17 = arith.truncf %16 : vector<256x128xf32> to vector<256x128xbf16>
    %c0_12 = arith.constant 0 : index
    %c0_13 = arith.constant 0 : index
    %18 = vector.load %arg6[%c0_12, %c0_13] : memref<128x128xbf16, #tpu.memory_space<vmem>>, vector<128x128xbf16>
    %cst_14 = arith.constant dense<0.000000e+00> : vector<256x128xf32>
    %19 = tpu.matmul %17, %18, %cst_14 {dimension_numbers = #tpu.dot_dimension_numbers<[1], [0], [0], [1], [0, 0, 1, 1], [], []>} : vector<256x128xbf16>, vector<128x128xbf16>, vector<256x128xf32> -> vector<256x128xf32>
    %c0_15 = arith.constant 0 : index
    %c0_16 = arith.constant 0 : index
    %20 = vector.load %arg7[%c0_15, %c0_16] : memref<1x128xf32, #tpu.memory_space<vmem>>, vector<1x128xf32>
    %21 = vector.broadcast %20 : vector<1x128xf32> to vector<256x128xf32>
    %22 = arith.addf %19, %21 : vector<256x128xf32>
    %cst_17 = arith.constant 0.000000e+00 : f32
    %23 = vector.broadcast %cst_17 : f32 to vector<256x128xf32>
    %24 = arith.maximumf %22, %23 : vector<256x128xf32>
    %25 = arith.truncf %24 : vector<256x128xf32> to vector<256x128xbf16>
    %c0_18 = arith.constant 0 : index
    %c0_19 = arith.constant 0 : index
    %26 = vector.load %arg8[%c0_18, %c0_19] : memref<128x128xbf16, #tpu.memory_space<vmem>>, vector<128x128xbf16>
    %cst_20 = arith.constant dense<0.000000e+00> : vector<256x128xf32>
    %27 = tpu.matmul %25, %26, %cst_20 {dimension_numbers = #tpu.dot_dimension_numbers<[1], [0], [0], [1], [0, 0, 1, 1], [], []>} : vector<256x128xbf16>, vector<128x128xbf16>, vector<256x128xf32> -> vector<256x128xf32>
    %c0_21 = arith.constant 0 : index
    %c0_22 = arith.constant 0 : index
    %28 = vector.load %arg9[%c0_21, %c0_22] : memref<1x128xf32, #tpu.memory_space<vmem>>, vector<1x128xf32>
    %29 = vector.broadcast %28 : vector<1x128xf32> to vector<256x128xf32>
    %30 = arith.addf %27, %29 : vector<256x128xf32>
    %cst_23 = arith.constant 0.000000e+00 : f32
    %31 = vector.broadcast %cst_23 : f32 to vector<256x128xf32>
    %32 = arith.maximumf %30, %31 : vector<256x128xf32>
    %33 = arith.truncf %32 : vector<256x128xf32> to vector<256x128xbf16>
    %c0_24 = arith.constant 0 : index
    %c0_25 = arith.constant 0 : index
    %34 = vector.load %arg10[%c0_24, %c0_25] : memref<128x256xbf16, #tpu.memory_space<vmem>>, vector<128x256xbf16>
    %cst_26 = arith.constant dense<0.000000e+00> : vector<256x256xf32>
    %35 = tpu.matmul %33, %34, %cst_26 {dimension_numbers = #tpu.dot_dimension_numbers<[1], [0], [0], [1], [0, 0, 1, 1], [], []>} : vector<256x128xbf16>, vector<128x256xbf16>, vector<256x256xf32> -> vector<256x256xf32>
    %c0_27 = arith.constant 0 : index
    %c0_28 = arith.constant 0 : index
    %36 = vector.load %arg11[%c0_27, %c0_28] : memref<1x256xf32, #tpu.memory_space<vmem>>, vector<1x256xf32>
    %37 = vector.broadcast %36 : vector<1x256xf32> to vector<256x256xf32>
    %38 = arith.addf %35, %37 : vector<256x256xf32>
    %cst_29 = arith.constant 0.000000e+00 : f32
    %39 = vector.broadcast %cst_29 : f32 to vector<256x256xf32>
    %40 = arith.maximumf %38, %39 : vector<256x256xf32>
    %41 = arith.truncf %40 : vector<256x256xf32> to vector<256x256xbf16>
    %c0_30 = arith.constant 0 : index
    %c0_31 = arith.constant 0 : index
    %42 = vector.load %arg12[%c0_30, %c0_31] : memref<256x784xbf16, #tpu.memory_space<vmem>>, vector<256x784xbf16>
    %cst_32 = arith.constant dense<0.000000e+00> : vector<256x784xf32>
    %43 = tpu.matmul %41, %42, %cst_32 {dimension_numbers = #tpu.dot_dimension_numbers<[1], [0], [0], [1], [0, 0, 1, 1], [], []>} : vector<256x256xbf16>, vector<256x784xbf16>, vector<256x784xf32> -> vector<256x784xf32>
    %c0_33 = arith.constant 0 : index
    %c0_34 = arith.constant 0 : index
    %44 = vector.load %arg13[%c0_33, %c0_34] : memref<1x784xf32, #tpu.memory_space<vmem>>, vector<1x784xf32>
    %45 = vector.broadcast %44 : vector<1x784xf32> to vector<256x784xf32>
    %46 = arith.addf %43, %45 : vector<256x784xf32>
    %cst_35 = arith.constant 5.000000e-01 : f32
    %47 = vector.broadcast %cst_35 : f32 to vector<256x784xf32>
    %48 = arith.mulf %46, %47 : vector<256x784xf32>
    %49 = math.tanh %48 : vector<256x784xf32>
    %cst_36 = arith.constant 5.000000e-01 : f32
    %50 = vector.broadcast %cst_36 : f32 to vector<256x784xf32>
    %51 = arith.mulf %49, %50 : vector<256x784xf32>
    %cst_37 = arith.constant 5.000000e-01 : f32
    %52 = vector.broadcast %cst_37 : f32 to vector<256x784xf32>
    %53 = arith.addf %51, %52 : vector<256x784xf32>
    %c0_38 = arith.constant 0 : index
    %c0_39 = arith.constant 0 : index
    %54 = vector.load %arg14[%c0_38, %c0_39] : memref<256x784xf32, #tpu.memory_space<vmem>>, vector<256x784xf32>
    tpu.vector_store %arg14[%c0_38, %c0_39], %53 {strides = array<i32>} : memref<256x784xf32, #tpu.memory_space<vmem>>, vector<256x784xf32>,
    return
  }
  func.func @transform_0(%arg0: i32) -> (i32, i32) {
    %c0_i32 = arith.constant 0 : i32
    %c0_i32_0 = arith.constant 0 : i32
    return %arg0, %c0_i32 : i32, i32
  }
  func.func @transform_1(%arg0: i32) -> (i32, i32) {
    %c0_i32 = arith.constant 0 : i32
    %c0_i32_0 = arith.constant 0 : i32
    %c0_i32_1 = arith.constant 0 : i32
    return %c0_i32, %c0_i32_0 : i32, i32
  }
  func.func @transform_2(%arg0: i32) -> (i32, i32) {
    %c0_i32 = arith.constant 0 : i32
    %c0_i32_0 = arith.constant 0 : i32
    %c0_i32_1 = arith.constant 0 : i32
    return %c0_i32, %c0_i32_0 : i32, i32
  }
  func.func @transform_3(%arg0: i32) -> (i32, i32) {
    %c0_i32 = arith.constant 0 : i32
    %c0_i32_0 = arith.constant 0 : i32
    %c0_i32_1 = arith.constant 0 : i32
    return %c0_i32, %c0_i32_0 : i32, i32
  }
  func.func @transform_4(%arg0: i32) -> (i32, i32) {
    %c0_i32 = arith.constant 0 : i32
    %c0_i32_0 = arith.constant 0 : i32
    %c0_i32_1 = arith.constant 0 : i32
    return %c0_i32, %c0_i32_0 : i32, i32
  }
  func.func @transform_5(%arg0: i32) -> (i32, i32) {
    %c0_i32 = arith.constant 0 : i32
    %c0_i32_0 = arith.constant 0 : i32
    %c0_i32_1 = arith.constant 0 : i32
    return %c0_i32, %c0_i32_0 : i32, i32
  }
  func.func @transform_6(%arg0: i32) -> (i32, i32) {
    %c0_i32 = arith.constant 0 : i32
    %c0_i32_0 = arith.constant 0 : i32
    %c0_i32_1 = arith.constant 0 : i32
    return %c0_i32, %c0_i32_0 : i32, i32
  }
  func.func @transform_7(%arg0: i32) -> (i32, i32) {
    %c0_i32 = arith.constant 0 : i32
    %c0_i32_0 = arith.constant 0 : i32
    %c0_i32_1 = arith.constant 0 : i32
    return %c0_i32, %c0_i32_0 : i32, i32
  }
  func.func @transform_8(%arg0: i32) -> (i32, i32) {
    %c0_i32 = arith.constant 0 : i32
    %c0_i32_0 = arith.constant 0 : i32
    %c0_i32_1 = arith.constant 0 : i32
    return %c0_i32, %c0_i32_0 : i32, i32
  }
  func.func @transform_9(%arg0: i32) -> (i32, i32) {
    %c0_i32 = arith.constant 0 : i32
    %c0_i32_0 = arith.constant 0 : i32
    %c0_i32_1 = arith.constant 0 : i32
    return %c0_i32, %c0_i32_0 : i32, i32
  }
  func.func @transform_10(%arg0: i32) -> (i32, i32) {
    %c0_i32 = arith.constant 0 : i32
    %c0_i32_0 = arith.constant 0 : i32
    %c0_i32_1 = arith.constant 0 : i32
    return %c0_i32, %c0_i32_0 : i32, i32
  }
  func.func @transform_11(%arg0: i32) -> (i32, i32) {
    %c0_i32 = arith.constant 0 : i32
    %c0_i32_0 = arith.constant 0 : i32
    %c0_i32_1 = arith.constant 0 : i32
    return %c0_i32, %c0_i32_0 : i32, i32
  }
  func.func @transform_12(%arg0: i32) -> (i32, i32) {
    %c0_i32 = arith.constant 0 : i32
    %c0_i32_0 = arith.constant 0 : i32
    %c0_i32_1 = arith.constant 0 : i32
    return %c0_i32, %c0_i32_0 : i32, i32
  }
  func.func @transform_13(%arg0: i32) -> (i32, i32) {
    %c0_i32 = arith.constant 0 : i32
    %c0_i32_0 = arith.constant 0 : i32
    return %arg0, %c0_i32 : i32, i32
  }
}

</mosaic_0001>

<llo_original>
// kernel: tpu_custom_call.1
$region0: #{tpu_custom_call.1}
  #allocation0 [shape = 'u32[]', space=smem, size = 0x4, offset = 0x4, fixed_abs, tag = 'smem constant byte address 0x4 - core index']
  #allocation1 [shape = 'u32[144,128]{1,0:T(1,128)}', space=vmem, size = 0x12000, scoped, tag = 'internal scratch']
  %s0 = inlined_call_operand.vmem [shape: f32[512,784], index: 0, kind: input, shape index: {}]
  %s1 = inlined_call_operand.vmem [shape: bf16[784,256], index: 1, kind: input, shape index: {}]
  %s2 = inlined_call_operand.vmem [shape: f32[1,256], index: 2, kind: input, shape index: {}]
  %s3 = inlined_call_operand.vmem [shape: bf16[256,128], index: 3, kind: input, shape index: {}]
  %s4 = inlined_call_operand.vmem [shape: f32[1,128], index: 4, kind: input, shape index: {}]
  %s5 = inlined_call_operand.vmem [shape: bf16[128,128], index: 5, kind: input, shape index: {}]
  %s6 = inlined_call_operand.vmem [shape: f32[1,128], index: 6, kind: input, shape index: {}]
  %s7 = inlined_call_operand.vmem [shape: bf16[128,128], index: 7, kind: input, shape index: {}]
  %s8 = inlined_call_operand.vmem [shape: f32[1,128], index: 8, kind: input, shape index: {}]
  %s9 = inlined_call_operand.vmem [shape: bf16[128,256], index: 9, kind: input, shape index: {}]
  %s10 = inlined_call_operand.vmem [shape: f32[1,256], index: 10, kind: input, shape index: {}]
  %s11 = inlined_call_operand.vmem [shape: bf16[256,784], index: 11, kind: input, shape index: {}]
  %s12 = inlined_call_operand.vmem [shape: f32[1,784], index: 12, kind: input, shape index: {}]
  %s13 = inlined_call_operand.vmem [shape: f32[512,784], index: 13, kind: output, shape index: {}]
  %s14 = sld [smem:[#allocation0]]
  $region85: #{tpu_custom_call.1} parent=0
    _
  %s16 = ssub.s32 1, %s14
  %s17 = scalar_select 0, %s16, %s14
  loop: start=0, step=1, limit=4
  $region2: #{tpu_custom_call.1} parent=0 // loop_pre_header
    _
  $region3: #{tpu_custom_call.1} parent=0 // loop_header
    %s19 = sphi 0, %s23
    %p20 = scmp.ge.s32.totalorder %s19, 4
    %s29 = sphi 0, %s31
    %s32 = sphi 0, %s29
    %s33 = sphi 0, %s32
    %s49 = sphi 0, %s33
    %s53 = sphi 0, %s53
    %s55 = sphi 0, %s53
    %s56 = sphi 0, %s55
    %s70 = sphi 0, %s56
    %s74 = sphi 0, %s74
    %s76 = sphi 0, %s74
    %s77 = sphi 0, %s76
    %s91 = sphi 0, %s77
    %s95 = sphi 0, %s95
    %s97 = sphi 0, %s95
    %s98 = sphi 0, %s97
    %s112 = sphi 0, %s98
    %s116 = sphi 0, %s116
    %s118 = sphi 0, %s116
    %s119 = sphi 0, %s118
    %s133 = sphi 0, %s119
    %s137 = sphi 0, %s137
    %s139 = sphi 0, %s137
    %s140 = sphi 0, %s139
    %s154 = sphi 0, %s140
    %s158 = sphi 0, %s158
    %s160 = sphi 0, %s158
    %s161 = sphi 0, %s160
    %s175 = sphi 0, %s161
    %s179 = sphi 0, %s179
    %s181 = sphi 0, %s179
    %s182 = sphi 0, %s181
    %s196 = sphi 0, %s182
    %s200 = sphi 0, %s200
    %s202 = sphi 0, %s200
    %s203 = sphi 0, %s202
    %s217 = sphi 0, %s203
    %s221 = sphi 0, %s221
    %s223 = sphi 0, %s221
    %s224 = sphi 0, %s223
    %s238 = sphi 0, %s224
    %s242 = sphi 0, %s242
    %s244 = sphi 0, %s242
    %s245 = sphi 0, %s244
    %s259 = sphi 0, %s245
    %s263 = sphi 0, %s263
    %s265 = sphi 0, %s263
    %s266 = sphi 0, %s265
    %s280 = sphi 0, %s266
    %s284 = sphi 0, %s284
    %s286 = sphi 0, %s284
    %s287 = sphi 0, %s286
    %s301 = sphi 0, %s287
    %s307 = sphi 0, %s309
    %s310 = sphi 0, %s307
    %s311 = sphi 0, %s310
    %s327 = sphi 0, %s311
  $region4: #{tpu_custom_call.1} parent=0 // loop_header_branch
    %22 = sbr.rel (%p20) target = $region8
  $region5: #{tpu_custom_call.1} parent=0 // loop_body
    %s24 = ssub.s32 %s19, 1
    %s25 = ssub.s32 %s19, 2
    %s26 = sadd.s32 %s19, 1
    %s27 = ssub.s32 %s19, %s26
    %p28 = scmp.eq.s32.totalorder %s27, 0
    %s30 = sadd.s32 %s29, 1
    %s31 = scalar_select %p28, %s29, %s30
    %p34 = pneg %p28
    %p35 = scmp.eq.s32.totalorder %s19, 1
    %p36 = por %p34, %p35
    %p37 = scmp.ne.s32.totalorder %s29, %s32
    %p38 = scmp.eq.s32.totalorder %s19, 0
    %p39 = por %p37, %p38
    %p40 = scmp.ne.s32.totalorder %s29, %s32
    %p41 = scmp.eq.s32.totalorder %s24, 1
    %p42 = por %p40, %p41
    %p43 = scmp.ne.s32.totalorder %s32, %s33
    %p44 = scmp.eq.s32.totalorder %s24, 0
    %p45 = por %p43, %p44
    %p46 = scmp.ne.s32.totalorder %s32, %s33
    %p47 = scmp.eq.s32.totalorder %s25, 1
    %p48 = por %p46, %p47
    %p50 = scmp.ne.s32.totalorder %s33, %s49
    %p51 = scmp.eq.s32.totalorder %s25, 0
    %p52 = por %p50, %p51
    %s54 = sadd.s32 %s53, 1
    %p57 = scmp.eq.s32.totalorder %s19, 1
    %p58 = scmp.ne.s32.totalorder %s53, %s55
    %p59 = scmp.eq.s32.totalorder %s19, 0
    %p60 = por %p58, %p59
    %p61 = scmp.ne.s32.totalorder %s53, %s55
    %p62 = scmp.eq.s32.totalorder %s24, 1
    %p63 = por %p61, %p62
    %p64 = scmp.ne.s32.totalorder %s55, %s56
    %p65 = scmp.eq.s32.totalorder %s24, 0
    %p66 = por %p64, %p65
    %p67 = scmp.ne.s32.totalorder %s55, %s56
    %p68 = scmp.eq.s32.totalorder %s25, 1
    %p69 = por %p67, %p68
    %p71 = scmp.ne.s32.totalorder %s56, %s70
    %p72 = scmp.eq.s32.totalorder %s25, 0
    %p73 = por %p71, %p72
    %s75 = sadd.s32 %s74, 1
    %p78 = scmp.eq.s32.totalorder %s19, 1
    %p79 = scmp.ne.s32.totalorder %s74, %s76
    %p80 = scmp.eq.s32.totalorder %s19, 0
    %p81 = por %p79, %p80
    %p82 = scmp.ne.s32.totalorder %s74, %s76
    %p83 = scmp.eq.s32.totalorder %s24, 1
    %p84 = por %p82, %p83
    %p85 = scmp.ne.s32.totalorder %s76, %s77
    %p86 = scmp.eq.s32.totalorder %s24, 0
    %p87 = por %p85, %p86
    %p88 = scmp.ne.s32.totalorder %s76, %s77
    %p89 = scmp.eq.s32.totalorder %s25, 1
    %p90 = por %p88, %p89
    %p92 = scmp.ne.s32.totalorder %s77, %s91
    %p93 = scmp.eq.s32.totalorder %s25, 0
    %p94 = por %p92, %p93
    %s96 = sadd.s32 %s95, 1
    %p99 = scmp.eq.s32.totalorder %s19, 1
    %p100 = scmp.ne.s32.totalorder %s95, %s97
    %p101 = scmp.eq.s32.totalorder %s19, 0
    %p102 = por %p100, %p101
    %p103 = scmp.ne.s32.totalorder %s95, %s97
    %p104 = scmp.eq.s32.totalorder %s24, 1
    %p105 = por %p103, %p104
    %p106 = scmp.ne.s32.totalorder %s97, %s98
    %p107 = scmp.eq.s32.totalorder %s24, 0
    %p108 = por %p106, %p107
    %p109 = scmp.ne.s32.totalorder %s97, %s98
    %p110 = scmp.eq.s32.totalorder %s25, 1
    %p111 = por %p109, %p110
    %p113 = scmp.ne.s32.totalorder %s98, %s112
    %p114 = scmp.eq.s32.totalorder %s25, 0
    %p115 = por %p113, %p114
    %s117 = sadd.s32 %s116, 1
    %p120 = scmp.eq.s32.totalorder %s19, 1
    %p121 = scmp.ne.s32.totalorder %s116, %s118
    %p122 = scmp.eq.s32.totalorder %s19, 0
    %p123 = por %p121, %p122
    %p124 = scmp.ne.s32.totalorder %s116, %s118
    %p125 = scmp.eq.s32.totalorder %s24, 1
    %p126 = por %p124, %p125
    %p127 = scmp.ne.s32.totalorder %s118, %s119
    %p128 = scmp.eq.s32.totalorder %s24, 0
    %p129 = por %p127, %p128
    %p130 = scmp.ne.s32.totalorder %s118, %s119
    %p131 = scmp.eq.s32.totalorder %s25, 1
    %p132 = por %p130, %p131
    %p134 = scmp.ne.s32.totalorder %s119, %s133
    %p135 = scmp.eq.s32.totalorder %s25, 0
    %p136 = por %p134, %p135
    %s138 = sadd.s32 %s137, 1
    %p141 = scmp.eq.s32.totalorder %s19, 1
    %p142 = scmp.ne.s32.totalorder %s137, %s139
    %p143 = scmp.eq.s32.totalorder %s19, 0
    %p144 = por %p142, %p143
    %p145 = scmp.ne.s32.totalorder %s137, %s139
    %p146 = scmp.eq.s32.totalorder %s24, 1
    %p147 = por %p145, %p146
    %p148 = scmp.ne.s32.totalorder %s139, %s140
    %p149 = scmp.eq.s32.totalorder %s24, 0
    %p150 = por %p148, %p149
    %p151 = scmp.ne.s32.totalorder %s139, %s140
    %p152 = scmp.eq.s32.totalorder %s25, 1
    %p153 = por %p151, %p152
    %p155 = scmp.ne.s32.totalorder %s140, %s154
    %p156 = scmp.eq.s32.totalorder %s25, 0
    %p157 = por %p155, %p156
    %s159 = sadd.s32 %s158, 1
    %p162 = scmp.eq.s32.totalorder %s19, 1
    %p163 = scmp.ne.s32.totalorder %s158, %s160
    %p164 = scmp.eq.s32.totalorder %s19, 0
    %p165 = por %p163, %p164
    %p166 = scmp.ne.s32.totalorder %s158, %s160
    %p167 = scmp.eq.s32.totalorder %s24, 1
    %p168 = por %p166, %p167
    %p169 = scmp.ne.s32.totalorder %s160, %s161
    %p170 = scmp.eq.s32.totalorder %s24, 0
    %p171 = por %p169, %p170
    %p172 = scmp.ne.s32.totalorder %s160, %s161
    %p173 = scmp.eq.s32.totalorder %s25, 1
    %p174 = por %p172, %p173
    %p176 = scmp.ne.s32.totalorder %s161, %s175
    %p177 = scmp.eq.s32.totalorder %s25, 0
    %p178 = por %p176, %p177
    %s180 = sadd.s32 %s179, 1
    %p183 = scmp.eq.s32.totalorder %s19, 1
    %p184 = scmp.ne.s32.totalorder %s179, %s181
    %p185 = scmp.eq.s32.totalorder %s19, 0
    %p186 = por %p184, %p185
    %p187 = scmp.ne.s32.totalorder %s179, %s181
    %p188 = scmp.eq.s32.totalorder %s24, 1
    %p189 = por %p187, %p188
    %p190 = scmp.ne.s32.totalorder %s181, %s182
    %p191 = scmp.eq.s32.totalorder %s24, 0
    %p192 = por %p190, %p191
    %p193 = scmp.ne.s32.totalorder %s181, %s182
    %p194 = scmp.eq.s32.totalorder %s25, 1
    %p195 = por %p193, %p194
    %p197 = scmp.ne.s32.totalorder %s182, %s196
    %p198 = scmp.eq.s32.totalorder %s25, 0
    %p199 = por %p197, %p198
    %s201 = sadd.s32 %s200, 1
    %p204 = scmp.eq.s32.totalorder %s19, 1
    %p205 = scmp.ne.s32.totalorder %s200, %s202
    %p206 = scmp.eq.s32.totalorder %s19, 0
    %p207 = por %p205, %p206
    %p208 = scmp.ne.s32.totalorder %s200, %s202
    %p209 = scmp.eq.s32.totalorder %s24, 1
    %p210 = por %p208, %p209
    %p211 = scmp.ne.s32.totalorder %s202, %s203
    %p212 = scmp.eq.s32.totalorder %s24, 0
    %p213 = por %p211, %p212
    %p214 = scmp.ne.s32.totalorder %s202, %s203
    %p215 = scmp.eq.s32.totalorder %s25, 1
    %p216 = por %p214, %p215
    %p218 = scmp.ne.s32.totalorder %s203, %s217
    %p219 = scmp.eq.s32.totalorder %s25, 0
    %p220 = por %p218, %p219
    %s222 = sadd.s32 %s221, 1
    %p225 = scmp.eq.s32.totalorder %s19, 1
    %p226 = scmp.ne.s32.totalorder %s221, %s223
    %p227 = scmp.eq.s32.totalorder %s19, 0
    %p228 = por %p226, %p227
    %p229 = scmp.ne.s32.totalorder %s221, %s223
    %p230 = scmp.eq.s32.totalorder %s24, 1
    %p231 = por %p229, %p230
    %p232 = scmp.ne.s32.totalorder %s223, %s224
    %p233 = scmp.eq.s32.totalorder %s24, 0
    %p234 = por %p232, %p233
    %p235 = scmp.ne.s32.totalorder %s223, %s224
    %p236 = scmp.eq.s32.totalorder %s25, 1
    %p237 = por %p235, %p236
    %p239 = scmp.ne.s32.totalorder %s224, %s238
    %p240 = scmp.eq.s32.totalorder %s25, 0
    %p241 = por %p239, %p240
    %s243 = sadd.s32 %s242, 1
    %p246 = scmp.eq.s32.totalorder %s19, 1
    %p247 = scmp.ne.s32.totalorder %s242, %s244
    %p248 = scmp.eq.s32.totalorder %s19, 0
    %p249 = por %p247, %p248
    %p250 = scmp.ne.s32.totalorder %s242, %s244
    %p251 = scmp.eq.s32.totalorder %s24, 1
    %p252 = por %p250, %p251
    %p253 = scmp.ne.s32.totalorder %s244, %s245
    %p254 = scmp.eq.s32.totalorder %s24, 0
    %p255 = por %p253, %p254
    %p256 = scmp.ne.s32.totalorder %s244, %s245
    %p257 = scmp.eq.s32.totalorder %s25, 1
    %p258 = por %p256, %p257
    %p260 = scmp.ne.s32.totalorder %s245, %s259
    %p261 = scmp.eq.s32.totalorder %s25, 0
    %p262 = por %p260, %p261
    %s264 = sadd.s32 %s263, 1
    %p267 = scmp.eq.s32.totalorder %s19, 1
    %p268 = scmp.ne.s32.totalorder %s263, %s265
    %p269 = scmp.eq.s32.totalorder %s19, 0
    %p270 = por %p268, %p269
    %p271 = scmp.ne.s32.totalorder %s263, %s265
    %p272 = scmp.eq.s32.totalorder %s24, 1
    %p273 = por %p271, %p272
    %p274 = scmp.ne.s32.totalorder %s265, %s266
    %p275 = scmp.eq.s32.totalorder %s24, 0
    %p276 = por %p274, %p275
    %p277 = scmp.ne.s32.totalorder %s265, %s266
    %p278 = scmp.eq.s32.totalorder %s25, 1
    %p279 = por %p277, %p278
    %p281 = scmp.ne.s32.totalorder %s266, %s280
    %p282 = scmp.eq.s32.totalorder %s25, 0
    %p283 = por %p281, %p282
    %s285 = sadd.s32 %s284, 1
    %p288 = scmp.eq.s32.totalorder %s19, 1
    %p289 = scmp.ne.s32.totalorder %s284, %s286
    %p290 = scmp.eq.s32.totalorder %s19, 0
    %p291 = por %p289, %p290
    %p292 = scmp.ne.s32.totalorder %s284, %s286
    %p293 = scmp.eq.s32.totalorder %s24, 1
    %p294 = por %p292, %p293
    %p295 = scmp.ne.s32.totalorder %s286, %s287
    %p296 = scmp.eq.s32.totalorder %s24, 0
    %p297 = por %p295, %p296
    %p298 = scmp.ne.s32.totalorder %s286, %s287
    %p299 = scmp.eq.s32.totalorder %s25, 1
    %p300 = por %p298, %p299
    %p302 = scmp.ne.s32.totalorder %s287, %s301
    %p303 = scmp.eq.s32.totalorder %s25, 0
    %p304 = por %p302, %p303
    %s305 = ssub.s32 %s19, %s26
    %p306 = scmp.eq.s32.totalorder %s305, 0
    %s308 = sadd.s32 %s307, 1
    %s309 = scalar_select %p306, %s307, %s308
    %p312 = pneg %p306
    %p313 = scmp.eq.s32.totalorder %s19, 1
    %p314 = por %p312, %p313
    %p315 = scmp.ne.s32.totalorder %s307, %s310
    %p316 = scmp.eq.s32.totalorder %s19, 0
    %p317 = por %p315, %p316
    %p318 = scmp.ne.s32.totalorder %s307, %s310
    %p319 = scmp.eq.s32.totalorder %s24, 1
    %p320 = por %p318, %p319
    %p321 = scmp.ne.s32.totalorder %s310, %s311
    %p322 = scmp.eq.s32.totalorder %s24, 0
    %p323 = por %p321, %p322
    %p324 = scmp.ne.s32.totalorder %s310, %s311
    %p325 = scmp.eq.s32.totalorder %s25, 1
    %p326 = por %p324, %p325
    %p328 = scmp.ne.s32.totalorder %s311, %s327
    %p329 = scmp.eq.s32.totalorder %s25, 0
    %p330 = por %p328, %p329
    %p331 = scmp.le.s32.totalorder 1, %s19
    %p332 = scmp.lt.s32.totalorder %s19, 3
    %p333 = pnand %p331, %p332
    %p334 = pneg %p333
    // Predicated region
    $region9: #{tpu_custom_call.1} parent=5 // pred_check
      _
    $region10: #{tpu_custom_call.1} parent=5 // pred_check_branch
      %336 = sbr.rel (%p333) target = $region12
    $region11: #{tpu_custom_call.1} parent=5 // pred_region
      %s337 = ssub.s32 %s19, 1
      // Predicated region
      $region13: #{tpu_custom_call.1} parent=11 // pred_check
        %p338 = pneg %p66
      $region14: #{tpu_custom_call.1} parent=11 // pred_check_branch
        %340 = sbr.rel (%p338) target = $region16
      $region15: #{tpu_custom_call.1} parent=11 // pred_region
        _
      $region16: #{tpu_custom_call.1} parent=11 // pred_fallthru
        _
      // Predicated region
      $region17: #{tpu_custom_call.1} parent=11 // pred_check
        %p341 = pneg %p87
      $region18: #{tpu_custom_call.1} parent=11 // pred_check_branch
        %343 = sbr.rel (%p341) target = $region20
      $region19: #{tpu_custom_call.1} parent=11 // pred_region
        _
      $region20: #{tpu_custom_call.1} parent=11 // pred_fallthru
        _
      // Predicated region
      $region21: #{tpu_custom_call.1} parent=11 // pred_check
        %p344 = pneg %p108
      $region22: #{tpu_custom_call.1} parent=11 // pred_check_branch
        %346 = sbr.rel (%p344) target = $region24
      $region23: #{tpu_custom_call.1} parent=11 // pred_region
        _
      $region24: #{tpu_custom_call.1} parent=11 // pred_fallthru
        _
      // Predicated region
      $region25: #{tpu_custom_call.1} parent=11 // pred_check
        %p347 = pneg %p129
      $region26: #{tpu_custom_call.1} parent=11 // pred_check_branch
        %349 = sbr.rel (%p347) target = $region28
      $region27: #{tpu_custom_call.1} parent=11 // pred_region
        _
      $region28: #{tpu_custom_call.1} parent=11 // pred_fallthru
        _
      // Predicated region
      $region29: #{tpu_custom_call.1} parent=11 // pred_check
        %p350 = pneg %p150
      $region30: #{tpu_custom_call.1} parent=11 // pred_check_branch
        %352 = sbr.rel (%p350) target = $region32
      $region31: #{tpu_custom_call.1} parent=11 // pred_region
        _
      $region32: #{tpu_custom_call.1} parent=11 // pred_fallthru
        _
      // Predicated region
      $region33: #{tpu_custom_call.1} parent=11 // pred_check
        %p353 = pneg %p171
      $region34: #{tpu_custom_call.1} parent=11 // pred_check_branch
        %355 = sbr.rel (%p353) target = $region36
      $region35: #{tpu_custom_call.1} parent=11 // pred_region
        _
      $region36: #{tpu_custom_call.1} parent=11 // pred_fallthru
        _
      // Predicated region
      $region37: #{tpu_custom_call.1} parent=11 // pred_check
        %p356 = pneg %p192
      $region38: #{tpu_custom_call.1} parent=11 // pred_check_branch
        %358 = sbr.rel (%p356) target = $region40
      $region39: #{tpu_custom_call.1} parent=11 // pred_region
        _
      $region40: #{tpu_custom_call.1} parent=11 // pred_fallthru
        _
      // Predicated region
      $region41: #{tpu_custom_call.1} parent=11 // pred_check
        %p359 = pneg %p213
      $region42: #{tpu_custom_call.1} parent=11 // pred_check_branch
        %361 = sbr.rel (%p359) target = $region44
      $region43: #{tpu_custom_call.1} parent=11 // pred_region
        _
      $region44: #{tpu_custom_call.1} parent=11 // pred_fallthru
        _
      // Predicated region
      $region45: #{tpu_custom_call.1} parent=11 // pred_check
        %p362 = pneg %p234
      $region46: #{tpu_custom_call.1} parent=11 // pred_check_branch
        %364 = sbr.rel (%p362) target = $region48
      $region47: #{tpu_custom_call.1} parent=11 // pred_region
        _
      $region48: #{tpu_custom_call.1} parent=11 // pred_fallthru
        _
      // Predicated region
      $region49: #{tpu_custom_call.1} parent=11 // pred_check
        %p365 = pneg %p255
      $region50: #{tpu_custom_call.1} parent=11 // pred_check_branch
        %367 = sbr.rel (%p365) target = $region52
      $region51: #{tpu_custom_call.1} parent=11 // pred_region
        _
      $region52: #{tpu_custom_call.1} parent=11 // pred_fallthru
        _
      // Predicated region
      $region53: #{tpu_custom_call.1} parent=11 // pred_check
        %p368 = pneg %p276
      $region54: #{tpu_custom_call.1} parent=11 // pred_check_branch
        %370 = sbr.rel (%p368) target = $region56
      $region55: #{tpu_custom_call.1} parent=11 // pred_region
        _
      $region56: #{tpu_custom_call.1} parent=11 // pred_fallthru
        _
      // Predicated region
      $region57: #{tpu_custom_call.1} parent=11 // pred_check
        %p371 = pneg %p297
      $region58: #{tpu_custom_call.1} parent=11 // pred_check_branch
        %373 = sbr.rel (%p371) target = $region60
      $region59: #{tpu_custom_call.1} parent=11 // pred_region
        _
      $region60: #{tpu_custom_call.1} parent=11 // pred_fallthru
        _
    $region12: #{tpu_custom_call.1} parent=5 // pred_fallthru
      _
    %p374 = scmp.lt.s32.totalorder %s19, 2
    // Predicated region
    $region61: #{tpu_custom_call.1} parent=5 // pred_check
      %p375 = pneg %p374
    $region62: #{tpu_custom_call.1} parent=5 // pred_check_branch
      %377 = sbr.rel (%p375) target = $region64
    $region63: #{tpu_custom_call.1} parent=5 // pred_region
      // Predicated region
      $region65: #{tpu_custom_call.1} parent=63 // pred_check
        %p378 = pneg %p39
      $region66: #{tpu_custom_call.1} parent=63 // pred_check_branch
        %380 = sbr.rel (%p378) target = $region68
      $region67: #{tpu_custom_call.1} parent=63 // pred_region
        %s381 = smul.u32 32, %s19
        %p382 = scmp.lt.s32.totalorder %s381, 63
        %s383 = scalar_select %p382, %s381, 63
        %s384 = smul.addr %s383, 7
        %s385 = smul.addr %s384, 8
        %s386 = scalar_lea.vmem %s0, %s385
        %s387 = smul.u32 32, %s19
      $region68: #{tpu_custom_call.1} parent=63 // pred_fallthru
        _
    $region64: #{tpu_custom_call.1} parent=5 // pred_fallthru
      _
    %p388 = scmp.le.s32.totalorder 1, %s19
    %p389 = scmp.lt.s32.totalorder %s19, 3
    %p390 = pnand %p388, %p389
    %p391 = pneg %p390
    // Predicated region
    $region69: #{tpu_custom_call.1} parent=5 // pred_check
      _
    $region70: #{tpu_custom_call.1} parent=5 // pred_check_branch
      %393 = sbr.rel (%p390) target = $region72
    $region71: #{tpu_custom_call.1} parent=5 // pred_region
      %s394 = ssub.s32 %s19, 1
      %s395 = smul.u32 32, %s24
      %p396 = scmp.lt.s32.totalorder %s395, 63
      %s397 = scalar_select %p396, %s395, 63
      %s398 = smul.addr %s397, 7
      %s399 = smul.addr %s398, 8
      %s400 = scalar_lea.vmem %s0, %s399
      %p401 = pneg %p45
      %p402 = pneg %p42
      %p403 = pneg %p66
      %p404 = pneg %p63
      %p405 = pneg %p87
      %p406 = pneg %p84
      %p407 = pneg %p108
      %p408 = pneg %p105
      %p409 = pneg %p129
      %p410 = pneg %p126
      %p411 = pneg %p150
      %p412 = pneg %p147
      %p413 = pneg %p171
      %p414 = pneg %p168
      %p415 = pneg %p192
      %p416 = pneg %p189
      %p417 = pneg %p213
      %p418 = pneg %p210
      %p419 = pneg %p234
      %p420 = pneg %p231
      %p421 = pneg %p255
      %p422 = pneg %p252
      %p423 = pneg %p276
      %p424 = pneg %p273
      %p425 = pneg %p297
      %p426 = pneg %p294
      %p427 = pneg %p323
      %p428 = pneg %p320
      %s429 = smul.u32 32, %s24
      %p430 = scmp.lt.s32.totalorder %s429, 63
      %s431 = scalar_select %p430, %s429, 63
      %s432 = smul.addr %s431, 7
      %s433 = smul.addr %s432, 8
      %s434 = scalar_lea.vmem %s13, %s433
      %s435 = smul.u32 32, %s24
      %p436 = scmp.lt.s32.totalorder %s435, 63
      %s437 = scalar_select %p436, %s435, 63
      %s438 = smul.addr %s437, 7
      %s439 = smul.addr %s438, 8
      %s440 = scalar_lea.vmem %s0, %s439
      %s441 = smul.u32 32, %s24
      %s442 = smul.u32 32, %s24
      %p443 = scmp.lt.s32.totalorder %s442, 63
      %s444 = scalar_select %p443, %s442, 63
      %s445 = smul.addr %s444, 7
      %s446 = smul.addr %s445, 8
      %s447 = scalar_lea.vmem %s13, %s446
      %s448 = smul.u32 32, %s24
      %v450 = vld [vmem:[%s440] sm:$0xff]
      %v451 = vld [vmem:[%s440 + $0x8] sm:$0xff]
      %v452 = vld [vmem:[%s440 + $0x10] sm:$0xff]
      %v453 = vld [vmem:[%s440 + $0x18] sm:$0xff]
      %v454 = vld [vmem:[%s440 + $0x20] sm:$0xff]
      %v455 = vld [vmem:[%s440 + $0x28] sm:$0xff]
      %v456 = vld [vmem:[%s440 + $0x30] sm:$0xff]
      %v457 = vld [vmem:[%s440 + $0x38] sm:$0xff]
      %v458 = vld [vmem:[%s440 + $0x40] sm:$0xff]
      %v459 = vld [vmem:[%s440 + $0x48] sm:$0xff]
      %v460 = vld [vmem:[%s440 + $0x50] sm:$0xff]
      %v461 = vld [vmem:[%s440 + $0x58] sm:$0xff]
      %v462 = vld [vmem:[%s440 + $0x60] sm:$0xff]
      %v463 = vld [vmem:[%s440 + $0x68] sm:$0xff]
      %v464 = vld [vmem:[%s440 + $0x70] sm:$0xff]
      %v465 = vld [vmem:[%s440 + $0x78] sm:$0xff]
      %v466 = vld [vmem:[%s440 + $0x80] sm:$0xff]
      %v467 = vld [vmem:[%s440 + $0x88] sm:$0xff]
      %v468 = vld [vmem:[%s440 + $0x90] sm:$0xff]
      %v469 = vld [vmem:[%s440 + $0x98] sm:$0xff]
      %v470 = vld [vmem:[%s440 + $0xa0] sm:$0xff]
      %v471 = vld [vmem:[%s440 + $0xa8] sm:$0xff]
      %v472 = vld [vmem:[%s440 + $0xb0] sm:$0xff]
      %v473 = vld [vmem:[%s440 + $0xb8] sm:$0xff]
      %v474 = vld [vmem:[%s440 + $0xc0] sm:$0xff]
      %v475 = vld [vmem:[%s440 + $0xc8] sm:$0xff]
      %v476 = vld [vmem:[%s440 + $0xd0] sm:$0xff]
      %v477 = vld [vmem:[%s440 + $0xd8] sm:$0xff]
      %v478 = vld [vmem:[%s440 + $0xe0] sm:$0xff]
      %v479 = vld [vmem:[%s440 + $0xe8] sm:$0xff]
      %v480 = vld [vmem:[%s440 + $0xf0] sm:$0xff]
      %v481 = vld [vmem:[%s440 + $0xf8] sm:$0xff]
      %v482 = vld [vmem:[%s440 + $0x100] sm:$0xff]
      %v483 = vld [vmem:[%s440 + $0x108] sm:$0xff]
      %v484 = vld [vmem:[%s440 + $0x110] sm:$0xff]
      %v485 = vld [vmem:[%s440 + $0x118] sm:$0xff]
      %v486 = vld [vmem:[%s440 + $0x120] sm:$0xff]
      %v487 = vld [vmem:[%s440 + $0x128] sm:$0xff]
      %v488 = vld [vmem:[%s440 + $0x130] sm:$0xff]
      %v489 = vld [vmem:[%s440 + $0x138] sm:$0xff]
      %v490 = vld [vmem:[%s440 + $0x140] sm:$0xff]
      %v491 = vld [vmem:[%s440 + $0x148] sm:$0xff]
      %v492 = vld [vmem:[%s440 + $0x150] sm:$0xff]
      %v493 = vld [vmem:[%s440 + $0x158] sm:$0xff]
      %v494 = vld [vmem:[%s440 + $0x160] sm:$0xff]
      %v495 = vld [vmem:[%s440 + $0x168] sm:$0xff]
      %v496 = vld [vmem:[%s440 + $0x170] sm:$0xff]
      %v497 = vld [vmem:[%s440 + $0x178] sm:$0xff]
      %v498 = vld [vmem:[%s440 + $0x180] sm:$0xff]
      %v499 = vld [vmem:[%s440 + $0x188] sm:$0xff]
      %v500 = vld [vmem:[%s440 + $0x190] sm:$0xff]
      %v501 = vld [vmem:[%s440 + $0x198] sm:$0xff]
      %v502 = vld [vmem:[%s440 + $0x1a0] sm:$0xff]
      %v503 = vld [vmem:[%s440 + $0x1a8] sm:$0xff]
      %v504 = vld [vmem:[%s440 + $0x1b0] sm:$0xff]
      %v505 = vld [vmem:[%s440 + $0x1b8] sm:$0xff]
      %v506 = vld [vmem:[%s440 + $0x1c0] sm:$0xff]
      %v507 = vld [vmem:[%s440 + $0x1c8] sm:$0xff]
      %v508 = vld [vmem:[%s440 + $0x1d0] sm:$0xff]
      %v509 = vld [vmem:[%s440 + $0x1d8] sm:$0xff]
      %v510 = vld [vmem:[%s440 + $0x1e0] sm:$0xff]
      %v511 = vld [vmem:[%s440 + $0x1e8] sm:$0xff]
      %v512 = vld [vmem:[%s440 + $0x1f0] sm:$0xff]
      %v513 = vld [vmem:[%s440 + $0x1f8] sm:$0xff]
      %v514 = vld [vmem:[%s440 + $0x200] sm:$0xff]
      %v515 = vld [vmem:[%s440 + $0x208] sm:$0xff]
      %v516 = vld [vmem:[%s440 + $0x210] sm:$0xff]
      %v517 = vld [vmem:[%s440 + $0x218] sm:$0xff]
      %v518 = vld [vmem:[%s440 + $0x220] sm:$0xff]
      %v519 = vld [vmem:[%s440 + $0x228] sm:$0xff]
      %v520 = vld [vmem:[%s440 + $0x230] sm:$0xff]
      %v521 = vld [vmem:[%s440 + $0x238] sm:$0xff]
      %v522 = vld [vmem:[%s440 + $0x240] sm:$0xff]
      %v523 = vld [vmem:[%s440 + $0x248] sm:$0xff]
      %v524 = vld [vmem:[%s440 + $0x250] sm:$0xff]
      %v525 = vld [vmem:[%s440 + $0x258] sm:$0xff]
      %v526 = vld [vmem:[%s440 + $0x260] sm:$0xff]
      %v527 = vld [vmem:[%s440 + $0x268] sm:$0xff]
      %v528 = vld [vmem:[%s440 + $0x270] sm:$0xff]
      %v529 = vld [vmem:[%s440 + $0x278] sm:$0xff]
      %v530 = vld [vmem:[%s440 + $0x280] sm:$0xff]
      %v531 = vld [vmem:[%s440 + $0x288] sm:$0xff]
      %v532 = vld [vmem:[%s440 + $0x290] sm:$0xff]
      %v533 = vld [vmem:[%s440 + $0x298] sm:$0xff]
      %v534 = vld [vmem:[%s440 + $0x2a0] sm:$0xff]
      %v535 = vld [vmem:[%s440 + $0x2a8] sm:$0xff]
      %v536 = vld [vmem:[%s440 + $0x2b0] sm:$0xff]
      %v537 = vld [vmem:[%s440 + $0x2b8] sm:$0xff]
      %v538 = vld [vmem:[%s440 + $0x2c0] sm:$0xff]
      %v539 = vld [vmem:[%s440 + $0x2c8] sm:$0xff]
      %v540 = vld [vmem:[%s440 + $0x2d0] sm:$0xff]
      %v541 = vld [vmem:[%s440 + $0x2d8] sm:$0xff]
      %v542 = vld [vmem:[%s440 + $0x2e0] sm:$0xff]
      %v543 = vld [vmem:[%s440 + $0x2e8] sm:$0xff]
      %v544 = vld [vmem:[%s440 + $0x2f0] sm:$0xff]
      %v545 = vld [vmem:[%s440 + $0x2f8] sm:$0xff]
      %v546 = vld [vmem:[%s440 + $0x300] sm:$0xff]
      %v547 = vld [vmem:[%s440 + $0x308] sm:$0xff]
      %v548 = vld [vmem:[%s440 + $0x310] sm:$0xff]
      %v549 = vld [vmem:[%s440 + $0x318] sm:$0xff]
      %v550 = vld [vmem:[%s440 + $0x320] sm:$0xff]
      %v551 = vld [vmem:[%s440 + $0x328] sm:$0xff]
      %v552 = vld [vmem:[%s440 + $0x330] sm:$0xff]
      %v553 = vld [vmem:[%s440 + $0x338] sm:$0xff]
      %v554 = vld [vmem:[%s440 + $0x340] sm:$0xff]
      %v555 = vld [vmem:[%s440 + $0x348] sm:$0xff]
      %v556 = vld [vmem:[%s440 + $0x350] sm:$0xff]
      %v557 = vld [vmem:[%s440 + $0x358] sm:$0xff]
      %v558 = vld [vmem:[%s440 + $0x360] sm:$0xff]
      %v559 = vld [vmem:[%s440 + $0x368] sm:$0xff]
      %v560 = vld [vmem:[%s440 + $0x370] sm:$0xff]
      %v561 = vld [vmem:[%s440 + $0x378] sm:$0xff]
      %v562 = vld [vmem:[%s440 + $0x380] sm:$0xff]
      %v563 = vld [vmem:[%s440 + $0x388] sm:$0xff]
      %v564 = vld [vmem:[%s440 + $0x390] sm:$0xff]
      %v565 = vld [vmem:[%s440 + $0x398] sm:$0xff]
      %v566 = vld [vmem:[%s440 + $0x3a0] sm:$0xff]
      %v567 = vld [vmem:[%s440 + $0x3a8] sm:$0xff]
      %v568 = vld [vmem:[%s440 + $0x3b0] sm:$0xff]
      %v569 = vld [vmem:[%s440 + $0x3b8] sm:$0xff]
      %v570 = vld [vmem:[%s440 + $0x3c0] sm:$0xff]
      %v571 = vld [vmem:[%s440 + $0x3c8] sm:$0xff]
      %v572 = vld [vmem:[%s440 + $0x3d0] sm:$0xff]
      %v573 = vld [vmem:[%s440 + $0x3d8] sm:$0xff]
      %v574 = vld [vmem:[%s440 + $0x3e0] sm:$0xff]
      %v575 = vld [vmem:[%s440 + $0x3e8] sm:$0xff]
      %v576 = vld [vmem:[%s440 + $0x3f0] sm:$0xff]
      %v577 = vld [vmem:[%s440 + $0x3f8] sm:$0xff]
      %v578 = vld [vmem:[%s440 + $0x400] sm:$0xff]
      %v579 = vld [vmem:[%s440 + $0x408] sm:$0xff]
      %v580 = vld [vmem:[%s440 + $0x410] sm:$0xff]
      %v581 = vld [vmem:[%s440 + $0x418] sm:$0xff]
      %v582 = vld [vmem:[%s440 + $0x420] sm:$0xff]
      %v583 = vld [vmem:[%s440 + $0x428] sm:$0xff]
      %v584 = vld [vmem:[%s440 + $0x430] sm:$0xff]
      %v585 = vld [vmem:[%s440 + $0x438] sm:$0xff]
      %v586 = vld [vmem:[%s440 + $0x440] sm:$0xff]
      %v587 = vld [vmem:[%s440 + $0x448] sm:$0xff]
      %v588 = vld [vmem:[%s440 + $0x450] sm:$0xff]
      %v589 = vld [vmem:[%s440 + $0x458] sm:$0xff]
      %v590 = vld [vmem:[%s440 + $0x460] sm:$0xff]
      %v591 = vld [vmem:[%s440 + $0x468] sm:$0xff]
      %v592 = vld [vmem:[%s440 + $0x470] sm:$0xff]
      %v593 = vld [vmem:[%s440 + $0x478] sm:$0xff]
      %v594 = vld [vmem:[%s440 + $0x480] sm:$0xff]
      %v595 = vld [vmem:[%s440 + $0x488] sm:$0xff]
      %v596 = vld [vmem:[%s440 + $0x490] sm:$0xff]
      %v597 = vld [vmem:[%s440 + $0x498] sm:$0xff]
      %v598 = vld [vmem:[%s440 + $0x4a0] sm:$0xff]
      %v599 = vld [vmem:[%s440 + $0x4a8] sm:$0xff]
      %v600 = vld [vmem:[%s440 + $0x4b0] sm:$0xff]
      %v601 = vld [vmem:[%s440 + $0x4b8] sm:$0xff]
      %v602 = vld [vmem:[%s440 + $0x4c0] sm:$0xff]
      %v603 = vld [vmem:[%s440 + $0x4c8] sm:$0xff]
      %v604 = vld [vmem:[%s440 + $0x4d0] sm:$0xff]
      %v605 = vld [vmem:[%s440 + $0x4d8] sm:$0xff]
      %v606 = vld [vmem:[%s440 + $0x4e0] sm:$0xff]
      %v607 = vld [vmem:[%s440 + $0x4e8] sm:$0xff]
      %v608 = vld [vmem:[%s440 + $0x4f0] sm:$0xff]
      %v609 = vld [vmem:[%s440 + $0x4f8] sm:$0xff]
      %v610 = vld [vmem:[%s440 + $0x500] sm:$0xff]
      %v611 = vld [vmem:[%s440 + $0x508] sm:$0xff]
      %v612 = vld [vmem:[%s440 + $0x510] sm:$0xff]
      %v613 = vld [vmem:[%s440 + $0x518] sm:$0xff]
      %v614 = vld [vmem:[%s440 + $0x520] sm:$0xff]
      %v615 = vld [vmem:[%s440 + $0x528] sm:$0xff]
      %v616 = vld [vmem:[%s440 + $0x530] sm:$0xff]
      %v617 = vld [vmem:[%s440 + $0x538] sm:$0xff]
      %v618 = vld [vmem:[%s440 + $0x540] sm:$0xff]
      %v619 = vld [vmem:[%s440 + $0x548] sm:$0xff]
      %v620 = vld [vmem:[%s440 + $0x550] sm:$0xff]
      %v621 = vld [vmem:[%s440 + $0x558] sm:$0xff]
      %v622 = vld [vmem:[%s440 + $0x560] sm:$0xff]
      %v623 = vld [vmem:[%s440 + $0x568] sm:$0xff]
      %v624 = vld [vmem:[%s440 + $0x570] sm:$0xff]
      %v625 = vld [vmem:[%s440 + $0x578] sm:$0xff]
      %v626 = vld [vmem:[%s440 + $0x580] sm:$0xff]
      %v627 = vld [vmem:[%s440 + $0x588] sm:$0xff]
      %v628 = vld [vmem:[%s440 + $0x590] sm:$0xff]
      %v629 = vld [vmem:[%s440 + $0x598] sm:$0xff]
      %v630 = vld [vmem:[%s440 + $0x5a0] sm:$0xff]
      %v631 = vld [vmem:[%s440 + $0x5a8] sm:$0xff]
      %v632 = vld [vmem:[%s440 + $0x5b0] sm:$0xff]
      %v633 = vld [vmem:[%s440 + $0x5b8] sm:$0xff]
      %v634 = vld [vmem:[%s440 + $0x5c0] sm:$0xff]
      %v635 = vld [vmem:[%s440 + $0x5c8] sm:$0xff]
      %v636 = vld [vmem:[%s440 + $0x5d0] sm:$0xff]
      %v637 = vld [vmem:[%s440 + $0x5d8] sm:$0xff]
      %v638 = vld [vmem:[%s440 + $0x5e0] sm:$0xff]
      %v639 = vld [vmem:[%s440 + $0x5e8] sm:$0xff]
      %v640 = vld [vmem:[%s440 + $0x5f0] sm:$0xff]
      %v641 = vld [vmem:[%s440 + $0x5f8] sm:$0xff]
      %v642 = vld [vmem:[%s440 + $0x600] sm:$0xff]
      %v643 = vld [vmem:[%s440 + $0x608] sm:$0xff]
      %v644 = vld [vmem:[%s440 + $0x610] sm:$0xff]
      %v645 = vld [vmem:[%s440 + $0x618] sm:$0xff]
      %v646 = vld [vmem:[%s440 + $0x620] sm:$0xff]
      %v647 = vld [vmem:[%s440 + $0x628] sm:$0xff]
      %v648 = vld [vmem:[%s440 + $0x630] sm:$0xff]
      %v649 = vld [vmem:[%s440 + $0x638] sm:$0xff]
      %v650 = vld [vmem:[%s440 + $0x640] sm:$0xff]
      %v651 = vld [vmem:[%s440 + $0x648] sm:$0xff]
      %v652 = vld [vmem:[%s440 + $0x650] sm:$0xff]
      %v653 = vld [vmem:[%s440 + $0x658] sm:$0xff]
      %v654 = vld [vmem:[%s440 + $0x660] sm:$0xff]
      %v655 = vld [vmem:[%s440 + $0x668] sm:$0xff]
      %v656 = vld [vmem:[%s440 + $0x670] sm:$0xff]
      %v657 = vld [vmem:[%s440 + $0x678] sm:$0xff]
      %v658 = vld [vmem:[%s440 + $0x680] sm:$0xff]
      %v659 = vld [vmem:[%s440 + $0x688] sm:$0xff]
      %v660 = vld [vmem:[%s440 + $0x690] sm:$0xff]
      %v661 = vld [vmem:[%s440 + $0x698] sm:$0xff]
      %v662 = vld [vmem:[%s440 + $0x6a0] sm:$0xff]
      %v663 = vld [vmem:[%s440 + $0x6a8] sm:$0xff]
      %v664 = vld [vmem:[%s440 + $0x6b0] sm:$0xff]
      %v665 = vld [vmem:[%s440 + $0x6b8] sm:$0xff]
      %v666 = vld [vmem:[%s440 + $0x6c0] sm:$0xff]
      %v667 = vld [vmem:[%s440 + $0x6c8] sm:$0xff]
      %v668 = vld [vmem:[%s440 + $0x6d0] sm:$0xff]
      %v669 = vld [vmem:[%s440 + $0x6d8] sm:$0xff]
      %v670 = vld [vmem:[%s440 + $0x6e0] sm:$0xff]
      %v671 = vld [vmem:[%s440 + $0x6e8] sm:$0xff]
      %v672 = vld [vmem:[%s440 + $0x6f0] sm:$0xff]
      %v673 = vld [vmem:[%s440 + $0x6f8] sm:$0xff]
      %v674 = vpack.c.bf16 %v457, %v450
      %v675 = vpack.c.bf16 %v458, %v451
      %v676 = vpack.c.bf16 %v459, %v452
      %v677 = vpack.c.bf16 %v460, %v453
      %v678 = vpack.c.bf16 %v461, %v454
      %v679 = vpack.c.bf16 %v462, %v455
      %v680 = vpack.c.bf16 %v463, %v456
      %v681 = vpack.c.bf16 %v471, %v464
      %v682 = vpack.c.bf16 %v472, %v465
      %v683 = vpack.c.bf16 %v473, %v466
      %v684 = vpack.c.bf16 %v474, %v467
      %v685 = vpack.c.bf16 %v475, %v468
      %v686 = vpack.c.bf16 %v476, %v469
      %v687 = vpack.c.bf16 %v477, %v470
      %v688 = vpack.c.bf16 %v485, %v478
      %v689 = vpack.c.bf16 %v486, %v479
      %v690 = vpack.c.bf16 %v487, %v480
      %v691 = vpack.c.bf16 %v488, %v481
      %v692 = vpack.c.bf16 %v489, %v482
      %v693 = vpack.c.bf16 %v490, %v483
      %v694 = vpack.c.bf16 %v491, %v484
      %v695 = vpack.c.bf16 %v499, %v492
      %v696 = vpack.c.bf16 %v500, %v493
      %v697 = vpack.c.bf16 %v501, %v494
      %v698 = vpack.c.bf16 %v502, %v495
      %v699 = vpack.c.bf16 %v503, %v496
      %v700 = vpack.c.bf16 %v504, %v497
      %v701 = vpack.c.bf16 %v505, %v498
      %v702 = vpack.c.bf16 %v513, %v506
      %v703 = vpack.c.bf16 %v514, %v507
      %v704 = vpack.c.bf16 %v515, %v508
      %v705 = vpack.c.bf16 %v516, %v509
      %v706 = vpack.c.bf16 %v517, %v510
      %v707 = vpack.c.bf16 %v518, %v511
      %v708 = vpack.c.bf16 %v519, %v512
      %v709 = vpack.c.bf16 %v527, %v520
      %v710 = vpack.c.bf16 %v528, %v521
      %v711 = vpack.c.bf16 %v529, %v522
      %v712 = vpack.c.bf16 %v530, %v523
      %v713 = vpack.c.bf16 %v531, %v524
      %v714 = vpack.c.bf16 %v532, %v525
      %v715 = vpack.c.bf16 %v533, %v526
      %v716 = vpack.c.bf16 %v541, %v534
      %v717 = vpack.c.bf16 %v542, %v535
      %v718 = vpack.c.bf16 %v543, %v536
      %v719 = vpack.c.bf16 %v544, %v537
      %v720 = vpack.c.bf16 %v545, %v538
      %v721 = vpack.c.bf16 %v546, %v539
      %v722 = vpack.c.bf16 %v547, %v540
      %v723 = vpack.c.bf16 %v555, %v548
      %v724 = vpack.c.bf16 %v556, %v549
      %v725 = vpack.c.bf16 %v557, %v550
      %v726 = vpack.c.bf16 %v558, %v551
      %v727 = vpack.c.bf16 %v559, %v552
      %v728 = vpack.c.bf16 %v560, %v553
      %v729 = vpack.c.bf16 %v561, %v554
      %v730 = vpack.c.bf16 %v569, %v562
      %v731 = vpack.c.bf16 %v570, %v563
      %v732 = vpack.c.bf16 %v571, %v564
      %v733 = vpack.c.bf16 %v572, %v565
      %v734 = vpack.c.bf16 %v573, %v566
      %v735 = vpack.c.bf16 %v574, %v567
      %v736 = vpack.c.bf16 %v575, %v568
      %v737 = vpack.c.bf16 %v583, %v576
      %v738 = vpack.c.bf16 %v584, %v577
      %v739 = vpack.c.bf16 %v585, %v578
      %v740 = vpack.c.bf16 %v586, %v579
      %v741 = vpack.c.bf16 %v587, %v580
      %v742 = vpack.c.bf16 %v588, %v581
      %v743 = vpack.c.bf16 %v589, %v582
      %v744 = vpack.c.bf16 %v597, %v590
      %v745 = vpack.c.bf16 %v598, %v591
      %v746 = vpack.c.bf16 %v599, %v592
      %v747 = vpack.c.bf16 %v600, %v593
      %v748 = vpack.c.bf16 %v601, %v594
      %v749 = vpack.c.bf16 %v602, %v595
      %v750 = vpack.c.bf16 %v603, %v596
      %v751 = vpack.c.bf16 %v611, %v604
      %v752 = vpack.c.bf16 %v612, %v605
      %v753 = vpack.c.bf16 %v613, %v606
      %v754 = vpack.c.bf16 %v614, %v607
      %v755 = vpack.c.bf16 %v615, %v608
      %v756 = vpack.c.bf16 %v616, %v609
      %v757 = vpack.c.bf16 %v617, %v610
      %v758 = vpack.c.bf16 %v625, %v618
      %v759 = vpack.c.bf16 %v626, %v619
      %v760 = vpack.c.bf16 %v627, %v620
      %v761 = vpack.c.bf16 %v628, %v621
      %v762 = vpack.c.bf16 %v629, %v622
      %v763 = vpack.c.bf16 %v630, %v623
      %v764 = vpack.c.bf16 %v631, %v624
      %v765 = vpack.c.bf16 %v639, %v632
      %v766 = vpack.c.bf16 %v640, %v633
      %v767 = vpack.c.bf16 %v641, %v634
      %v768 = vpack.c.bf16 %v642, %v635
      %v769 = vpack.c.bf16 %v643, %v636
      %v770 = vpack.c.bf16 %v644, %v637
      %v771 = vpack.c.bf16 %v645, %v638
      %v772 = vpack.c.bf16 %v653, %v646
      %v773 = vpack.c.bf16 %v654, %v647
      %v774 = vpack.c.bf16 %v655, %v648
      %v775 = vpack.c.bf16 %v656, %v649
      %v776 = vpack.c.bf16 %v657, %v650
      %v777 = vpack.c.bf16 %v658, %v651
      %v778 = vpack.c.bf16 %v659, %v652
      %v779 = vpack.c.bf16 %v667, %v660
      %v780 = vpack.c.bf16 %v668, %v661
      %v781 = vpack.c.bf16 %v669, %v662
      %v782 = vpack.c.bf16 %v670, %v663
      %v783 = vpack.c.bf16 %v671, %v664
      %v784 = vpack.c.bf16 %v672, %v665
      %v785 = vpack.c.bf16 %v673, %v666
      %v786 = vld [vmem:[%s1] sm:$0xff]
      %v787 = vld [vmem:[%s1 + $0x8] sm:$0xff]
      %v788 = vld [vmem:[%s1 + $0x10] sm:$0xff]
      %v789 = vld [vmem:[%s1 + $0x18] sm:$0xff]
      %v790 = vld [vmem:[%s1 + $0x20] sm:$0xff]
      %v791 = vld [vmem:[%s1 + $0x28] sm:$0xff]
      %v792 = vld [vmem:[%s1 + $0x30] sm:$0xff]
      %v793 = vld [vmem:[%s1 + $0x38] sm:$0xff]
      %v794 = vld [vmem:[%s1 + $0x40] sm:$0xff]
      %v795 = vld [vmem:[%s1 + $0x48] sm:$0xff]
      %v796 = vld [vmem:[%s1 + $0x50] sm:$0xff]
      %v797 = vld [vmem:[%s1 + $0x58] sm:$0xff]
      %v798 = vld [vmem:[%s1 + $0x60] sm:$0xff]
      %v799 = vld [vmem:[%s1 + $0x68] sm:$0xff]
      %v800 = vld [vmem:[%s1 + $0x70] sm:$0xff]
      %v801 = vld [vmem:[%s1 + $0x78] sm:$0xff]
      %v802 = vld [vmem:[%s1 + $0x80] sm:$0xff]
      %v803 = vld [vmem:[%s1 + $0x88] sm:$0xff]
      %v804 = vld [vmem:[%s1 + $0x90] sm:$0xff]
      %v805 = vld [vmem:[%s1 + $0x98] sm:$0xff]
      %v806 = vld [vmem:[%s1 + $0xa0] sm:$0xff]
      %v807 = vld [vmem:[%s1 + $0xa8] sm:$0xff]
      %v808 = vld [vmem:[%s1 + $0xb0] sm:$0xff]
      %v809 = vld [vmem:[%s1 + $0xb8] sm:$0xff]
      %v810 = vld [vmem:[%s1 + $0xc0] sm:$0xff]
      %v811 = vld [vmem:[%s1 + $0xc8] sm:$0xff]
      %v812 = vld [vmem:[%s1 + $0xd0] sm:$0xff]
      %v813 = vld [vmem:[%s1 + $0xd8] sm:$0xff]
      %v814 = vld [vmem:[%s1 + $0xe0] sm:$0xff]
      %v815 = vld [vmem:[%s1 + $0xe8] sm:$0xff]
      %v816 = vld [vmem:[%s1 + $0xf0] sm:$0xff]
      %v817 = vld [vmem:[%s1 + $0xf8] sm:$0xff]
      %v818 = vld [vmem:[%s1 + $0x100] sm:$0xff]
      %v819 = vld [vmem:[%s1 + $0x108] sm:$0xff]
      %v820 = vld [vmem:[%s1 + $0x110] sm:$0xff]
      %v821 = vld [vmem:[%s1 + $0x118] sm:$0xff]
      %v822 = vld [vmem:[%s1 + $0x120] sm:$0xff]
      %v823 = vld [vmem:[%s1 + $0x128] sm:$0xff]
      %v824 = vld [vmem:[%s1 + $0x130] sm:$0xff]
      %v825 = vld [vmem:[%s1 + $0x138] sm:$0xff]
      %v826 = vld [vmem:[%s1 + $0x140] sm:$0xff]
      %v827 = vld [vmem:[%s1 + $0x148] sm:$0xff]
      %v828 = vld [vmem:[%s1 + $0x150] sm:$0xff]
      %v829 = vld [vmem:[%s1 + $0x158] sm:$0xff]
      %v830 = vld [vmem:[%s1 + $0x160] sm:$0xff]
      %v831 = vld [vmem:[%s1 + $0x168] sm:$0xff]
      %v832 = vld [vmem:[%s1 + $0x170] sm:$0xff]
      %v833 = vld [vmem:[%s1 + $0x178] sm:$0xff]
      %v834 = vld [vmem:[%s1 + $0x180] sm:$0xff]
      %v835 = vld [vmem:[%s1 + $0x188] sm:$0xff]
      %v836 = vld [vmem:[%s1 + $0x190] sm:$0xff]
      %v837 = vld [vmem:[%s1 + $0x198] sm:$0xff]
      %v838 = vld [vmem:[%s1 + $0x1a0] sm:$0xff]
      %v839 = vld [vmem:[%s1 + $0x1a8] sm:$0xff]
      %v840 = vld [vmem:[%s1 + $0x1b0] sm:$0xff]
      %v841 = vld [vmem:[%s1 + $0x1b8] sm:$0xff]
      %v842 = vld [vmem:[%s1 + $0x1c0] sm:$0xff]
      %v843 = vld [vmem:[%s1 + $0x1c8] sm:$0xff]
      %v844 = vld [vmem:[%s1 + $0x1d0] sm:$0xff]
      %v845 = vld [vmem:[%s1 + $0x1d8] sm:$0xff]
      %v846 = vld [vmem:[%s1 + $0x1e0] sm:$0xff]
      %v847 = vld [vmem:[%s1 + $0x1e8] sm:$0xff]
      %v848 = vld [vmem:[%s1 + $0x1f0] sm:$0xff]
      %v849 = vld [vmem:[%s1 + $0x1f8] sm:$0xff]
      %v850 = vld [vmem:[%s1 + $0x200] sm:$0xff]
      %v851 = vld [vmem:[%s1 + $0x208] sm:$0xff]
      %v852 = vld [vmem:[%s1 + $0x210] sm:$0xff]
      %v853 = vld [vmem:[%s1 + $0x218] sm:$0xff]
      %v854 = vld [vmem:[%s1 + $0x220] sm:$0xff]
      %v855 = vld [vmem:[%s1 + $0x228] sm:$0xff]
      %v856 = vld [vmem:[%s1 + $0x230] sm:$0xff]
      %v857 = vld [vmem:[%s1 + $0x238] sm:$0xff]
      %v858 = vld [vmem:[%s1 + $0x240] sm:$0xff]
      %v859 = vld [vmem:[%s1 + $0x248] sm:$0xff]
      %v860 = vld [vmem:[%s1 + $0x250] sm:$0xff]
      %v861 = vld [vmem:[%s1 + $0x258] sm:$0xff]
      %v862 = vld [vmem:[%s1 + $0x260] sm:$0xff]
      %v863 = vld [vmem:[%s1 + $0x268] sm:$0xff]
      %v864 = vld [vmem:[%s1 + $0x270] sm:$0xff]
      %v865 = vld [vmem:[%s1 + $0x278] sm:$0xff]
      %v866 = vld [vmem:[%s1 + $0x280] sm:$0xff]
      %v867 = vld [vmem:[%s1 + $0x288] sm:$0xff]
      %v868 = vld [vmem:[%s1 + $0x290] sm:$0xff]
      %v869 = vld [vmem:[%s1 + $0x298] sm:$0xff]
      %v870 = vld [vmem:[%s1 + $0x2a0] sm:$0xff]
      %v871 = vld [vmem:[%s1 + $0x2a8] sm:$0xff]
      %v872 = vld [vmem:[%s1 + $0x2b0] sm:$0xff]
      %v873 = vld [vmem:[%s1 + $0x2b8] sm:$0xff]
      %v874 = vld [vmem:[%s1 + $0x2c0] sm:$0xff]
      %v875 = vld [vmem:[%s1 + $0x2c8] sm:$0xff]
      %v876 = vld [vmem:[%s1 + $0x2d0] sm:$0xff]
      %v877 = vld [vmem:[%s1 + $0x2d8] sm:$0xff]
      %v878 = vld [vmem:[%s1 + $0x2e0] sm:$0xff]
      %v879 = vld [vmem:[%s1 + $0x2e8] sm:$0xff]
      %v880 = vld [vmem:[%s1 + $0x2f0] sm:$0xff]
      %v881 = vld [vmem:[%s1 + $0x2f8] sm:$0xff]
      %v882 = vld [vmem:[%s1 + $0x300] sm:$0xff]
      %v883 = vld [vmem:[%s1 + $0x308] sm:$0xff]
      %v884 = vld [vmem:[%s2] sm:$0x3]
      %v886 = vlaneseq
      %v887 = vshrl.u32 %v886, 7
      %v888 = vsub.s32 0, %v887
      %v889 = vrot.slane %v884, %v888
      %v890 = vlaneseq
      %v891 = vshrl.u32 %v890, 7
      %v892 = vsub.s32 1, %v891
      %v893 = vrot.slane %v884, %v892
      %v994 = vunpack.c.l.b16 %v786
      %v995 = vunpack.c.h.b16 %v786
      %v996 = vunpack.c.l.b16 %v787
      %v997 = vunpack.c.h.b16 %v787
      %v998 = vunpack.c.l.b16 %v788
      %v999 = vunpack.c.h.b16 %v788
      %v1000 = vunpack.c.l.b16 %v789
      %v1001 = vunpack.c.h.b16 %v789
      %v1002 = vunpack.c.l.b16 %v790
      %v1003 = vunpack.c.h.b16 %v790
      %v1004 = vunpack.c.l.b16 %v791
      %v1005 = vunpack.c.h.b16 %v791
      %v1006 = vunpack.c.l.b16 %v792
      %v1007 = vunpack.c.h.b16 %v792
      %v1008 = vunpack.c.l.b16 %v793
      %v1009 = vunpack.c.h.b16 %v793
      %v1010 = vunpack.c.l.b16 %v794
      %v1011 = vunpack.c.h.b16 %v794
      %v1012 = vunpack.c.l.b16 %v795
      %v1013 = vunpack.c.h.b16 %v795
      %v1014 = vunpack.c.l.b16 %v796
      %v1015 = vunpack.c.h.b16 %v796
      %v1016 = vunpack.c.l.b16 %v797
      %v1017 = vunpack.c.h.b16 %v797
      %v1018 = vunpack.c.l.b16 %v798
      %v1019 = vunpack.c.h.b16 %v798
      %v1020 = vunpack.c.l.b16 %v799
      %v1021 = vunpack.c.h.b16 %v799
      %v1022 = vunpack.c.l.b16 %v800
      %v1023 = vunpack.c.h.b16 %v800
      %v1024 = vunpack.c.l.b16 %v801
      %v1025 = vunpack.c.h.b16 %v801
      %v1026 = vunpack.c.l.b16 %v802
      %v1027 = vunpack.c.h.b16 %v802
      %v1028 = vunpack.c.l.b16 %v803
      %v1029 = vunpack.c.h.b16 %v803
      %v1030 = vunpack.c.l.b16 %v804
      %v1031 = vunpack.c.h.b16 %v804
      %v1032 = vunpack.c.l.b16 %v805
      %v1033 = vunpack.c.h.b16 %v805
      %v1034 = vunpack.c.l.b16 %v806
      %v1035 = vunpack.c.h.b16 %v806
      %v1036 = vunpack.c.l.b16 %v807
      %v1037 = vunpack.c.h.b16 %v807
      %v1038 = vunpack.c.l.b16 %v808
      %v1039 = vunpack.c.h.b16 %v808
      %v1040 = vunpack.c.l.b16 %v809
      %v1041 = vunpack.c.h.b16 %v809
      %v1042 = vunpack.c.l.b16 %v810
      %v1043 = vunpack.c.h.b16 %v810
      %v1044 = vunpack.c.l.b16 %v811
      %v1045 = vunpack.c.h.b16 %v811
      %v1046 = vunpack.c.l.b16 %v812
      %v1047 = vunpack.c.h.b16 %v812
      %v1048 = vunpack.c.l.b16 %v813
      %v1049 = vunpack.c.h.b16 %v813
      %v1050 = vunpack.c.l.b16 %v814
      %v1051 = vunpack.c.h.b16 %v814
      %v1052 = vunpack.c.l.b16 %v815
      %v1053 = vunpack.c.h.b16 %v815
      %v1054 = vunpack.c.l.b16 %v816
      %v1055 = vunpack.c.h.b16 %v816
      %v1056 = vunpack.c.l.b16 %v817
      %v1057 = vunpack.c.h.b16 %v817
      %v1058 = vunpack.c.l.b16 %v818
      %v1059 = vunpack.c.h.b16 %v818
      %v1060 = vunpack.c.l.b16 %v819
      %v1061 = vunpack.c.h.b16 %v819
      %v1062 = vunpack.c.l.b16 %v820
      %v1063 = vunpack.c.h.b16 %v820
      %v1064 = vunpack.c.l.b16 %v821
      %v1065 = vunpack.c.h.b16 %v821
      %v1066 = vunpack.c.l.b16 %v822
      %v1067 = vunpack.c.h.b16 %v822
      %v1068 = vunpack.c.l.b16 %v823
      %v1069 = vunpack.c.h.b16 %v823
      %v1070 = vunpack.c.l.b16 %v824
      %v1071 = vunpack.c.h.b16 %v824
      %v1072 = vunpack.c.l.b16 %v825
      %v1073 = vunpack.c.h.b16 %v825
      %v1074 = vunpack.c.l.b16 %v826
      %v1075 = vunpack.c.h.b16 %v826
      %v1076 = vunpack.c.l.b16 %v827
      %v1077 = vunpack.c.h.b16 %v827
      %v1078 = vunpack.c.l.b16 %v828
      %v1079 = vunpack.c.h.b16 %v828
      %v1080 = vunpack.c.l.b16 %v829
      %v1081 = vunpack.c.h.b16 %v829
      %v1082 = vunpack.c.l.b16 %v830
      %v1083 = vunpack.c.h.b16 %v830
      %v1084 = vunpack.c.l.b16 %v831
      %v1085 = vunpack.c.h.b16 %v831
      %v1086 = vunpack.c.l.b16 %v832
      %v1087 = vunpack.c.h.b16 %v832
      %v1088 = vunpack.c.l.b16 %v833
      %v1089 = vunpack.c.h.b16 %v833
      %v1090 = vunpack.c.l.b16 %v834
      %v1091 = vunpack.c.h.b16 %v834
      %v1092 = vunpack.c.l.b16 %v835
      %v1093 = vunpack.c.h.b16 %v835
      %v1094 = vunpack.c.l.b16 %v836
      %v1095 = vunpack.c.h.b16 %v836
      %v1096 = vunpack.c.l.b16 %v837
      %v1097 = vunpack.c.h.b16 %v837
      %v1098 = vunpack.c.l.b16 %v838
      %v1099 = vunpack.c.h.b16 %v838
      %v1100 = vunpack.c.l.b16 %v839
      %v1101 = vunpack.c.h.b16 %v839
      %v1102 = vunpack.c.l.b16 %v840
      %v1103 = vunpack.c.h.b16 %v840
      %v1104 = vunpack.c.l.b16 %v841
      %v1105 = vunpack.c.h.b16 %v841
      %v1106 = vunpack.c.l.b16 %v842
      %v1107 = vunpack.c.h.b16 %v842
      %v1108 = vunpack.c.l.b16 %v843
      %v1109 = vunpack.c.h.b16 %v843
      %v1110 = vunpack.c.l.b16 %v844
      %v1111 = vunpack.c.h.b16 %v844
      %v1112 = vunpack.c.l.b16 %v845
      %v1113 = vunpack.c.h.b16 %v845
      %v1114 = vunpack.c.l.b16 %v846
      %v1115 = vunpack.c.h.b16 %v846
      %v1116 = vunpack.c.l.b16 %v847
      %v1117 = vunpack.c.h.b16 %v847
      %v1118 = vunpack.c.l.b16 %v848
      %v1119 = vunpack.c.h.b16 %v848
      %v1120 = vunpack.c.l.b16 %v849
      %v1121 = vunpack.c.h.b16 %v849
      %v1122 = vunpack.c.l.b16 %v850
      %v1123 = vunpack.c.h.b16 %v850
      %v1124 = vunpack.c.l.b16 %v851
      %v1125 = vunpack.c.h.b16 %v851
      %v1126 = vunpack.c.l.b16 %v852
      %v1127 = vunpack.c.h.b16 %v852
      %v1128 = vunpack.c.l.b16 %v853
      %v1129 = vunpack.c.h.b16 %v853
      %v1130 = vunpack.c.l.b16 %v854
      %v1131 = vunpack.c.h.b16 %v854
      %v1132 = vunpack.c.l.b16 %v855
      %v1133 = vunpack.c.h.b16 %v855
      %v1134 = vunpack.c.l.b16 %v856
      %v1135 = vunpack.c.h.b16 %v856
      %v1136 = vunpack.c.l.b16 %v857
      %v1137 = vunpack.c.h.b16 %v857
      %v1138 = vunpack.c.l.b16 %v858
      %v1139 = vunpack.c.h.b16 %v858
      %v1140 = vunpack.c.l.b16 %v859
      %v1141 = vunpack.c.h.b16 %v859
      %v1142 = vunpack.c.l.b16 %v860
      %v1143 = vunpack.c.h.b16 %v860
      %v1144 = vunpack.c.l.b16 %v861
      %v1145 = vunpack.c.h.b16 %v861
      %v1146 = vunpack.c.l.b16 %v862
      %v1147 = vunpack.c.h.b16 %v862
      %v1148 = vunpack.c.l.b16 %v863
      %v1149 = vunpack.c.h.b16 %v863
      %v1150 = vunpack.c.l.b16 %v864
      %v1151 = vunpack.c.h.b16 %v864
      %v1152 = vunpack.c.l.b16 %v865
      %v1153 = vunpack.c.h.b16 %v865
      %v1154 = vunpack.c.l.b16 %v866
      %v1155 = vunpack.c.h.b16 %v866
      %v1156 = vunpack.c.l.b16 %v867
      %v1157 = vunpack.c.h.b16 %v867
      %v1158 = vunpack.c.l.b16 %v868
      %v1159 = vunpack.c.h.b16 %v868
      %v1160 = vunpack.c.l.b16 %v869
      %v1161 = vunpack.c.h.b16 %v869
      %v1162 = vunpack.c.l.b16 %v870
      %v1163 = vunpack.c.h.b16 %v870
      %v1164 = vunpack.c.l.b16 %v871
      %v1165 = vunpack.c.h.b16 %v871
      %v1166 = vunpack.c.l.b16 %v872
      %v1167 = vunpack.c.h.b16 %v872
      %v1168 = vunpack.c.l.b16 %v873
      %v1169 = vunpack.c.h.b16 %v873
      %v1170 = vunpack.c.l.b16 %v874
      %v1171 = vunpack.c.h.b16 %v874
      %v1172 = vunpack.c.l.b16 %v875
      %v1173 = vunpack.c.h.b16 %v875
      %v1174 = vunpack.c.l.b16 %v876
      %v1175 = vunpack.c.h.b16 %v876
      %v1176 = vunpack.c.l.b16 %v877
      %v1177 = vunpack.c.h.b16 %v877
      %v1178 = vunpack.c.l.b16 %v878
      %v1179 = vunpack.c.h.b16 %v878
      %v1180 = vunpack.c.l.b16 %v879
      %v1181 = vunpack.c.h.b16 %v879
      %v1182 = vunpack.c.l.b16 %v880
      %v1183 = vunpack.c.h.b16 %v880
      %v1184 = vunpack.c.l.b16 %v881
      %v1185 = vunpack.c.h.b16 %v881
      %v1186 = vunpack.c.l.b16 %v882
      %v1187 = vunpack.c.h.b16 %v882
      %v1188 = vunpack.c.l.b16 %v883
      %v1189 = vunpack.c.h.b16 %v883
      %v1190 = vpack.c.b16 %v996, %v994
      %v1191 = vpack.c.b16 %v997, %v995
      %v1192 = vpack.c.b16 %v1000, %v998
      %v1193 = vpack.c.b16 %v1001, %v999
      %v1194 = vpack.c.b16 %v1004, %v1002
      %v1195 = vpack.c.b16 %v1005, %v1003
      %v1196 = vpack.c.b16 %v1008, %v1006
      %v1197 = vpack.c.b16 %v1009, %v1007
      %v1198 = vpack.c.b16 %v1012, %v1010
      %v1199 = vpack.c.b16 %v1013, %v1011
      %v1200 = vpack.c.b16 %v1016, %v1014
      %v1201 = vpack.c.b16 %v1017, %v1015
      %v1202 = vpack.c.b16 %v1020, %v1018
      %v1203 = vpack.c.b16 %v1021, %v1019
      %v1204 = vpack.c.b16 %v1024, %v1022
      %v1205 = vpack.c.b16 %v1025, %v1023
      %v1206 = vpack.c.b16 %v1028, %v1026
      %v1207 = vpack.c.b16 %v1029, %v1027
      %v1208 = vpack.c.b16 %v1032, %v1030
      %v1209 = vpack.c.b16 %v1033, %v1031
      %v1210 = vpack.c.b16 %v1036, %v1034
      %v1211 = vpack.c.b16 %v1037, %v1035
      %v1212 = vpack.c.b16 %v1040, %v1038
      %v1213 = vpack.c.b16 %v1041, %v1039
      %v1214 = vpack.c.b16 %v1044, %v1042
      %v1215 = vpack.c.b16 %v1045, %v1043
      %v1216 = vpack.c.b16 %v1048, %v1046
      %v1217 = vpack.c.b16 %v1049, %v1047
      %v1218 = vpack.c.b16 %v1052, %v1050
      %v1219 = vpack.c.b16 %v1053, %v1051
      %v1220 = vpack.c.b16 %v1056, %v1054
      %v1221 = vpack.c.b16 %v1057, %v1055
      %v1222 = vpack.c.b16 %v1060, %v1058
      %v1223 = vpack.c.b16 %v1061, %v1059
      %v1224 = vpack.c.b16 %v1064, %v1062
      %v1225 = vpack.c.b16 %v1065, %v1063
      %v1226 = vpack.c.b16 %v1068, %v1066
      %v1227 = vpack.c.b16 %v1069, %v1067
      %v1228 = vpack.c.b16 %v1072, %v1070
      %v1229 = vpack.c.b16 %v1073, %v1071
      %v1230 = vpack.c.b16 %v1076, %v1074
      %v1231 = vpack.c.b16 %v1077, %v1075
      %v1232 = vpack.c.b16 %v1080, %v1078
      %v1233 = vpack.c.b16 %v1081, %v1079
      %v1234 = vpack.c.b16 %v1084, %v1082
      %v1235 = vpack.c.b16 %v1085, %v1083
      %v1236 = vpack.c.b16 %v1088, %v1086
      %v1237 = vpack.c.b16 %v1089, %v1087
      %v1238 = vpack.c.b16 %v1092, %v1090
      %v1239 = vpack.c.b16 %v1093, %v1091
      %v1240 = vpack.c.b16 %v1096, %v1094
      %v1241 = vpack.c.b16 %v1097, %v1095
      %v1242 = vpack.c.b16 %v1100, %v1098
      %v1243 = vpack.c.b16 %v1101, %v1099
      %v1244 = vpack.c.b16 %v1104, %v1102
      %v1245 = vpack.c.b16 %v1105, %v1103
      %v1246 = vpack.c.b16 %v1108, %v1106
      %v1247 = vpack.c.b16 %v1109, %v1107
      %v1248 = vpack.c.b16 %v1112, %v1110
      %v1249 = vpack.c.b16 %v1113, %v1111
      %v1250 = vpack.c.b16 %v1116, %v1114
      %v1251 = vpack.c.b16 %v1117, %v1115
      %v1252 = vpack.c.b16 %v1120, %v1118
      %v1253 = vpack.c.b16 %v1121, %v1119
      %v1254 = vpack.c.b16 %v1124, %v1122
      %v1255 = vpack.c.b16 %v1125, %v1123
      %v1256 = vpack.c.b16 %v1128, %v1126
      %v1257 = vpack.c.b16 %v1129, %v1127
      %v1258 = vpack.c.b16 %v1132, %v1130
      %v1259 = vpack.c.b16 %v1133, %v1131
      %v1260 = vpack.c.b16 %v1136, %v1134
      %v1261 = vpack.c.b16 %v1137, %v1135
      %v1262 = vpack.c.b16 %v1140, %v1138
      %v1263 = vpack.c.b16 %v1141, %v1139
      %v1264 = vpack.c.b16 %v1144, %v1142
      %v1265 = vpack.c.b16 %v1145, %v1143
      %v1266 = vpack.c.b16 %v1148, %v1146
      %v1267 = vpack.c.b16 %v1149, %v1147
      %v1268 = vpack.c.b16 %v1152, %v1150
      %v1269 = vpack.c.b16 %v1153, %v1151
      %v1270 = vpack.c.b16 %v1156, %v1154
      %v1271 = vpack.c.b16 %v1157, %v1155
      %v1272 = vpack.c.b16 %v1160, %v1158
      %v1273 = vpack.c.b16 %v1161, %v1159
      %v1274 = vpack.c.b16 %v1164, %v1162
      %v1275 = vpack.c.b16 %v1165, %v1163
      %v1276 = vpack.c.b16 %v1168, %v1166
      %v1277 = vpack.c.b16 %v1169, %v1167
      %v1278 = vpack.c.b16 %v1172, %v1170
      %v1279 = vpack.c.b16 %v1173, %v1171
      %v1280 = vpack.c.b16 %v1176, %v1174
      %v1281 = vpack.c.b16 %v1177, %v1175
      %v1282 = vpack.c.b16 %v1180, %v1178
      %v1283 = vpack.c.b16 %v1181, %v1179
      %v1284 = vpack.c.b16 %v1184, %v1182
      %v1285 = vpack.c.b16 %v1185, %v1183
      %v1286 = vpack.c.b16 %v1188, %v1186
      %v1287 = vpack.c.b16 %v1189, %v1187
      %vm1386 = vcmask 130048
      %v1388 = vsel %vm1386, %v680, 0
      %v1391 = vsel %vm1386, %v687, 0
      %v1394 = vsel %vm1386, %v694, 0
      %v1397 = vsel %vm1386, %v701, 0
      %v1400 = vsel %vm1386, %v708, 0
      %v1403 = vsel %vm1386, %v715, 0
      %v1406 = vsel %vm1386, %v722, 0
      %v1409 = vsel %vm1386, %v729, 0
      %v1412 = vsel %vm1386, %v736, 0
      %v1415 = vsel %vm1386, %v743, 0
      %v1418 = vsel %vm1386, %v750, 0
      %v1421 = vsel %vm1386, %v757, 0
      %v1424 = vsel %vm1386, %v764, 0
      %v1427 = vsel %vm1386, %v771, 0
      %v1430 = vsel %vm1386, %v778, 0
      %v1433 = vsel %vm1386, %v785, 0
      %1435 = vmatprep.subr.bf16.mxu0 %v1191
      %1436 = vmatpush1.bf16.msra.mxu0 %v1190
      %1437 = vmatprep.subr.bf16.mxu0 %v1193
      %1438 = vmatpush1.bf16.msra.mxu0 %v1192
      %1439 = vmatprep.subr.bf16.mxu0 %v1195
      %1440 = vmatpush1.bf16.msra.mxu0 %v1194
      %1441 = vmatprep.subr.bf16.mxu0 %v1197
      %1442 = vmatpush1.bf16.msra.mxu0 %v1196
      %1443 = vmatprep.subr.bf16.mxu0 %v1199
      %1444 = vmatpush1.bf16.msra.mxu0 %v1198
      %1445 = vmatprep.subr.bf16.mxu0 %v1201
      %1446 = vmatpush1.bf16.msra.mxu0 %v1200
      %1447 = vmatprep.subr.bf16.mxu0 %v1203
      %1448 = vmatpush1.bf16.msra.mxu0 %v1202
      %1449 = vmatprep.subr.bf16.mxu0 %v1205
      %1450 = vmatpush1.bf16.msra.mxu0 %v1204
      %1451 = vmatprep.subr.bf16.mxu0 %v1207
      %1452 = vmatpush1.bf16.msra.mxu0 %v1206
      %1453 = vmatprep.subr.bf16.mxu0 %v1209
      %1454 = vmatpush1.bf16.msra.mxu0 %v1208
      %1455 = vmatprep.subr.bf16.mxu0 %v1211
      %1456 = vmatpush1.bf16.msra.mxu0 %v1210
      %1457 = vmatprep.subr.bf16.mxu0 %v1213
      %1458 = vmatpush1.bf16.msra.mxu0 %v1212
      %1459 = vmatprep.subr.bf16.mxu0 %v1215
      %1460 = vmatpush1.bf16.msra.mxu0 %v1214
      %1461 = vmatprep.subr.bf16.mxu0 %v1217
      %1462 = vmatpush1.bf16.msra.mxu0 %v1216
      %1463 = vmatprep.subr.bf16.mxu0 %v1219
      %1464 = vmatpush1.bf16.msra.mxu0 %v1218
      %1465 = vmatprep.subr.bf16.mxu0 %v1221
      %1466 = vmatpush1.bf16.msra.mxu0 %v1220
      %1467 = vmatprep.mubr.bf16.mxu0 %v675
      %1468 = vmatmul.mubr.bf16.gmra.mrb[0].mxu0 %v674
      %v1469 = vpop.f32.mrb[0].mxu0
      %v1470 = vadd.f32 %v889, %v1469
      %v1471 = vpop.f32.mrb[0].mxu0
      %v1472 = vadd.f32 %v893, %v1471
      %v1473 = vpop.f32.mrb[0].mxu0
      %v1474 = vadd.f32 %v889, %v1473
      %v1475 = vpop.f32.mrb[0].mxu0
      %v1476 = vadd.f32 %v893, %v1475
      %1477 = vmatprep.mubr.bf16.mxu0 %v682
      %1478 = vmatmul.mubr.bf16.gmra.mrb[0].mxu0 %v681
      %v1479 = vpop.f32.mrb[0].mxu0
      %v1480 = vadd.f32 %v889, %v1479
      %v1481 = vpop.f32.mrb[0].mxu0
      %v1482 = vadd.f32 %v893, %v1481
      %v1483 = vpop.f32.mrb[0].mxu0
      %v1484 = vadd.f32 %v889, %v1483
      %v1485 = vpop.f32.mrb[0].mxu0
      %v1486 = vadd.f32 %v893, %v1485
      %1487 = vmatprep.mubr.bf16.mxu0 %v689
      %1488 = vmatmul.mubr.bf16.gmra.mrb[0].mxu0 %v688
      %v1489 = vpop.f32.mrb[0].mxu0
      %v1490 = vadd.f32 %v889, %v1489
      %v1491 = vpop.f32.mrb[0].mxu0
      %v1492 = vadd.f32 %v893, %v1491
      %v1493 = vpop.f32.mrb[0].mxu0
      %v1494 = vadd.f32 %v889, %v1493
      %v1495 = vpop.f32.mrb[0].mxu0
      %v1496 = vadd.f32 %v893, %v1495
      %1497 = vmatprep.mubr.bf16.mxu0 %v696
      %1498 = vmatmul.mubr.bf16.gmra.mrb[0].mxu0 %v695
      %v1499 = vpop.f32.mrb[0].mxu0
      %v1500 = vadd.f32 %v889, %v1499
      %v1501 = vpop.f32.mrb[0].mxu0
      %v1502 = vadd.f32 %v893, %v1501
      %v1503 = vpop.f32.mrb[0].mxu0
      %v1504 = vadd.f32 %v889, %v1503
      %v1505 = vpop.f32.mrb[0].mxu0
      %v1506 = vadd.f32 %v893, %v1505
      %1507 = vmatprep.mubr.bf16.mxu0 %v703
      %1508 = vmatmul.mubr.bf16.gmra.mrb[0].mxu0 %v702
      %v1509 = vpop.f32.mrb[0].mxu0
      %v1510 = vadd.f32 %v889, %v1509
      %v1511 = vpop.f32.mrb[0].mxu0
      %v1512 = vadd.f32 %v893, %v1511
      %v1513 = vpop.f32.mrb[0].mxu0
      %v1514 = vadd.f32 %v889, %v1513
      %v1515 = vpop.f32.mrb[0].mxu0
      %v1516 = vadd.f32 %v893, %v1515
      %1517 = vmatprep.mubr.bf16.mxu0 %v710
      %1518 = vmatmul.mubr.bf16.gmra.mrb[0].mxu0 %v709
      %v1519 = vpop.f32.mrb[0].mxu0
      %v1520 = vadd.f32 %v889, %v1519
      %v1521 = vpop.f32.mrb[0].mxu0
      %v1522 = vadd.f32 %v893, %v1521
      %v1523 = vpop.f32.mrb[0].mxu0
      %v1524 = vadd.f32 %v889, %v1523
      %v1525 = vpop.f32.mrb[0].mxu0
      %v1526 = vadd.f32 %v893, %v1525
      %1527 = vmatprep.mubr.bf16.mxu0 %v717
      %1528 = vmatmul.mubr.bf16.gmra.mrb[0].mxu0 %v716
      %v1529 = vpop.f32.mrb[0].mxu0
      %v1530 = vadd.f32 %v889, %v1529
      %v1531 = vpop.f32.mrb[0].mxu0
      %v1532 = vadd.f32 %v893, %v1531
      %v1533 = vpop.f32.mrb[0].mxu0
      %v1534 = vadd.f32 %v889, %v1533
      %v1535 = vpop.f32.mrb[0].mxu0
      %v1536 = vadd.f32 %v893, %v1535
      %1537 = vmatprep.mubr.bf16.mxu0 %v724
      %1538 = vmatmul.mubr.bf16.gmra.mrb[0].mxu0 %v723
      %v1539 = vpop.f32.mrb[0].mxu0
      %v1540 = vadd.f32 %v889, %v1539
      %v1541 = vpop.f32.mrb[0].mxu0
      %v1542 = vadd.f32 %v893, %v1541
      %v1543 = vpop.f32.mrb[0].mxu0
      %v1544 = vadd.f32 %v889, %v1543
      %v1545 = vpop.f32.mrb[0].mxu0
      %v1546 = vadd.f32 %v893, %v1545
      %1547 = vmatprep.mubr.bf16.mxu0 %v731
      %1548 = vmatmul.mubr.bf16.gmra.mrb[0].mxu0 %v730
      %v1549 = vpop.f32.mrb[0].mxu0
      %v1550 = vadd.f32 %v889, %v1549
      %v1551 = vpop.f32.mrb[0].mxu0
      %v1552 = vadd.f32 %v893, %v1551
      %v1553 = vpop.f32.mrb[0].mxu0
      %v1554 = vadd.f32 %v889, %v1553
      %v1555 = vpop.f32.mrb[0].mxu0
      %v1556 = vadd.f32 %v893, %v1555
      %1557 = vmatprep.mubr.bf16.mxu0 %v738
      %1558 = vmatmul.mubr.bf16.gmra.mrb[0].mxu0 %v737
      %v1559 = vpop.f32.mrb[0].mxu0
      %v1560 = vadd.f32 %v889, %v1559
      %v1561 = vpop.f32.mrb[0].mxu0
      %v1562 = vadd.f32 %v893, %v1561
      %v1563 = vpop.f32.mrb[0].mxu0
      %v1564 = vadd.f32 %v889, %v1563
      %v1565 = vpop.f32.mrb[0].mxu0
      %v1566 = vadd.f32 %v893, %v1565
      %1567 = vmatprep.mubr.bf16.mxu0 %v745
      %1568 = vmatmul.mubr.bf16.gmra.mrb[0].mxu0 %v744
      %v1569 = vpop.f32.mrb[0].mxu0
      %v1570 = vadd.f32 %v889, %v1569
      %v1571 = vpop.f32.mrb[0].mxu0
      %v1572 = vadd.f32 %v893, %v1571
      %v1573 = vpop.f32.mrb[0].mxu0
      %v1574 = vadd.f32 %v889, %v1573
      %v1575 = vpop.f32.mrb[0].mxu0
      %v1576 = vadd.f32 %v893, %v1575
      %1577 = vmatprep.mubr.bf16.mxu0 %v752
      %1578 = vmatmul.mubr.bf16.gmra.mrb[0].mxu0 %v751
      %v1579 = vpop.f32.mrb[0].mxu0
      %v1580 = vadd.f32 %v889, %v1579
      %v1581 = vpop.f32.mrb[0].mxu0
      %v1582 = vadd.f32 %v893, %v1581
      %v1583 = vpop.f32.mrb[0].mxu0
      %v1584 = vadd.f32 %v889, %v1583
      %v1585 = vpop.f32.mrb[0].mxu0
      %v1586 = vadd.f32 %v893, %v1585
      %1587 = vmatprep.mubr.bf16.mxu0 %v759
      %1588 = vmatmul.mubr.bf16.gmra.mrb[0].mxu0 %v758
      %v1589 = vpop.f32.mrb[0].mxu0
      %v1590 = vadd.f32 %v889, %v1589
      %v1591 = vpop.f32.mrb[0].mxu0
      %v1592 = vadd.f32 %v893, %v1591
      %v1593 = vpop.f32.mrb[0].mxu0
      %v1594 = vadd.f32 %v889, %v1593
      %v1595 = vpop.f32.mrb[0].mxu0
      %v1596 = vadd.f32 %v893, %v1595
      %1597 = vmatprep.mubr.bf16.mxu0 %v766
      %1598 = vmatmul.mubr.bf16.gmra.mrb[0].mxu0 %v765
      %v1599 = vpop.f32.mrb[0].mxu0
      %v1600 = vadd.f32 %v889, %v1599
      %v1601 = vpop.f32.mrb[0].mxu0
      %v1602 = vadd.f32 %v893, %v1601
      %v1603 = vpop.f32.mrb[0].mxu0
      %v1604 = vadd.f32 %v889, %v1603
      %v1605 = vpop.f32.mrb[0].mxu0
      %v1606 = vadd.f32 %v893, %v1605
      %1607 = vmatprep.mubr.bf16.mxu0 %v773
      %1608 = vmatmul.mubr.bf16.gmra.mrb[0].mxu0 %v772
      %v1609 = vpop.f32.mrb[0].mxu0
      %v1610 = vadd.f32 %v889, %v1609
      %v1611 = vpop.f32.mrb[0].mxu0
      %v1612 = vadd.f32 %v893, %v1611
      %v1613 = vpop.f32.mrb[0].mxu0
      %v1614 = vadd.f32 %v889, %v1613
      %v1615 = vpop.f32.mrb[0].mxu0
      %v1616 = vadd.f32 %v893, %v1615
      %1617 = vmatprep.mubr.bf16.mxu0 %v780
      %1618 = vmatmul.mubr.bf16.gmra.mrb[0].mxu0 %v779
      %v1619 = vpop.f32.mrb[0].mxu0
      %v1620 = vadd.f32 %v889, %v1619
      %v1621 = vpop.f32.mrb[0].mxu0
      %v1622 = vadd.f32 %v893, %v1621
      %v1623 = vpop.f32.mrb[0].mxu0
      %v1624 = vadd.f32 %v889, %v1623
      %v1625 = vpop.f32.mrb[0].mxu0
      %v1626 = vadd.f32 %v893, %v1625
      %1627 = vdwg.mxu0
      %1628 = vmatprep.subr.bf16.mxu0 %v1223
      %1629 = vmatpush1.bf16.msra.mxu0 %v1222
      %1630 = vmatprep.subr.bf16.mxu0 %v1225
      %1631 = vmatpush1.bf16.msra.mxu0 %v1224
      %1632 = vmatprep.subr.bf16.mxu0 %v1227
      %1633 = vmatpush1.bf16.msra.mxu0 %v1226
      %1634 = vmatprep.subr.bf16.mxu0 %v1229
      %1635 = vmatpush1.bf16.msra.mxu0 %v1228
      %1636 = vmatprep.subr.bf16.mxu0 %v1231
      %1637 = vmatpush1.bf16.msra.mxu0 %v1230
      %1638 = vmatprep.subr.bf16.mxu0 %v1233
      %1639 = vmatpush1.bf16.msra.mxu0 %v1232
      %1640 = vmatprep.subr.bf16.mxu0 %v1235
      %1641 = vmatpush1.bf16.msra.mxu0 %v1234
      %1642 = vmatprep.subr.bf16.mxu0 %v1237
      %1643 = vmatpush1.bf16.msra.mxu0 %v1236
      %1644 = vmatprep.subr.bf16.mxu0 %v1239
      %1645 = vmatpush1.bf16.msra.mxu0 %v1238
      %1646 = vmatprep.subr.bf16.mxu0 %v1241
      %1647 = vmatpush1.bf16.msra.mxu0 %v1240
      %1648 = vmatprep.subr.bf16.mxu0 %v1243
      %1649 = vmatpush1.bf16.msra.mxu0 %v1242
      %1650 = vmatprep.subr.bf16.mxu0 %v1245
      %1651 = vmatpush1.bf16.msra.mxu0 %v1244
      %1652 = vmatprep.subr.bf16.mxu0 %v1247
      %1653 = vmatpush1.bf16.msra.mxu0 %v1246
      %1654 = vmatprep.subr.bf16.mxu0 %v1249
      %1655 = vmatpush1.bf16.msra.mxu0 %v1248
      %1656 = vmatprep.subr.bf16.mxu0 %v1251
      %1657 = vmatpush1.bf16.msra.mxu0 %v1250
      %1658 = vmatprep.subr.bf16.mxu0 %v1253
      %1659 = vmatpush1.bf16.msra.mxu0 %v1252
      %1660 = vmatprep.mubr.bf16.mxu0 %v677
      %1661 = vmatmul.mubr.bf16.gmra.mrb[0].mxu0 %v676
      %v1662 = vpop.f32.mrb[0].mxu0
      %v1663 = vadd.f32 %v1470, %v1662
      %v1664 = vpop.f32.mrb[0].mxu0
      %v1665 = vadd.f32 %v1472, %v1664
      %v1666 = vpop.f32.mrb[0].mxu0
      %v1667 = vadd.f32 %v1474, %v1666
      %v1668 = vpop.f32.mrb[0].mxu0
      %v1669 = vadd.f32 %v1476, %v1668
      %1670 = vmatprep.mubr.bf16.mxu0 %v684
      %1671 = vmatmul.mubr.bf16.gmra.mrb[0].mxu0 %v683
      %v1672 = vpop.f32.mrb[0].mxu0
      %v1673 = vadd.f32 %v1480, %v1672
      %v1674 = vpop.f32.mrb[0].mxu0
      %v1675 = vadd.f32 %v1482, %v1674
      %v1676 = vpop.f32.mrb[0].mxu0
      %v1677 = vadd.f32 %v1484, %v1676
      %v1678 = vpop.f32.mrb[0].mxu0
      %v1679 = vadd.f32 %v1486, %v1678
      %1680 = vmatprep.mubr.bf16.mxu0 %v691
      %1681 = vmatmul.mubr.bf16.gmra.mrb[0].mxu0 %v690
      %v1682 = vpop.f32.mrb[0].mxu0
      %v1683 = vadd.f32 %v1490, %v1682
      %v1684 = vpop.f32.mrb[0].mxu0
      %v1685 = vadd.f32 %v1492, %v1684
      %v1686 = vpop.f32.mrb[0].mxu0
      %v1687 = vadd.f32 %v1494, %v1686
      %v1688 = vpop.f32.mrb[0].mxu0
      %v1689 = vadd.f32 %v1496, %v1688
      %1690 = vmatprep.mubr.bf16.mxu0 %v698
      %1691 = vmatmul.mubr.bf16.gmra.mrb[0].mxu0 %v697
      %v1692 = vpop.f32.mrb[0].mxu0
      %v1693 = vadd.f32 %v1500, %v1692
      %v1694 = vpop.f32.mrb[0].mxu0
      %v1695 = vadd.f32 %v1502, %v1694
      %v1696 = vpop.f32.mrb[0].mxu0
      %v1697 = vadd.f32 %v1504, %v1696
      %v1698 = vpop.f32.mrb[0].mxu0
      %v1699 = vadd.f32 %v1506, %v1698
      %1700 = vmatprep.mubr.bf16.mxu0 %v705
      %1701 = vmatmul.mubr.bf16.gmra.mrb[0].mxu0 %v704
      %v1702 = vpop.f32.mrb[0].mxu0
      %v1703 = vadd.f32 %v1510, %v1702
      %v1704 = vpop.f32.mrb[0].mxu0
      %v1705 = vadd.f32 %v1512, %v1704
      %v1706 = vpop.f32.mrb[0].mxu0
      %v1707 = vadd.f32 %v1514, %v1706
      %v1708 = vpop.f32.mrb[0].mxu0
      %v1709 = vadd.f32 %v1516, %v1708
      %1710 = vmatprep.mubr.bf16.mxu0 %v712
      %1711 = vmatmul.mubr.bf16.gmra.mrb[0].mxu0 %v711
      %v1712 = vpop.f32.mrb[0].mxu0
      %v1713 = vadd.f32 %v1520, %v1712
      %v1714 = vpop.f32.mrb[0].mxu0
      %v1715 = vadd.f32 %v1522, %v1714
      %v1716 = vpop.f32.mrb[0].mxu0
      %v1717 = vadd.f32 %v1524, %v1716
      %v1718 = vpop.f32.mrb[0].mxu0
      %v1719 = vadd.f32 %v1526, %v1718
      %1720 = vmatprep.mubr.bf16.mxu0 %v719
      %1721 = vmatmul.mubr.bf16.gmra.mrb[0].mxu0 %v718
      %v1722 = vpop.f32.mrb[0].mxu0
      %v1723 = vadd.f32 %v1530, %v1722
      %v1724 = vpop.f32.mrb[0].mxu0
      %v1725 = vadd.f32 %v1532, %v1724
      %v1726 = vpop.f32.mrb[0].mxu0
      %v1727 = vadd.f32 %v1534, %v1726
      %v1728 = vpop.f32.mrb[0].mxu0
      %v1729 = vadd.f32 %v1536, %v1728
      %1730 = vmatprep.mubr.bf16.mxu0 %v726
      %1731 = vmatmul.mubr.bf16.gmra.mrb[0].mxu0 %v725
      %v1732 = vpop.f32.mrb[0].mxu0
      %v1733 = vadd.f32 %v1540, %v1732
      %v1734 = vpop.f32.mrb[0].mxu0
      %v1735 = vadd.f32 %v1542, %v1734
      %v1736 = vpop.f32.mrb[0].mxu0
      %v1737 = vadd.f32 %v1544, %v1736
      %v1738 = vpop.f32.mrb[0].mxu0
      %v1739 = vadd.f32 %v1546, %v1738
      %1740 = vmatprep.mubr.bf16.mxu0 %v733
      %1741 = vmatmul.mubr.bf16.gmra.mrb[0].mxu0 %v732
      %v1742 = vpop.f32.mrb[0].mxu0
      %v1743 = vadd.f32 %v1550, %v1742
      %v1744 = vpop.f32.mrb[0].mxu0
      %v1745 = vadd.f32 %v1552, %v1744
      %v1746 = vpop.f32.mrb[0].mxu0
      %v1747 = vadd.f32 %v1554, %v1746
      %v1748 = vpop.f32.mrb[0].mxu0
      %v1749 = vadd.f32 %v1556, %v1748
      %1750 = vmatprep.mubr.bf16.mxu0 %v740
      %1751 = vmatmul.mubr.bf16.gmra.mrb[0].mxu0 %v739
      %v1752 = vpop.f32.mrb[0].mxu0
      %v1753 = vadd.f32 %v1560, %v1752
      %v1754 = vpop.f32.mrb[0].mxu0
      %v1755 = vadd.f32 %v1562, %v1754
      %v1756 = vpop.f32.mrb[0].mxu0
      %v1757 = vadd.f32 %v1564, %v1756
      %v1758 = vpop.f32.mrb[0].mxu0
      %v1759 = vadd.f32 %v1566, %v1758
      %1760 = vmatprep.mubr.bf16.mxu0 %v747
      %1761 = vmatmul.mubr.bf16.gmra.mrb[0].mxu0 %v746
      %v1762 = vpop.f32.mrb[0].mxu0
      %v1763 = vadd.f32 %v1570, %v1762
      %v1764 = vpop.f32.mrb[0].mxu0
      %v1765 = vadd.f32 %v1572, %v1764
      %v1766 = vpop.f32.mrb[0].mxu0
      %v1767 = vadd.f32 %v1574, %v1766
      %v1768 = vpop.f32.mrb[0].mxu0
      %v1769 = vadd.f32 %v1576, %v1768
      %1770 = vmatprep.mubr.bf16.mxu0 %v754
      %1771 = vmatmul.mubr.bf16.gmra.mrb[0].mxu0 %v753
      %v1772 = vpop.f32.mrb[0].mxu0
      %v1773 = vadd.f32 %v1580, %v1772
      %v1774 = vpop.f32.mrb[0].mxu0
      %v1775 = vadd.f32 %v1582, %v1774
      %v1776 = vpop.f32.mrb[0].mxu0
      %v1777 = vadd.f32 %v1584, %v1776
      %v1778 = vpop.f32.mrb[0].mxu0
      %v1779 = vadd.f32 %v1586, %v1778
      %1780 = vmatprep.mubr.bf16.mxu0 %v761
      %1781 = vmatmul.mubr.bf16.gmra.mrb[0].mxu0 %v760
      %v1782 = vpop.f32.mrb[0].mxu0
      %v1783 = vadd.f32 %v1590, %v1782
      %v1784 = vpop.f32.mrb[0].mxu0
      %v1785 = vadd.f32 %v1592, %v1784
      %v1786 = vpop.f32.mrb[0].mxu0
      %v1787 = vadd.f32 %v1594, %v1786
      %v1788 = vpop.f32.mrb[0].mxu0
      %v1789 = vadd.f32 %v1596, %v1788
      %1790 = vmatprep.mubr.bf16.mxu0 %v768
      %1791 = vmatmul.mubr.bf16.gmra.mrb[0].mxu0 %v767
      %v1792 = vpop.f32.mrb[0].mxu0
      %v1793 = vadd.f32 %v1600, %v1792
      %v1794 = vpop.f32.mrb[0].mxu0
      %v1795 = vadd.f32 %v1602, %v1794
      %v1796 = vpop.f32.mrb[0].mxu0
      %v1797 = vadd.f32 %v1604, %v1796
      %v1798 = vpop.f32.mrb[0].mxu0
      %v1799 = vadd.f32 %v1606, %v1798
      %1800 = vmatprep.mubr.bf16.mxu0 %v775
      %1801 = vmatmul.mubr.bf16.gmra.mrb[0].mxu0 %v774
      %v1802 = vpop.f32.mrb[0].mxu0
      %v1803 = vadd.f32 %v1610, %v1802
      %v1804 = vpop.f32.mrb[0].mxu0
      %v1805 = vadd.f32 %v1612, %v1804
      %v1806 = vpop.f32.mrb[0].mxu0
      %v1807 = vadd.f32 %v1614, %v1806
      %v1808 = vpop.f32.mrb[0].mxu0
      %v1809 = vadd.f32 %v1616, %v1808
      %1810 = vmatprep.mubr.bf16.mxu0 %v782
      %1811 = vmatmul.mubr.bf16.gmra.mrb[0].mxu0 %v781
      %v1812 = vpop.f32.mrb[0].mxu0
      %v1813 = vadd.f32 %v1620, %v1812
      %v1814 = vpop.f32.mrb[0].mxu0
      %v1815 = vadd.f32 %v1622, %v1814
      %v1816 = vpop.f32.mrb[0].mxu0
      %v1817 = vadd.f32 %v1624, %v1816
      %v1818 = vpop.f32.mrb[0].mxu0
      %v1819 = vadd.f32 %v1626, %v1818
      %1820 = vdwg.mxu0
      %1821 = vmatprep.subr.bf16.mxu0 %v1255
      %1822 = vmatpush1.bf16.msra.mxu0 %v1254
      %1823 = vmatprep.subr.bf16.mxu0 %v1257
      %1824 = vmatpush1.bf16.msra.mxu0 %v1256
      %1825 = vmatprep.subr.bf16.mxu0 %v1259
      %1826 = vmatpush1.bf16.msra.mxu0 %v1258
      %1827 = vmatprep.subr.bf16.mxu0 %v1261
      %1828 = vmatpush1.bf16.msra.mxu0 %v1260
      %1829 = vmatprep.subr.bf16.mxu0 %v1263
      %1830 = vmatpush1.bf16.msra.mxu0 %v1262
      %1831 = vmatprep.subr.bf16.mxu0 %v1265
      %1832 = vmatpush1.bf16.msra.mxu0 %v1264
      %1833 = vmatprep.subr.bf16.mxu0 %v1267
      %1834 = vmatpush1.bf16.msra.mxu0 %v1266
      %1835 = vmatprep.subr.bf16.mxu0 %v1269
      %1836 = vmatpush1.bf16.msra.mxu0 %v1268
      %1837 = vmatprep.subr.bf16.mxu0 %v1271
      %1838 = vmatpush1.bf16.msra.mxu0 %v1270
      %1839 = vmatprep.subr.bf16.mxu0 %v1273
      %1840 = vmatpush1.bf16.msra.mxu0 %v1272
      %1841 = vmatprep.subr.bf16.mxu0 %v1275
      %1842 = vmatpush1.bf16.msra.mxu0 %v1274
      %1843 = vmatprep.subr.bf16.mxu0 %v1277
      %1844 = vmatpush1.bf16.msra.mxu0 %v1276
      %1845 = vmatprep.subr.bf16.mxu0 %v1279
      %1846 = vmatpush1.bf16.msra.mxu0 %v1278
      %1847 = vmatprep.subr.bf16.mxu0 %v1281
      %1848 = vmatpush1.bf16.msra.mxu0 %v1280
      %1849 = vmatprep.subr.bf16.mxu0 %v1283
      %1850 = vmatpush1.bf16.msra.mxu0 %v1282
      %1851 = vmatprep.subr.bf16.mxu0 %v1285
      %1852 = vmatpush1.bf16.msra.mxu0 %v1284
      %1853 = vmatprep.mubr.bf16.mxu0 %v679
      %1854 = vmatmul.mubr.bf16.gmra.mrb[0].mxu0 %v678
      %v1855 = vpop.f32.mrb[0].mxu0
      %v1856 = vadd.f32 %v1663, %v1855
      %v1857 = vpop.f32.mrb[0].mxu0
      %v1858 = vadd.f32 %v1665, %v1857
      %v1859 = vpop.f32.mrb[0].mxu0
      %v1860 = vadd.f32 %v1667, %v1859
      %v1861 = vpop.f32.mrb[0].mxu0
      %v1862 = vadd.f32 %v1669, %v1861
      %1863 = vmatprep.mubr.bf16.mxu0 %v686
      %1864 = vmatmul.mubr.bf16.gmra.mrb[0].mxu0 %v685
      %v1865 = vpop.f32.mrb[0].mxu0
      %v1866 = vadd.f32 %v1673, %v1865
      %v1867 = vpop.f32.mrb[0].mxu0
      %v1868 = vadd.f32 %v1675, %v1867
      %v1869 = vpop.f32.mrb[0].mxu0
      %v1870 = vadd.f32 %v1677, %v1869
      %v1871 = vpop.f32.mrb[0].mxu0
      %v1872 = vadd.f32 %v1679, %v1871
      %1873 = vmatprep.mubr.bf16.mxu0 %v693
      %1874 = vmatmul.mubr.bf16.gmra.mrb[0].mxu0 %v692
      %v1875 = vpop.f32.mrb[0].mxu0
      %v1876 = vadd.f32 %v1683, %v1875
      %v1877 = vpop.f32.mrb[0].mxu0
      %v1878 = vadd.f32 %v1685, %v1877
      %v1879 = vpop.f32.mrb[0].mxu0
      %v1880 = vadd.f32 %v1687, %v1879
      %v1881 = vpop.f32.mrb[0].mxu0
      %v1882 = vadd.f32 %v1689, %v1881
      %1883 = vmatprep.mubr.bf16.mxu0 %v700
      %1884 = vmatmul.mubr.bf16.gmra.mrb[0].mxu0 %v699
      %v1885 = vpop.f32.mrb[0].mxu0
      %v1886 = vadd.f32 %v1693, %v1885
      %v1887 = vpop.f32.mrb[0].mxu0
      %v1888 = vadd.f32 %v1695, %v1887
      %v1889 = vpop.f32.mrb[0].mxu0
      %v1890 = vadd.f32 %v1697, %v1889
      %v1891 = vpop.f32.mrb[0].mxu0
      %v1892 = vadd.f32 %v1699, %v1891
      %1893 = vmatprep.mubr.bf16.mxu0 %v707
      %1894 = vmatmul.mubr.bf16.gmra.mrb[0].mxu0 %v706
      %v1895 = vpop.f32.mrb[0].mxu0
      %v1896 = vadd.f32 %v1703, %v1895
      %v1897 = vpop.f32.mrb[0].mxu0
      %v1898 = vadd.f32 %v1705, %v1897
      %v1899 = vpop.f32.mrb[0].mxu0
      %v1900 = vadd.f32 %v1707, %v1899
      %v1901 = vpop.f32.mrb[0].mxu0
      %v1902 = vadd.f32 %v1709, %v1901
      %1903 = vmatprep.mubr.bf16.mxu0 %v714
      %1904 = vmatmul.mubr.bf16.gmra.mrb[0].mxu0 %v713
      %v1905 = vpop.f32.mrb[0].mxu0
      %v1906 = vadd.f32 %v1713, %v1905
      %v1907 = vpop.f32.mrb[0].mxu0
      %v1908 = vadd.f32 %v1715, %v1907
      %v1909 = vpop.f32.mrb[0].mxu0
      %v1910 = vadd.f32 %v1717, %v1909
      %v1911 = vpop.f32.mrb[0].mxu0
      %v1912 = vadd.f32 %v1719, %v1911
      %1913 = vmatprep.mubr.bf16.mxu0 %v721
      %1914 = vmatmul.mubr.bf16.gmra.mrb[0].mxu0 %v720
      %v1915 = vpop.f32.mrb[0].mxu0
      %v1916 = vadd.f32 %v1723, %v1915
      %v1917 = vpop.f32.mrb[0].mxu0
      %v1918 = vadd.f32 %v1725, %v1917
      %v1919 = vpop.f32.mrb[0].mxu0
      %v1920 = vadd.f32 %v1727, %v1919
      %v1921 = vpop.f32.mrb[0].mxu0
      %v1922 = vadd.f32 %v1729, %v1921
      %1923 = vmatprep.mubr.bf16.mxu0 %v728
      %1924 = vmatmul.mubr.bf16.gmra.mrb[0].mxu0 %v727
      %v1925 = vpop.f32.mrb[0].mxu0
      %v1926 = vadd.f32 %v1733, %v1925
      %v1927 = vpop.f32.mrb[0].mxu0
      %v1928 = vadd.f32 %v1735, %v1927
      %v1929 = vpop.f32.mrb[0].mxu0
      %v1930 = vadd.f32 %v1737, %v1929
      %v1931 = vpop.f32.mrb[0].mxu0
      %v1932 = vadd.f32 %v1739, %v1931
      %1933 = vmatprep.mubr.bf16.mxu0 %v735
      %1934 = vmatmul.mubr.bf16.gmra.mrb[0].mxu0 %v734
      %v1935 = vpop.f32.mrb[0].mxu0
      %v1936 = vadd.f32 %v1743, %v1935
      %v1937 = vpop.f32.mrb[0].mxu0
      %v1938 = vadd.f32 %v1745, %v1937
      %v1939 = vpop.f32.mrb[0].mxu0
      %v1940 = vadd.f32 %v1747, %v1939
      %v1941 = vpop.f32.mrb[0].mxu0
      %v1942 = vadd.f32 %v1749, %v1941
      %1943 = vmatprep.mubr.bf16.mxu0 %v742
      %1944 = vmatmul.mubr.bf16.gmra.mrb[0].mxu0 %v741
      %v1945 = vpop.f32.mrb[0].mxu0
      %v1946 = vadd.f32 %v1753, %v1945
      %v1947 = vpop.f32.mrb[0].mxu0
      %v1948 = vadd.f32 %v1755, %v1947
      %v1949 = vpop.f32.mrb[0].mxu0
      %v1950 = vadd.f32 %v1757, %v1949
      %v1951 = vpop.f32.mrb[0].mxu0
      %v1952 = vadd.f32 %v1759, %v1951
      %1953 = vmatprep.mubr.bf16.mxu0 %v749
      %1954 = vmatmul.mubr.bf16.gmra.mrb[0].mxu0 %v748
      %v1955 = vpop.f32.mrb[0].mxu0
      %v1956 = vadd.f32 %v1763, %v1955
      %v1957 = vpop.f32.mrb[0].mxu0
      %v1958 = vadd.f32 %v1765, %v1957
      %v1959 = vpop.f32.mrb[0].mxu0
      %v1960 = vadd.f32 %v1767, %v1959
      %v1961 = vpop.f32.mrb[0].mxu0
      %v1962 = vadd.f32 %v1769, %v1961
      %1963 = vmatprep.mubr.bf16.mxu0 %v756
      %1964 = vmatmul.mubr.bf16.gmra.mrb[0].mxu0 %v755
      %v1965 = vpop.f32.mrb[0].mxu0
      %v1966 = vadd.f32 %v1773, %v1965
      %v1967 = vpop.f32.mrb[0].mxu0
      %v1968 = vadd.f32 %v1775, %v1967
      %v1969 = vpop.f32.mrb[0].mxu0
      %v1970 = vadd.f32 %v1777, %v1969
      %v1971 = vpop.f32.mrb[0].mxu0
      %v1972 = vadd.f32 %v1779, %v1971
      %1973 = vmatprep.mubr.bf16.mxu0 %v763
      %1974 = vmatmul.mubr.bf16.gmra.mrb[0].mxu0 %v762
      %v1975 = vpop.f32.mrb[0].mxu0
      %v1976 = vadd.f32 %v1783, %v1975
      %v1977 = vpop.f32.mrb[0].mxu0
      %v1978 = vadd.f32 %v1785, %v1977
      %v1979 = vpop.f32.mrb[0].mxu0
      %v1980 = vadd.f32 %v1787, %v1979
      %v1981 = vpop.f32.mrb[0].mxu0
      %v1982 = vadd.f32 %v1789, %v1981
      %1983 = vmatprep.mubr.bf16.mxu0 %v770
      %1984 = vmatmul.mubr.bf16.gmra.mrb[0].mxu0 %v769
      %v1985 = vpop.f32.mrb[0].mxu0
      %v1986 = vadd.f32 %v1793, %v1985
      %v1987 = vpop.f32.mrb[0].mxu0
      %v1988 = vadd.f32 %v1795, %v1987
      %v1989 = vpop.f32.mrb[0].mxu0
      %v1990 = vadd.f32 %v1797, %v1989
      %v1991 = vpop.f32.mrb[0].mxu0
      %v1992 = vadd.f32 %v1799, %v1991
      %1993 = vmatprep.mubr.bf16.mxu0 %v777
      %1994 = vmatmul.mubr.bf16.gmra.mrb[0].mxu0 %v776
      %v1995 = vpop.f32.mrb[0].mxu0
      %v1996 = vadd.f32 %v1803, %v1995
      %v1997 = vpop.f32.mrb[0].mxu0
      %v1998 = vadd.f32 %v1805, %v1997
      %v1999 = vpop.f32.mrb[0].mxu0
      %v2000 = vadd.f32 %v1807, %v1999
      %v2001 = vpop.f32.mrb[0].mxu0
      %v2002 = vadd.f32 %v1809, %v2001
      %2003 = vmatprep.mubr.bf16.mxu0 %v784
      %2004 = vmatmul.mubr.bf16.gmra.mrb[0].mxu0 %v783
      %v2005 = vpop.f32.mrb[0].mxu0
      %v2006 = vadd.f32 %v1813, %v2005
      %v2007 = vpop.f32.mrb[0].mxu0
      %v2008 = vadd.f32 %v1815, %v2007
      %v2009 = vpop.f32.mrb[0].mxu0
      %v2010 = vadd.f32 %v1817, %v2009
      %v2011 = vpop.f32.mrb[0].mxu0
      %v2012 = vadd.f32 %v1819, %v2011
      %2013 = vdwg.mxu0
      %2014 = vmatprep.subr.bf16.mxu0 %v1287
      %2015 = vmatpush1.bf16.msra.mxu0 %v1286
      %2016 = vmatprep.subr.bf16.mxu0 0
      %2017 = vmatpush1.bf16.msra.mxu0 0
      %2018 = vmatprep.subr.bf16.mxu0 0
      %2019 = vmatpush1.bf16.msra.mxu0 0
      %2020 = vmatprep.subr.bf16.mxu0 0
      %2021 = vmatpush1.bf16.msra.mxu0 0
      %2022 = vmatprep.subr.bf16.mxu0 0
      %2023 = vmatpush1.bf16.msra.mxu0 0
      %2024 = vmatprep.subr.bf16.mxu0 0
      %2025 = vmatpush1.bf16.msra.mxu0 0
      %2026 = vmatprep.subr.bf16.mxu0 0
      %2027 = vmatpush1.bf16.msra.mxu0 0
      %2028 = vmatprep.subr.bf16.mxu0 0
      %2029 = vmatpush1.bf16.msra.mxu0 0
      %2030 = vmatprep.subr.bf16.mxu0 0
      %2031 = vmatpush1.bf16.msra.mxu0 0
      %2032 = vmatprep.subr.bf16.mxu0 0
      %2033 = vmatpush1.bf16.msra.mxu0 0
      %2034 = vmatprep.subr.bf16.mxu0 0
      %2035 = vmatpush1.bf16.msra.mxu0 0
      %2036 = vmatprep.subr.bf16.mxu0 0
      %2037 = vmatpush1.bf16.msra.mxu0 0
      %2038 = vmatprep.subr.bf16.mxu0 0
      %2039 = vmatpush1.bf16.msra.mxu0 0
      %2040 = vmatprep.subr.bf16.mxu0 0
      %2041 = vmatpush1.bf16.msra.mxu0 0
      %2042 = vmatprep.subr.bf16.mxu0 0
      %2043 = vmatpush1.bf16.msra.mxu0 0
      %2044 = vmatprep.subr.bf16.mxu0 0
      %2045 = vmatpush1.bf16.msra.mxu0 0
      %2046 = vmatprep.mubr.bf16.mxu0 0
      %2047 = vmatmul.mubr.bf16.gmra.mrb[0].mxu0 %v1388
      %v2048 = vpop.f32.mrb[0].mxu0
      %v2049 = vadd.f32 %v1856, %v2048
      %v2050 = vpop.f32.mrb[0].mxu0
      %v2051 = vadd.f32 %v1858, %v2050
      %v2052 = vpop.f32.mrb[0].mxu0
      %v2053 = vadd.f32 %v1860, %v2052
      %v2054 = vpop.f32.mrb[0].mxu0
      %v2055 = vadd.f32 %v1862, %v2054
      %2056 = vmatprep.mubr.bf16.mxu0 0
      %2057 = vmatmul.mubr.bf16.gmra.mrb[0].mxu0 %v1391
      %v2058 = vpop.f32.mrb[0].mxu0
      %v2059 = vadd.f32 %v1866, %v2058
      %v2060 = vpop.f32.mrb[0].mxu0
      %v2061 = vadd.f32 %v1868, %v2060
      %v2062 = vpop.f32.mrb[0].mxu0
      %v2063 = vadd.f32 %v1870, %v2062
      %v2064 = vpop.f32.mrb[0].mxu0
      %v2065 = vadd.f32 %v1872, %v2064
      %2066 = vmatprep.mubr.bf16.mxu0 0
      %2067 = vmatmul.mubr.bf16.gmra.mrb[0].mxu0 %v1394
      %v2068 = vpop.f32.mrb[0].mxu0
      %v2069 = vadd.f32 %v1876, %v2068
      %v2070 = vpop.f32.mrb[0].mxu0
      %v2071 = vadd.f32 %v1878, %v2070
      %v2072 = vpop.f32.mrb[0].mxu0
      %v2073 = vadd.f32 %v1880, %v2072
      %v2074 = vpop.f32.mrb[0].mxu0
      %v2075 = vadd.f32 %v1882, %v2074
      %2076 = vmatprep.mubr.bf16.mxu0 0
      %2077 = vmatmul.mubr.bf16.gmra.mrb[0].mxu0 %v1397
      %v2078 = vpop.f32.mrb[0].mxu0
      %v2079 = vadd.f32 %v1886, %v2078
      %v2080 = vpop.f32.mrb[0].mxu0
      %v2081 = vadd.f32 %v1888, %v2080
      %v2082 = vpop.f32.mrb[0].mxu0
      %v2083 = vadd.f32 %v1890, %v2082
      %v2084 = vpop.f32.mrb[0].mxu0
      %v2085 = vadd.f32 %v1892, %v2084
      %2086 = vmatprep.mubr.bf16.mxu0 0
      %2087 = vmatmul.mubr.bf16.gmra.mrb[0].mxu0 %v1400
      %v2088 = vpop.f32.mrb[0].mxu0
      %v2089 = vadd.f32 %v1896, %v2088
      %v2090 = vpop.f32.mrb[0].mxu0
      %v2091 = vadd.f32 %v1898, %v2090
      %v2092 = vpop.f32.mrb[0].mxu0
      %v2093 = vadd.f32 %v1900, %v2092
      %v2094 = vpop.f32.mrb[0].mxu0
      %v2095 = vadd.f32 %v1902, %v2094
      %2096 = vmatprep.mubr.bf16.mxu0 0
      %2097 = vmatmul.mubr.bf16.gmra.mrb[0].mxu0 %v1403
      %v2098 = vpop.f32.mrb[0].mxu0
      %v2099 = vadd.f32 %v1906, %v2098
      %v2100 = vpop.f32.mrb[0].mxu0
      %v2101 = vadd.f32 %v1908, %v2100
      %v2102 = vpop.f32.mrb[0].mxu0
      %v2103 = vadd.f32 %v1910, %v2102
      %v2104 = vpop.f32.mrb[0].mxu0
      %v2105 = vadd.f32 %v1912, %v2104
      %2106 = vmatprep.mubr.bf16.mxu0 0
      %2107 = vmatmul.mubr.bf16.gmra.mrb[0].mxu0 %v1406
      %v2108 = vpop.f32.mrb[0].mxu0
      %v2109 = vadd.f32 %v1916, %v2108
      %v2110 = vpop.f32.mrb[0].mxu0
      %v2111 = vadd.f32 %v1918, %v2110
      %v2112 = vpop.f32.mrb[0].mxu0
      %v2113 = vadd.f32 %v1920, %v2112
      %v2114 = vpop.f32.mrb[0].mxu0
      %v2115 = vadd.f32 %v1922, %v2114
      %2116 = vmatprep.mubr.bf16.mxu0 0
      %2117 = vmatmul.mubr.bf16.gmra.mrb[0].mxu0 %v1409
      %v2118 = vpop.f32.mrb[0].mxu0
      %v2119 = vadd.f32 %v1926, %v2118
      %v2120 = vpop.f32.mrb[0].mxu0
      %v2121 = vadd.f32 %v1928, %v2120
      %v2122 = vpop.f32.mrb[0].mxu0
      %v2123 = vadd.f32 %v1930, %v2122
      %v2124 = vpop.f32.mrb[0].mxu0
      %v2125 = vadd.f32 %v1932, %v2124
      %2126 = vmatprep.mubr.bf16.mxu0 0
      %2127 = vmatmul.mubr.bf16.gmra.mrb[0].mxu0 %v1412
      %v2128 = vpop.f32.mrb[0].mxu0
      %v2129 = vadd.f32 %v1936, %v2128
      %v2130 = vpop.f32.mrb[0].mxu0
      %v2131 = vadd.f32 %v1938, %v2130
      %v2132 = vpop.f32.mrb[0].mxu0
      %v2133 = vadd.f32 %v1940, %v2132
      %v2134 = vpop.f32.mrb[0].mxu0
      %v2135 = vadd.f32 %v1942, %v2134
      %2136 = vmatprep.mubr.bf16.mxu0 0
      %2137 = vmatmul.mubr.bf16.gmra.mrb[0].mxu0 %v1415
      %v2138 = vpop.f32.mrb[0].mxu0
      %v2139 = vadd.f32 %v1946, %v2138
      %v2140 = vpop.f32.mrb[0].mxu0
      %v2141 = vadd.f32 %v1948, %v2140
      %v2142 = vpop.f32.mrb[0].mxu0
      %v2143 = vadd.f32 %v1950, %v2142
      %v2144 = vpop.f32.mrb[0].mxu0
      %v2145 = vadd.f32 %v1952, %v2144
      %2146 = vmatprep.mubr.bf16.mxu0 0
      %2147 = vmatmul.mubr.bf16.gmra.mrb[0].mxu0 %v1418
      %v2148 = vpop.f32.mrb[0].mxu0
      %v2149 = vadd.f32 %v1956, %v2148
      %v2150 = vpop.f32.mrb[0].mxu0
      %v2151 = vadd.f32 %v1958, %v2150
      %v2152 = vpop.f32.mrb[0].mxu0
      %v2153 = vadd.f32 %v1960, %v2152
      %v2154 = vpop.f32.mrb[0].mxu0
      %v2155 = vadd.f32 %v1962, %v2154
      %2156 = vmatprep.mubr.bf16.mxu0 0
      %2157 = vmatmul.mubr.bf16.gmra.mrb[0].mxu0 %v1421
      %v2158 = vpop.f32.mrb[0].mxu0
      %v2159 = vadd.f32 %v1966, %v2158
      %v2160 = vpop.f32.mrb[0].mxu0
      %v2161 = vadd.f32 %v1968, %v2160
      %v2162 = vpop.f32.mrb[0].mxu0
      %v2163 = vadd.f32 %v1970, %v2162
      %v2164 = vpop.f32.mrb[0].mxu0
      %v2165 = vadd.f32 %v1972, %v2164
      %2166 = vmatprep.mubr.bf16.mxu0 0
      %2167 = vmatmul.mubr.bf16.gmra.mrb[0].mxu0 %v1424
      %v2168 = vpop.f32.mrb[0].mxu0
      %v2169 = vadd.f32 %v1976, %v2168
      %v2170 = vpop.f32.mrb[0].mxu0
      %v2171 = vadd.f32 %v1978, %v2170
      %v2172 = vpop.f32.mrb[0].mxu0
      %v2173 = vadd.f32 %v1980, %v2172
      %v2174 = vpop.f32.mrb[0].mxu0
      %v2175 = vadd.f32 %v1982, %v2174
      %2176 = vmatprep.mubr.bf16.mxu0 0
      %2177 = vmatmul.mubr.bf16.gmra.mrb[0].mxu0 %v1427
      %v2178 = vpop.f32.mrb[0].mxu0
      %v2179 = vadd.f32 %v1986, %v2178
      %v2180 = vpop.f32.mrb[0].mxu0
      %v2181 = vadd.f32 %v1988, %v2180
      %v2182 = vpop.f32.mrb[0].mxu0
      %v2183 = vadd.f32 %v1990, %v2182
      %v2184 = vpop.f32.mrb[0].mxu0
      %v2185 = vadd.f32 %v1992, %v2184
      %2186 = vmatprep.mubr.bf16.mxu0 0
      %2187 = vmatmul.mubr.bf16.gmra.mrb[0].mxu0 %v1430
      %v2188 = vpop.f32.mrb[0].mxu0
      %v2189 = vadd.f32 %v1996, %v2188
      %v2190 = vpop.f32.mrb[0].mxu0
      %v2191 = vadd.f32 %v1998, %v2190
      %v2192 = vpop.f32.mrb[0].mxu0
      %v2193 = vadd.f32 %v2000, %v2192
      %v2194 = vpop.f32.mrb[0].mxu0
      %v2195 = vadd.f32 %v2002, %v2194
      %2196 = vmatprep.mubr.bf16.mxu0 0
      %2197 = vmatmul.mubr.bf16.gmra.mrb[0].mxu0 %v1433
      %v2198 = vpop.f32.mrb[0].mxu0
      %v2199 = vadd.f32 %v2006, %v2198
      %v2200 = vpop.f32.mrb[0].mxu0
      %v2201 = vadd.f32 %v2008, %v2200
      %v2202 = vpop.f32.mrb[0].mxu0
      %v2203 = vadd.f32 %v2010, %v2202
      %v2204 = vpop.f32.mrb[0].mxu0
      %v2205 = vadd.f32 %v2012, %v2204
      %2206 = vdwg.mxu0
      %v2207 = vmax.f32 %v2049, 0.0
      %v2208 = vmax.f32 %v2051, 0.0
      %v2209 = vmax.f32 %v2053, 0.0
      %v2210 = vmax.f32 %v2055, 0.0
      %v2211 = vmax.f32 %v2059, 0.0
      %v2212 = vmax.f32 %v2061, 0.0
      %v2213 = vmax.f32 %v2063, 0.0
      %v2214 = vmax.f32 %v2065, 0.0
      %v2215 = vmax.f32 %v2069, 0.0
      %v2216 = vmax.f32 %v2071, 0.0
      %v2217 = vmax.f32 %v2073, 0.0
      %v2218 = vmax.f32 %v2075, 0.0
      %v2219 = vmax.f32 %v2079, 0.0
      %v2220 = vmax.f32 %v2081, 0.0
      %v2221 = vmax.f32 %v2083, 0.0
      %v2222 = vmax.f32 %v2085, 0.0
      %v2223 = vmax.f32 %v2089, 0.0
      %v2224 = vmax.f32 %v2091, 0.0
      %v2225 = vmax.f32 %v2093, 0.0
      %v2226 = vmax.f32 %v2095, 0.0
      %v2227 = vmax.f32 %v2099, 0.0
      %v2228 = vmax.f32 %v2101, 0.0
      %v2229 = vmax.f32 %v2103, 0.0
      %v2230 = vmax.f32 %v2105, 0.0
      %v2231 = vmax.f32 %v2109, 0.0
      %v2232 = vmax.f32 %v2111, 0.0
      %v2233 = vmax.f32 %v2113, 0.0
      %v2234 = vmax.f32 %v2115, 0.0
      %v2235 = vmax.f32 %v2119, 0.0
      %v2236 = vmax.f32 %v2121, 0.0
      %v2237 = vmax.f32 %v2123, 0.0
      %v2238 = vmax.f32 %v2125, 0.0
      %v2239 = vmax.f32 %v2129, 0.0
      %v2240 = vmax.f32 %v2131, 0.0
      %v2241 = vmax.f32 %v2133, 0.0
      %v2242 = vmax.f32 %v2135, 0.0
      %v2243 = vmax.f32 %v2139, 0.0
      %v2244 = vmax.f32 %v2141, 0.0
      %v2245 = vmax.f32 %v2143, 0.0
      %v2246 = vmax.f32 %v2145, 0.0
      %v2247 = vmax.f32 %v2149, 0.0
      %v2248 = vmax.f32 %v2151, 0.0
      %v2249 = vmax.f32 %v2153, 0.0
      %v2250 = vmax.f32 %v2155, 0.0
      %v2251 = vmax.f32 %v2159, 0.0
      %v2252 = vmax.f32 %v2161, 0.0
      %v2253 = vmax.f32 %v2163, 0.0
      %v2254 = vmax.f32 %v2165, 0.0
      %v2255 = vmax.f32 %v2169, 0.0
      %v2256 = vmax.f32 %v2171, 0.0
      %v2257 = vmax.f32 %v2173, 0.0
      %v2258 = vmax.f32 %v2175, 0.0
      %v2259 = vmax.f32 %v2179, 0.0
      %v2260 = vmax.f32 %v2181, 0.0
      %v2261 = vmax.f32 %v2183, 0.0
      %v2262 = vmax.f32 %v2185, 0.0
      %v2263 = vmax.f32 %v2189, 0.0
      %v2264 = vmax.f32 %v2191, 0.0
      %v2265 = vmax.f32 %v2193, 0.0
      %v2266 = vmax.f32 %v2195, 0.0
      %v2267 = vmax.f32 %v2199, 0.0
      %v2268 = vmax.f32 %v2201, 0.0
      %v2269 = vmax.f32 %v2203, 0.0
      %v2270 = vmax.f32 %v2205, 0.0
      %v2271 = vpack.c.bf16 %v2209, %v2207
      %v2272 = vpack.c.bf16 %v2210, %v2208
      %v2273 = vpack.c.bf16 %v2213, %v2211
      %v2274 = vpack.c.bf16 %v2214, %v2212
      %v2275 = vpack.c.bf16 %v2217, %v2215
      %v2276 = vpack.c.bf16 %v2218, %v2216
      %v2277 = vpack.c.bf16 %v2221, %v2219
      %v2278 = vpack.c.bf16 %v2222, %v2220
      %v2279 = vpack.c.bf16 %v2225, %v2223
      %v2280 = vpack.c.bf16 %v2226, %v2224
      %v2281 = vpack.c.bf16 %v2229, %v2227
      %v2282 = vpack.c.bf16 %v2230, %v2228
      %v2283 = vpack.c.bf16 %v2233, %v2231
      %v2284 = vpack.c.bf16 %v2234, %v2232
      %v2285 = vpack.c.bf16 %v2237, %v2235
      %v2286 = vpack.c.bf16 %v2238, %v2236
      %v2287 = vpack.c.bf16 %v2241, %v2239
      %v2288 = vpack.c.bf16 %v2242, %v2240
      %v2289 = vpack.c.bf16 %v2245, %v2243
      %v2290 = vpack.c.bf16 %v2246, %v2244
      %v2291 = vpack.c.bf16 %v2249, %v2247
      %v2292 = vpack.c.bf16 %v2250, %v2248
      %v2293 = vpack.c.bf16 %v2253, %v2251
      %v2294 = vpack.c.bf16 %v2254, %v2252
      %v2295 = vpack.c.bf16 %v2257, %v2255
      %v2296 = vpack.c.bf16 %v2258, %v2256
      %v2297 = vpack.c.bf16 %v2261, %v2259
      %v2298 = vpack.c.bf16 %v2262, %v2260
      %v2299 = vpack.c.bf16 %v2265, %v2263
      %v2300 = vpack.c.bf16 %v2266, %v2264
      %v2301 = vpack.c.bf16 %v2269, %v2267
      %v2302 = vpack.c.bf16 %v2270, %v2268
      %v2303 = vld [vmem:[%s3] sm:$0xf]
      %v2304 = vld [vmem:[%s3 + $0x4] sm:$0xf]
      %v2305 = vld [vmem:[%s3 + $0x8] sm:$0xf]
      %v2306 = vld [vmem:[%s3 + $0xc] sm:$0xf]
      %v2307 = vld [vmem:[%s3 + $0x10] sm:$0xf]
      %v2308 = vld [vmem:[%s3 + $0x14] sm:$0xf]
      %v2309 = vld [vmem:[%s3 + $0x18] sm:$0xf]
      %v2310 = vld [vmem:[%s3 + $0x1c] sm:$0xf]
      %v2311 = vld [vmem:[%s3 + $0x20] sm:$0xf]
      %v2312 = vld [vmem:[%s3 + $0x24] sm:$0xf]
      %v2313 = vld [vmem:[%s3 + $0x28] sm:$0xf]
      %v2314 = vld [vmem:[%s3 + $0x2c] sm:$0xf]
      %v2315 = vld [vmem:[%s3 + $0x30] sm:$0xf]
      %v2316 = vld [vmem:[%s3 + $0x34] sm:$0xf]
      %v2317 = vld [vmem:[%s3 + $0x38] sm:$0xf]
      %v2318 = vld [vmem:[%s3 + $0x3c] sm:$0xf]
      %v2319 = vld [vmem:[%s3 + $0x40] sm:$0xf]
      %v2320 = vld [vmem:[%s3 + $0x44] sm:$0xf]
      %v2321 = vld [vmem:[%s3 + $0x48] sm:$0xf]
      %v2322 = vld [vmem:[%s3 + $0x4c] sm:$0xf]
      %v2323 = vld [vmem:[%s3 + $0x50] sm:$0xf]
      %v2324 = vld [vmem:[%s3 + $0x54] sm:$0xf]
      %v2325 = vld [vmem:[%s3 + $0x58] sm:$0xf]
      %v2326 = vld [vmem:[%s3 + $0x5c] sm:$0xf]
      %v2327 = vld [vmem:[%s3 + $0x60] sm:$0xf]
      %v2328 = vld [vmem:[%s3 + $0x64] sm:$0xf]
      %v2329 = vld [vmem:[%s3 + $0x68] sm:$0xf]
      %v2330 = vld [vmem:[%s3 + $0x6c] sm:$0xf]
      %v2331 = vld [vmem:[%s3 + $0x70] sm:$0xf]
      %v2332 = vld [vmem:[%s3 + $0x74] sm:$0xf]
      %v2333 = vld [vmem:[%s3 + $0x78] sm:$0xf]
      %v2334 = vld [vmem:[%s3 + $0x7c] sm:$0xf]
      %v2335 = vld [vmem:[%s4] sm:$0x1]
      %v2337 = vlaneseq
      %v2338 = vshrl.u32 %v2337, 7
      %v2339 = vsub.s32 0, %v2338
      %v2340 = vrot.slane %v2335, %v2339
      %v2374 = vunpack.c.l.b16 %v2303
      %v2375 = vunpack.c.l.b16 %v2304
      %v2376 = vunpack.c.l.b16 %v2305
      %v2377 = vunpack.c.l.b16 %v2306
      %v2378 = vunpack.c.l.b16 %v2307
      %v2379 = vunpack.c.l.b16 %v2308
      %v2380 = vunpack.c.l.b16 %v2309
      %v2381 = vunpack.c.l.b16 %v2310
      %v2382 = vunpack.c.l.b16 %v2311
      %v2383 = vunpack.c.l.b16 %v2312
      %v2384 = vunpack.c.l.b16 %v2313
      %v2385 = vunpack.c.l.b16 %v2314
      %v2386 = vunpack.c.l.b16 %v2315
      %v2387 = vunpack.c.l.b16 %v2316
      %v2388 = vunpack.c.l.b16 %v2317
      %v2389 = vunpack.c.l.b16 %v2318
      %v2390 = vunpack.c.l.b16 %v2319
      %v2391 = vunpack.c.l.b16 %v2320
      %v2392 = vunpack.c.l.b16 %v2321
      %v2393 = vunpack.c.l.b16 %v2322
      %v2394 = vunpack.c.l.b16 %v2323
      %v2395 = vunpack.c.l.b16 %v2324
      %v2396 = vunpack.c.l.b16 %v2325
      %v2397 = vunpack.c.l.b16 %v2326
      %v2398 = vunpack.c.l.b16 %v2327
      %v2399 = vunpack.c.l.b16 %v2328
      %v2400 = vunpack.c.l.b16 %v2329
      %v2401 = vunpack.c.l.b16 %v2330
      %v2402 = vunpack.c.l.b16 %v2331
      %v2403 = vunpack.c.l.b16 %v2332
      %v2404 = vunpack.c.l.b16 %v2333
      %v2405 = vunpack.c.l.b16 %v2334
      %v2406 = vpack.c.b16 %v2375, %v2374
      %v2407 = vpack.c.b16 %v2377, %v2376
      %v2408 = vpack.c.b16 %v2379, %v2378
      %v2409 = vpack.c.b16 %v2381, %v2380
      %v2410 = vpack.c.b16 %v2383, %v2382
      %v2411 = vpack.c.b16 %v2385, %v2384
      %v2412 = vpack.c.b16 %v2387, %v2386
      %v2413 = vpack.c.b16 %v2389, %v2388
      %v2414 = vpack.c.b16 %v2391, %v2390
      %v2415 = vpack.c.b16 %v2393, %v2392
      %v2416 = vpack.c.b16 %v2395, %v2394
      %v2417 = vpack.c.b16 %v2397, %v2396
      %v2418 = vpack.c.b16 %v2399, %v2398
      %v2419 = vpack.c.b16 %v2401, %v2400
      %v2420 = vpack.c.b16 %v2403, %v2402
      %v2421 = vpack.c.b16 %v2405, %v2404
      %2438 = vmatprep.subr.bf16.mxu0 0
      %2439 = vmatpush1.bf16.msra.mxu0 %v2406
      %2440 = vmatprep.subr.bf16.mxu0 0
      %2441 = vmatpush1.bf16.msra.mxu0 %v2407
      %2442 = vmatprep.subr.bf16.mxu0 0
      %2443 = vmatpush1.bf16.msra.mxu0 %v2408
      %2444 = vmatprep.subr.bf16.mxu0 0
      %2445 = vmatpush1.bf16.msra.mxu0 %v2409
      %2446 = vmatprep.subr.bf16.mxu0 0
      %2447 = vmatpush1.bf16.msra.mxu0 %v2410
      %2448 = vmatprep.subr.bf16.mxu0 0
      %2449 = vmatpush1.bf16.msra.mxu0 %v2411
      %2450 = vmatprep.subr.bf16.mxu0 0
      %2451 = vmatpush1.bf16.msra.mxu0 %v2412
      %2452 = vmatprep.subr.bf16.mxu0 0
      %2453 = vmatpush1.bf16.msra.mxu0 %v2413
      %2454 = vmatprep.subr.bf16.mxu0 0
      %2455 = vmatpush1.bf16.msra.mxu0 %v2414
      %2456 = vmatprep.subr.bf16.mxu0 0
      %2457 = vmatpush1.bf16.msra.mxu0 %v2415
      %2458 = vmatprep.subr.bf16.mxu0 0
      %2459 = vmatpush1.bf16.msra.mxu0 %v2416
      %2460 = vmatprep.subr.bf16.mxu0 0
      %2461 = vmatpush1.bf16.msra.mxu0 %v2417
      %2462 = vmatprep.subr.bf16.mxu0 0
      %2463 = vmatpush1.bf16.msra.mxu0 %v2418
      %2464 = vmatprep.subr.bf16.mxu0 0
      %2465 = vmatpush1.bf16.msra.mxu0 %v2419
      %2466 = vmatprep.subr.bf16.mxu0 0
      %2467 = vmatpush1.bf16.msra.mxu0 %v2420
      %2468 = vmatprep.subr.bf16.mxu0 0
      %2469 = vmatpush1.bf16.msra.mxu0 %v2421
      %2470 = vmatprep.mubr.bf16.mxu0 %v2272
      %2471 = vmatmul.mubr.bf16.gmra.mrb[0].mxu0 %v2271
      %v2472 = vpop.f32.mrb[0].mxu0
      %v2473 = vadd.f32 %v2340, %v2472
      %v2474 = vpop.f32.mrb[0].mxu0
      %v2475 = vpop.f32.mrb[0].mxu0
      %v2476 = vadd.f32 %v2340, %v2475
      %v2477 = vpop.f32.mrb[0].mxu0
      %2478 = vmatprep.mubr.bf16.mxu0 %v2274
      %2479 = vmatmul.mubr.bf16.gmra.mrb[0].mxu0 %v2273
      %v2480 = vpop.f32.mrb[0].mxu0
      %v2481 = vadd.f32 %v2340, %v2480
      %v2482 = vpop.f32.mrb[0].mxu0
      %v2483 = vpop.f32.mrb[0].mxu0
      %v2484 = vadd.f32 %v2340, %v2483
      %v2485 = vpop.f32.mrb[0].mxu0
      %2486 = vmatprep.mubr.bf16.mxu0 %v2276
      %2487 = vmatmul.mubr.bf16.gmra.mrb[0].mxu0 %v2275
      %v2488 = vpop.f32.mrb[0].mxu0
      %v2489 = vadd.f32 %v2340, %v2488
      %v2490 = vpop.f32.mrb[0].mxu0
      %v2491 = vpop.f32.mrb[0].mxu0
      %v2492 = vadd.f32 %v2340, %v2491
      %v2493 = vpop.f32.mrb[0].mxu0
      %2494 = vmatprep.mubr.bf16.mxu0 %v2278
      %2495 = vmatmul.mubr.bf16.gmra.mrb[0].mxu0 %v2277
      %v2496 = vpop.f32.mrb[0].mxu0
      %v2497 = vadd.f32 %v2340, %v2496
      %v2498 = vpop.f32.mrb[0].mxu0
      %v2499 = vpop.f32.mrb[0].mxu0
      %v2500 = vadd.f32 %v2340, %v2499
      %v2501 = vpop.f32.mrb[0].mxu0
      %2502 = vmatprep.mubr.bf16.mxu0 %v2280
      %2503 = vmatmul.mubr.bf16.gmra.mrb[0].mxu0 %v2279
      %v2504 = vpop.f32.mrb[0].mxu0
      %v2505 = vadd.f32 %v2340, %v2504
      %v2506 = vpop.f32.mrb[0].mxu0
      %v2507 = vpop.f32.mrb[0].mxu0
      %v2508 = vadd.f32 %v2340, %v2507
      %v2509 = vpop.f32.mrb[0].mxu0
      %2510 = vmatprep.mubr.bf16.mxu0 %v2282
      %2511 = vmatmul.mubr.bf16.gmra.mrb[0].mxu0 %v2281
      %v2512 = vpop.f32.mrb[0].mxu0
      %v2513 = vadd.f32 %v2340, %v2512
      %v2514 = vpop.f32.mrb[0].mxu0
      %v2515 = vpop.f32.mrb[0].mxu0
      %v2516 = vadd.f32 %v2340, %v2515
      %v2517 = vpop.f32.mrb[0].mxu0
      %2518 = vmatprep.mubr.bf16.mxu0 %v2284
      %2519 = vmatmul.mubr.bf16.gmra.mrb[0].mxu0 %v2283
      %v2520 = vpop.f32.mrb[0].mxu0
      %v2521 = vadd.f32 %v2340, %v2520
      %v2522 = vpop.f32.mrb[0].mxu0
      %v2523 = vpop.f32.mrb[0].mxu0
      %v2524 = vadd.f32 %v2340, %v2523
      %v2525 = vpop.f32.mrb[0].mxu0
      %2526 = vmatprep.mubr.bf16.mxu0 %v2286
      %2527 = vmatmul.mubr.bf16.gmra.mrb[0].mxu0 %v2285
      %v2528 = vpop.f32.mrb[0].mxu0
      %v2529 = vadd.f32 %v2340, %v2528
      %v2530 = vpop.f32.mrb[0].mxu0
      %v2531 = vpop.f32.mrb[0].mxu0
      %v2532 = vadd.f32 %v2340, %v2531
      %v2533 = vpop.f32.mrb[0].mxu0
      %2534 = vmatprep.mubr.bf16.mxu0 %v2288
      %2535 = vmatmul.mubr.bf16.gmra.mrb[0].mxu0 %v2287
      %v2536 = vpop.f32.mrb[0].mxu0
      %v2537 = vadd.f32 %v2340, %v2536
      %v2538 = vpop.f32.mrb[0].mxu0
      %v2539 = vpop.f32.mrb[0].mxu0
      %v2540 = vadd.f32 %v2340, %v2539
      %v2541 = vpop.f32.mrb[0].mxu0
      %2542 = vmatprep.mubr.bf16.mxu0 %v2290
      %2543 = vmatmul.mubr.bf16.gmra.mrb[0].mxu0 %v2289
      %v2544 = vpop.f32.mrb[0].mxu0
      %v2545 = vadd.f32 %v2340, %v2544
      %v2546 = vpop.f32.mrb[0].mxu0
      %v2547 = vpop.f32.mrb[0].mxu0
      %v2548 = vadd.f32 %v2340, %v2547
      %v2549 = vpop.f32.mrb[0].mxu0
      %2550 = vmatprep.mubr.bf16.mxu0 %v2292
      %2551 = vmatmul.mubr.bf16.gmra.mrb[0].mxu0 %v2291
      %v2552 = vpop.f32.mrb[0].mxu0
      %v2553 = vadd.f32 %v2340, %v2552
      %v2554 = vpop.f32.mrb[0].mxu0
      %v2555 = vpop.f32.mrb[0].mxu0
      %v2556 = vadd.f32 %v2340, %v2555
      %v2557 = vpop.f32.mrb[0].mxu0
      %2558 = vmatprep.mubr.bf16.mxu0 %v2294
      %2559 = vmatmul.mubr.bf16.gmra.mrb[0].mxu0 %v2293
      %v2560 = vpop.f32.mrb[0].mxu0
      %v2561 = vadd.f32 %v2340, %v2560
      %v2562 = vpop.f32.mrb[0].mxu0
      %v2563 = vpop.f32.mrb[0].mxu0
      %v2564 = vadd.f32 %v2340, %v2563
      %v2565 = vpop.f32.mrb[0].mxu0
      %2566 = vmatprep.mubr.bf16.mxu0 %v2296
      %2567 = vmatmul.mubr.bf16.gmra.mrb[0].mxu0 %v2295
      %v2568 = vpop.f32.mrb[0].mxu0
      %v2569 = vadd.f32 %v2340, %v2568
      %v2570 = vpop.f32.mrb[0].mxu0
      %v2571 = vpop.f32.mrb[0].mxu0
      %v2572 = vadd.f32 %v2340, %v2571
      %v2573 = vpop.f32.mrb[0].mxu0
      %2574 = vmatprep.mubr.bf16.mxu0 %v2298
      %2575 = vmatmul.mubr.bf16.gmra.mrb[0].mxu0 %v2297
      %v2576 = vpop.f32.mrb[0].mxu0
      %v2577 = vadd.f32 %v2340, %v2576
      %v2578 = vpop.f32.mrb[0].mxu0
      %v2579 = vpop.f32.mrb[0].mxu0
      %v2580 = vadd.f32 %v2340, %v2579
      %v2581 = vpop.f32.mrb[0].mxu0
      %2582 = vmatprep.mubr.bf16.mxu0 %v2300
      %2583 = vmatmul.mubr.bf16.gmra.mrb[0].mxu0 %v2299
      %v2584 = vpop.f32.mrb[0].mxu0
      %v2585 = vadd.f32 %v2340, %v2584
      %v2586 = vpop.f32.mrb[0].mxu0
      %v2587 = vpop.f32.mrb[0].mxu0
      %v2588 = vadd.f32 %v2340, %v2587
      %v2589 = vpop.f32.mrb[0].mxu0
      %2590 = vmatprep.mubr.bf16.mxu0 %v2302
      %2591 = vmatmul.mubr.bf16.gmra.mrb[0].mxu0 %v2301
      %v2592 = vpop.f32.mrb[0].mxu0
      %v2593 = vadd.f32 %v2340, %v2592
      %v2594 = vpop.f32.mrb[0].mxu0
      %v2595 = vpop.f32.mrb[0].mxu0
      %v2596 = vadd.f32 %v2340, %v2595
      %v2597 = vpop.f32.mrb[0].mxu0
      %2598 = vdwg.mxu0
      %v2599 = vmax.f32 %v2473, 0.0
      %v2600 = vmax.f32 %v2476, 0.0
      %v2601 = vmax.f32 %v2481, 0.0
      %v2602 = vmax.f32 %v2484, 0.0
      %v2603 = vmax.f32 %v2489, 0.0
      %v2604 = vmax.f32 %v2492, 0.0
      %v2605 = vmax.f32 %v2497, 0.0
      %v2606 = vmax.f32 %v2500, 0.0
      %v2607 = vmax.f32 %v2505, 0.0
      %v2608 = vmax.f32 %v2508, 0.0
      %v2609 = vmax.f32 %v2513, 0.0
      %v2610 = vmax.f32 %v2516, 0.0
      %v2611 = vmax.f32 %v2521, 0.0
      %v2612 = vmax.f32 %v2524, 0.0
      %v2613 = vmax.f32 %v2529, 0.0
      %v2614 = vmax.f32 %v2532, 0.0
      %v2615 = vmax.f32 %v2537, 0.0
      %v2616 = vmax.f32 %v2540, 0.0
      %v2617 = vmax.f32 %v2545, 0.0
      %v2618 = vmax.f32 %v2548, 0.0
      %v2619 = vmax.f32 %v2553, 0.0
      %v2620 = vmax.f32 %v2556, 0.0
      %v2621 = vmax.f32 %v2561, 0.0
      %v2622 = vmax.f32 %v2564, 0.0
      %v2623 = vmax.f32 %v2569, 0.0
      %v2624 = vmax.f32 %v2572, 0.0
      %v2625 = vmax.f32 %v2577, 0.0
      %v2626 = vmax.f32 %v2580, 0.0
      %v2627 = vmax.f32 %v2585, 0.0
      %v2628 = vmax.f32 %v2588, 0.0
      %v2629 = vmax.f32 %v2593, 0.0
      %v2630 = vmax.f32 %v2596, 0.0
      %v2631 = vpack.c.bf16 %v2600, %v2599
      %v2632 = vpack.c.bf16 %v2602, %v2601
      %v2633 = vpack.c.bf16 %v2604, %v2603
      %v2634 = vpack.c.bf16 %v2606, %v2605
      %v2635 = vpack.c.bf16 %v2608, %v2607
      %v2636 = vpack.c.bf16 %v2610, %v2609
      %v2637 = vpack.c.bf16 %v2612, %v2611
      %v2638 = vpack.c.bf16 %v2614, %v2613
      %v2639 = vpack.c.bf16 %v2616, %v2615
      %v2640 = vpack.c.bf16 %v2618, %v2617
      %v2641 = vpack.c.bf16 %v2620, %v2619
      %v2642 = vpack.c.bf16 %v2622, %v2621
      %v2643 = vpack.c.bf16 %v2624, %v2623
      %v2644 = vpack.c.bf16 %v2626, %v2625
      %v2645 = vpack.c.bf16 %v2628, %v2627
      %v2646 = vpack.c.bf16 %v2630, %v2629
      %v2647 = vld [vmem:[%s5] sm:$0xf]
      %v2648 = vld [vmem:[%s5 + $0x4] sm:$0xf]
      %v2649 = vld [vmem:[%s5 + $0x8] sm:$0xf]
      %v2650 = vld [vmem:[%s5 + $0xc] sm:$0xf]
      %v2651 = vld [vmem:[%s5 + $0x10] sm:$0xf]
      %v2652 = vld [vmem:[%s5 + $0x14] sm:$0xf]
      %v2653 = vld [vmem:[%s5 + $0x18] sm:$0xf]
      %v2654 = vld [vmem:[%s5 + $0x1c] sm:$0xf]
      %v2655 = vld [vmem:[%s5 + $0x20] sm:$0xf]
      %v2656 = vld [vmem:[%s5 + $0x24] sm:$0xf]
      %v2657 = vld [vmem:[%s5 + $0x28] sm:$0xf]
      %v2658 = vld [vmem:[%s5 + $0x2c] sm:$0xf]
      %v2659 = vld [vmem:[%s5 + $0x30] sm:$0xf]
      %v2660 = vld [vmem:[%s5 + $0x34] sm:$0xf]
      %v2661 = vld [vmem:[%s5 + $0x38] sm:$0xf]
      %v2662 = vld [vmem:[%s5 + $0x3c] sm:$0xf]
      %v2663 = vld [vmem:[%s6] sm:$0x1]
      %v2665 = vlaneseq
      %v2666 = vshrl.u32 %v2665, 7
      %v2667 = vsub.s32 0, %v2666
      %v2668 = vrot.slane %v2663, %v2667
      %v2686 = vunpack.c.l.b16 %v2647
      %v2687 = vunpack.c.l.b16 %v2648
      %v2688 = vunpack.c.l.b16 %v2649
      %v2689 = vunpack.c.l.b16 %v2650
      %v2690 = vunpack.c.l.b16 %v2651
      %v2691 = vunpack.c.l.b16 %v2652
      %v2692 = vunpack.c.l.b16 %v2653
      %v2693 = vunpack.c.l.b16 %v2654
      %v2694 = vunpack.c.l.b16 %v2655
      %v2695 = vunpack.c.l.b16 %v2656
      %v2696 = vunpack.c.l.b16 %v2657
      %v2697 = vunpack.c.l.b16 %v2658
      %v2698 = vunpack.c.l.b16 %v2659
      %v2699 = vunpack.c.l.b16 %v2660
      %v2700 = vunpack.c.l.b16 %v2661
      %v2701 = vunpack.c.l.b16 %v2662
      %v2702 = vpack.c.b16 %v2687, %v2686
      %v2703 = vpack.c.b16 %v2689, %v2688
      %v2704 = vpack.c.b16 %v2691, %v2690
      %v2705 = vpack.c.b16 %v2693, %v2692
      %v2706 = vpack.c.b16 %v2695, %v2694
      %v2707 = vpack.c.b16 %v2697, %v2696
      %v2708 = vpack.c.b16 %v2699, %v2698
      %v2709 = vpack.c.b16 %v2701, %v2700
      %2718 = vmatprep.subr.bf16.mxu0 0
      %2719 = vmatpush1.bf16.msra.mxu0 %v2702
      %2720 = vmatprep.subr.bf16.mxu0 0
      %2721 = vmatpush1.bf16.msra.mxu0 %v2703
      %2722 = vmatprep.subr.bf16.mxu0 0
      %2723 = vmatpush1.bf16.msra.mxu0 %v2704
      %2724 = vmatprep.subr.bf16.mxu0 0
      %2725 = vmatpush1.bf16.msra.mxu0 %v2705
      %2726 = vmatprep.subr.bf16.mxu0 0
      %2727 = vmatpush1.bf16.msra.mxu0 %v2706
      %2728 = vmatprep.subr.bf16.mxu0 0
      %2729 = vmatpush1.bf16.msra.mxu0 %v2707
      %2730 = vmatprep.subr.bf16.mxu0 0
      %2731 = vmatpush1.bf16.msra.mxu0 %v2708
      %2732 = vmatprep.subr.bf16.mxu0 0
      %2733 = vmatpush1.bf16.msra.mxu0 %v2709
      %2734 = vmatprep.subr.bf16.mxu0 0
      %2735 = vmatpush1.bf16.msra.mxu0 0
      %2736 = vmatprep.subr.bf16.mxu0 0
      %2737 = vmatpush1.bf16.msra.mxu0 0
      %2738 = vmatprep.subr.bf16.mxu0 0
      %2739 = vmatpush1.bf16.msra.mxu0 0
      %2740 = vmatprep.subr.bf16.mxu0 0
      %2741 = vmatpush1.bf16.msra.mxu0 0
      %2742 = vmatprep.subr.bf16.mxu0 0
      %2743 = vmatpush1.bf16.msra.mxu0 0
      %2744 = vmatprep.subr.bf16.mxu0 0
      %2745 = vmatpush1.bf16.msra.mxu0 0
      %2746 = vmatprep.subr.bf16.mxu0 0
      %2747 = vmatpush1.bf16.msra.mxu0 0
      %2748 = vmatprep.subr.bf16.mxu0 0
      %2749 = vmatpush1.bf16.msra.mxu0 0
      %2750 = vmatprep.mubr.bf16.mxu0 0
      %2751 = vmatmul.mubr.bf16.gmra.mrb[0].mxu0 %v2631
      %v2752 = vpop.f32.mrb[0].mxu0
      %v2753 = vadd.f32 %v2668, %v2752
      %v2754 = vpop.f32.mrb[0].mxu0
      %v2755 = vpop.f32.mrb[0].mxu0
      %v2756 = vadd.f32 %v2668, %v2755
      %v2757 = vpop.f32.mrb[0].mxu0
      %2758 = vmatprep.mubr.bf16.mxu0 0
      %2759 = vmatmul.mubr.bf16.gmra.mrb[0].mxu0 %v2632
      %v2760 = vpop.f32.mrb[0].mxu0
      %v2761 = vadd.f32 %v2668, %v2760
      %v2762 = vpop.f32.mrb[0].mxu0
      %v2763 = vpop.f32.mrb[0].mxu0
      %v2764 = vadd.f32 %v2668, %v2763
      %v2765 = vpop.f32.mrb[0].mxu0
      %2766 = vmatprep.mubr.bf16.mxu0 0
      %2767 = vmatmul.mubr.bf16.gmra.mrb[0].mxu0 %v2633
      %v2768 = vpop.f32.mrb[0].mxu0
      %v2769 = vadd.f32 %v2668, %v2768
      %v2770 = vpop.f32.mrb[0].mxu0
      %v2771 = vpop.f32.mrb[0].mxu0
      %v2772 = vadd.f32 %v2668, %v2771
      %v2773 = vpop.f32.mrb[0].mxu0
      %2774 = vmatprep.mubr.bf16.mxu0 0
      %2775 = vmatmul.mubr.bf16.gmra.mrb[0].mxu0 %v2634
      %v2776 = vpop.f32.mrb[0].mxu0
      %v2777 = vadd.f32 %v2668, %v2776
      %v2778 = vpop.f32.mrb[0].mxu0
      %v2779 = vpop.f32.mrb[0].mxu0
      %v2780 = vadd.f32 %v2668, %v2779
      %v2781 = vpop.f32.mrb[0].mxu0
      %2782 = vmatprep.mubr.bf16.mxu0 0
      %2783 = vmatmul.mubr.bf16.gmra.mrb[0].mxu0 %v2635
      %v2784 = vpop.f32.mrb[0].mxu0
      %v2785 = vadd.f32 %v2668, %v2784
      %v2786 = vpop.f32.mrb[0].mxu0
      %v2787 = vpop.f32.mrb[0].mxu0
      %v2788 = vadd.f32 %v2668, %v2787
      %v2789 = vpop.f32.mrb[0].mxu0
      %2790 = vmatprep.mubr.bf16.mxu0 0
      %2791 = vmatmul.mubr.bf16.gmra.mrb[0].mxu0 %v2636
      %v2792 = vpop.f32.mrb[0].mxu0
      %v2793 = vadd.f32 %v2668, %v2792
      %v2794 = vpop.f32.mrb[0].mxu0
      %v2795 = vpop.f32.mrb[0].mxu0
      %v2796 = vadd.f32 %v2668, %v2795
      %v2797 = vpop.f32.mrb[0].mxu0
      %2798 = vmatprep.mubr.bf16.mxu0 0
      %2799 = vmatmul.mubr.bf16.gmra.mrb[0].mxu0 %v2637
      %v2800 = vpop.f32.mrb[0].mxu0
      %v2801 = vadd.f32 %v2668, %v2800
      %v2802 = vpop.f32.mrb[0].mxu0
      %v2803 = vpop.f32.mrb[0].mxu0
      %v2804 = vadd.f32 %v2668, %v2803
      %v2805 = vpop.f32.mrb[0].mxu0
      %2806 = vmatprep.mubr.bf16.mxu0 0
      %2807 = vmatmul.mubr.bf16.gmra.mrb[0].mxu0 %v2638
      %v2808 = vpop.f32.mrb[0].mxu0
      %v2809 = vadd.f32 %v2668, %v2808
      %v2810 = vpop.f32.mrb[0].mxu0
      %v2811 = vpop.f32.mrb[0].mxu0
      %v2812 = vadd.f32 %v2668, %v2811
      %v2813 = vpop.f32.mrb[0].mxu0
      %2814 = vmatprep.mubr.bf16.mxu0 0
      %2815 = vmatmul.mubr.bf16.gmra.mrb[0].mxu0 %v2639
      %v2816 = vpop.f32.mrb[0].mxu0
      %v2817 = vadd.f32 %v2668, %v2816
      %v2818 = vpop.f32.mrb[0].mxu0
      %v2819 = vpop.f32.mrb[0].mxu0
      %v2820 = vadd.f32 %v2668, %v2819
      %v2821 = vpop.f32.mrb[0].mxu0
      %2822 = vmatprep.mubr.bf16.mxu0 0
      %2823 = vmatmul.mubr.bf16.gmra.mrb[0].mxu0 %v2640
      %v2824 = vpop.f32.mrb[0].mxu0
      %v2825 = vadd.f32 %v2668, %v2824
      %v2826 = vpop.f32.mrb[0].mxu0
      %v2827 = vpop.f32.mrb[0].mxu0
      %v2828 = vadd.f32 %v2668, %v2827
      %v2829 = vpop.f32.mrb[0].mxu0
      %2830 = vmatprep.mubr.bf16.mxu0 0
      %2831 = vmatmul.mubr.bf16.gmra.mrb[0].mxu0 %v2641
      %v2832 = vpop.f32.mrb[0].mxu0
      %v2833 = vadd.f32 %v2668, %v2832
      %v2834 = vpop.f32.mrb[0].mxu0
      %v2835 = vpop.f32.mrb[0].mxu0
      %v2836 = vadd.f32 %v2668, %v2835
      %v2837 = vpop.f32.mrb[0].mxu0
      %2838 = vmatprep.mubr.bf16.mxu0 0
      %2839 = vmatmul.mubr.bf16.gmra.mrb[0].mxu0 %v2642
      %v2840 = vpop.f32.mrb[0].mxu0
      %v2841 = vadd.f32 %v2668, %v2840
      %v2842 = vpop.f32.mrb[0].mxu0
      %v2843 = vpop.f32.mrb[0].mxu0
      %v2844 = vadd.f32 %v2668, %v2843
      %v2845 = vpop.f32.mrb[0].mxu0
      %2846 = vmatprep.mubr.bf16.mxu0 0
      %2847 = vmatmul.mubr.bf16.gmra.mrb[0].mxu0 %v2643
      %v2848 = vpop.f32.mrb[0].mxu0
      %v2849 = vadd.f32 %v2668, %v2848
      %v2850 = vpop.f32.mrb[0].mxu0
      %v2851 = vpop.f32.mrb[0].mxu0
      %v2852 = vadd.f32 %v2668, %v2851
      %v2853 = vpop.f32.mrb[0].mxu0
      %2854 = vmatprep.mubr.bf16.mxu0 0
      %2855 = vmatmul.mubr.bf16.gmra.mrb[0].mxu0 %v2644
      %v2856 = vpop.f32.mrb[0].mxu0
      %v2857 = vadd.f32 %v2668, %v2856
      %v2858 = vpop.f32.mrb[0].mxu0
      %v2859 = vpop.f32.mrb[0].mxu0
      %v2860 = vadd.f32 %v2668, %v2859
      %v2861 = vpop.f32.mrb[0].mxu0
      %2862 = vmatprep.mubr.bf16.mxu0 0
      %2863 = vmatmul.mubr.bf16.gmra.mrb[0].mxu0 %v2645
      %v2864 = vpop.f32.mrb[0].mxu0
      %v2865 = vadd.f32 %v2668, %v2864
      %v2866 = vpop.f32.mrb[0].mxu0
      %v2867 = vpop.f32.mrb[0].mxu0
      %v2868 = vadd.f32 %v2668, %v2867
      %v2869 = vpop.f32.mrb[0].mxu0
      %2870 = vmatprep.mubr.bf16.mxu0 0
      %2871 = vmatmul.mubr.bf16.gmra.mrb[0].mxu0 %v2646
      %v2872 = vpop.f32.mrb[0].mxu0
      %v2873 = vadd.f32 %v2668, %v2872
      %v2874 = vpop.f32.mrb[0].mxu0
      %v2875 = vpop.f32.mrb[0].mxu0
      %v2876 = vadd.f32 %v2668, %v2875
      %v2877 = vpop.f32.mrb[0].mxu0
      %2878 = vdwg.mxu0
      %v2879 = vmax.f32 %v2753, 0.0
      %v2880 = vmax.f32 %v2756, 0.0
      %v2881 = vmax.f32 %v2761, 0.0
      %v2882 = vmax.f32 %v2764, 0.0
      %v2883 = vmax.f32 %v2769, 0.0
      %v2884 = vmax.f32 %v2772, 0.0
      %v2885 = vmax.f32 %v2777, 0.0
      %v2886 = vmax.f32 %v2780, 0.0
      %v2887 = vmax.f32 %v2785, 0.0
      %v2888 = vmax.f32 %v2788, 0.0
      %v2889 = vmax.f32 %v2793, 0.0
      %v2890 = vmax.f32 %v2796, 0.0
      %v2891 = vmax.f32 %v2801, 0.0
      %v2892 = vmax.f32 %v2804, 0.0
      %v2893 = vmax.f32 %v2809, 0.0
      %v2894 = vmax.f32 %v2812, 0.0
      %v2895 = vmax.f32 %v2817, 0.0
      %v2896 = vmax.f32 %v2820, 0.0
      %v2897 = vmax.f32 %v2825, 0.0
      %v2898 = vmax.f32 %v2828, 0.0
      %v2899 = vmax.f32 %v2833, 0.0
      %v2900 = vmax.f32 %v2836, 0.0
      %v2901 = vmax.f32 %v2841, 0.0
      %v2902 = vmax.f32 %v2844, 0.0
      %v2903 = vmax.f32 %v2849, 0.0
      %v2904 = vmax.f32 %v2852, 0.0
      %v2905 = vmax.f32 %v2857, 0.0
      %v2906 = vmax.f32 %v2860, 0.0
      %v2907 = vmax.f32 %v2865, 0.0
      %v2908 = vmax.f32 %v2868, 0.0
      %v2909 = vmax.f32 %v2873, 0.0
      %v2910 = vmax.f32 %v2876, 0.0
      %v2911 = vpack.c.bf16 %v2880, %v2879
      %v2912 = vpack.c.bf16 %v2882, %v2881
      %v2913 = vpack.c.bf16 %v2884, %v2883
      %v2914 = vpack.c.bf16 %v2886, %v2885
      %v2915 = vpack.c.bf16 %v2888, %v2887
      %v2916 = vpack.c.bf16 %v2890, %v2889
      %v2917 = vpack.c.bf16 %v2892, %v2891
      %v2918 = vpack.c.bf16 %v2894, %v2893
      %v2919 = vpack.c.bf16 %v2896, %v2895
      %v2920 = vpack.c.bf16 %v2898, %v2897
      %v2921 = vpack.c.bf16 %v2900, %v2899
      %v2922 = vpack.c.bf16 %v2902, %v2901
      %v2923 = vpack.c.bf16 %v2904, %v2903
      %v2924 = vpack.c.bf16 %v2906, %v2905
      %v2925 = vpack.c.bf16 %v2908, %v2907
      %v2926 = vpack.c.bf16 %v2910, %v2909
      %v2927 = vld [vmem:[%s7] sm:$0xf]
      %v2928 = vld [vmem:[%s7 + $0x4] sm:$0xf]
      %v2929 = vld [vmem:[%s7 + $0x8] sm:$0xf]
      %v2930 = vld [vmem:[%s7 + $0xc] sm:$0xf]
      %v2931 = vld [vmem:[%s7 + $0x10] sm:$0xf]
      %v2932 = vld [vmem:[%s7 + $0x14] sm:$0xf]
      %v2933 = vld [vmem:[%s7 + $0x18] sm:$0xf]
      %v2934 = vld [vmem:[%s7 + $0x1c] sm:$0xf]
      %v2935 = vld [vmem:[%s7 + $0x20] sm:$0xf]
      %v2936 = vld [vmem:[%s7 + $0x24] sm:$0xf]
      %v2937 = vld [vmem:[%s7 + $0x28] sm:$0xf]
      %v2938 = vld [vmem:[%s7 + $0x2c] sm:$0xf]
      %v2939 = vld [vmem:[%s7 + $0x30] sm:$0xf]
      %v2940 = vld [vmem:[%s7 + $0x34] sm:$0xf]
      %v2941 = vld [vmem:[%s7 + $0x38] sm:$0xf]
      %v2942 = vld [vmem:[%s7 + $0x3c] sm:$0xf]
      %v2943 = vld [vmem:[%s8] sm:$0x1]
      %v2945 = vlaneseq
      %v2946 = vshrl.u32 %v2945, 7
      %v2947 = vsub.s32 0, %v2946
      %v2948 = vrot.slane %v2943, %v2947
      %v2966 = vunpack.c.l.b16 %v2927
      %v2967 = vunpack.c.l.b16 %v2928
      %v2968 = vunpack.c.l.b16 %v2929
      %v2969 = vunpack.c.l.b16 %v2930
      %v2970 = vunpack.c.l.b16 %v2931
      %v2971 = vunpack.c.l.b16 %v2932
      %v2972 = vunpack.c.l.b16 %v2933
      %v2973 = vunpack.c.l.b16 %v2934
      %v2974 = vunpack.c.l.b16 %v2935
      %v2975 = vunpack.c.l.b16 %v2936
      %v2976 = vunpack.c.l.b16 %v2937
      %v2977 = vunpack.c.l.b16 %v2938
      %v2978 = vunpack.c.l.b16 %v2939
      %v2979 = vunpack.c.l.b16 %v2940
      %v2980 = vunpack.c.l.b16 %v2941
      %v2981 = vunpack.c.l.b16 %v2942
      %v2982 = vpack.c.b16 %v2967, %v2966
      %v2983 = vpack.c.b16 %v2969, %v2968
      %v2984 = vpack.c.b16 %v2971, %v2970
      %v2985 = vpack.c.b16 %v2973, %v2972
      %v2986 = vpack.c.b16 %v2975, %v2974
      %v2987 = vpack.c.b16 %v2977, %v2976
      %v2988 = vpack.c.b16 %v2979, %v2978
      %v2989 = vpack.c.b16 %v2981, %v2980
      %2998 = vmatprep.subr.bf16.mxu0 0
      %2999 = vmatpush1.bf16.msra.mxu0 %v2982
      %3000 = vmatprep.subr.bf16.mxu0 0
      %3001 = vmatpush1.bf16.msra.mxu0 %v2983
      %3002 = vmatprep.subr.bf16.mxu0 0
      %3003 = vmatpush1.bf16.msra.mxu0 %v2984
      %3004 = vmatprep.subr.bf16.mxu0 0
      %3005 = vmatpush1.bf16.msra.mxu0 %v2985
      %3006 = vmatprep.subr.bf16.mxu0 0
      %3007 = vmatpush1.bf16.msra.mxu0 %v2986
      %3008 = vmatprep.subr.bf16.mxu0 0
      %3009 = vmatpush1.bf16.msra.mxu0 %v2987
      %3010 = vmatprep.subr.bf16.mxu0 0
      %3011 = vmatpush1.bf16.msra.mxu0 %v2988
      %3012 = vmatprep.subr.bf16.mxu0 0
      %3013 = vmatpush1.bf16.msra.mxu0 %v2989
      %3014 = vmatprep.subr.bf16.mxu0 0
      %3015 = vmatpush1.bf16.msra.mxu0 0
      %3016 = vmatprep.subr.bf16.mxu0 0
      %3017 = vmatpush1.bf16.msra.mxu0 0
      %3018 = vmatprep.subr.bf16.mxu0 0
      %3019 = vmatpush1.bf16.msra.mxu0 0
      %3020 = vmatprep.subr.bf16.mxu0 0
      %3021 = vmatpush1.bf16.msra.mxu0 0
      %3022 = vmatprep.subr.bf16.mxu0 0
      %3023 = vmatpush1.bf16.msra.mxu0 0
      %3024 = vmatprep.subr.bf16.mxu0 0
      %3025 = vmatpush1.bf16.msra.mxu0 0
      %3026 = vmatprep.subr.bf16.mxu0 0
      %3027 = vmatpush1.bf16.msra.mxu0 0
      %3028 = vmatprep.subr.bf16.mxu0 0
      %3029 = vmatpush1.bf16.msra.mxu0 0
      %3030 = vmatprep.mubr.bf16.mxu0 0
      %3031 = vmatmul.mubr.bf16.gmra.mrb[0].mxu0 %v2911
      %v3032 = vpop.f32.mrb[0].mxu0
      %v3033 = vadd.f32 %v2948, %v3032
      %v3034 = vpop.f32.mrb[0].mxu0
      %v3035 = vpop.f32.mrb[0].mxu0
      %v3036 = vadd.f32 %v2948, %v3035
      %v3037 = vpop.f32.mrb[0].mxu0
      %3038 = vmatprep.mubr.bf16.mxu0 0
      %3039 = vmatmul.mubr.bf16.gmra.mrb[0].mxu0 %v2912
      %v3040 = vpop.f32.mrb[0].mxu0
      %v3041 = vadd.f32 %v2948, %v3040
      %v3042 = vpop.f32.mrb[0].mxu0
      %v3043 = vpop.f32.mrb[0].mxu0
      %v3044 = vadd.f32 %v2948, %v3043
      %v3045 = vpop.f32.mrb[0].mxu0
      %3046 = vmatprep.mubr.bf16.mxu0 0
      %3047 = vmatmul.mubr.bf16.gmra.mrb[0].mxu0 %v2913
      %v3048 = vpop.f32.mrb[0].mxu0
      %v3049 = vadd.f32 %v2948, %v3048
      %v3050 = vpop.f32.mrb[0].mxu0
      %v3051 = vpop.f32.mrb[0].mxu0
      %v3052 = vadd.f32 %v2948, %v3051
      %v3053 = vpop.f32.mrb[0].mxu0
      %3054 = vmatprep.mubr.bf16.mxu0 0
      %3055 = vmatmul.mubr.bf16.gmra.mrb[0].mxu0 %v2914
      %v3056 = vpop.f32.mrb[0].mxu0
      %v3057 = vadd.f32 %v2948, %v3056
      %v3058 = vpop.f32.mrb[0].mxu0
      %v3059 = vpop.f32.mrb[0].mxu0
      %v3060 = vadd.f32 %v2948, %v3059
      %v3061 = vpop.f32.mrb[0].mxu0
      %3062 = vmatprep.mubr.bf16.mxu0 0
      %3063 = vmatmul.mubr.bf16.gmra.mrb[0].mxu0 %v2915
      %v3064 = vpop.f32.mrb[0].mxu0
      %v3065 = vadd.f32 %v2948, %v3064
      %v3066 = vpop.f32.mrb[0].mxu0
      %v3067 = vpop.f32.mrb[0].mxu0
      %v3068 = vadd.f32 %v2948, %v3067
      %v3069 = vpop.f32.mrb[0].mxu0
      %3070 = vmatprep.mubr.bf16.mxu0 0
      %3071 = vmatmul.mubr.bf16.gmra.mrb[0].mxu0 %v2916
      %v3072 = vpop.f32.mrb[0].mxu0
      %v3073 = vadd.f32 %v2948, %v3072
      %v3074 = vpop.f32.mrb[0].mxu0
      %v3075 = vpop.f32.mrb[0].mxu0
      %v3076 = vadd.f32 %v2948, %v3075
      %v3077 = vpop.f32.mrb[0].mxu0
      %3078 = vmatprep.mubr.bf16.mxu0 0
      %3079 = vmatmul.mubr.bf16.gmra.mrb[0].mxu0 %v2917
      %v3080 = vpop.f32.mrb[0].mxu0
      %v3081 = vadd.f32 %v2948, %v3080
      %v3082 = vpop.f32.mrb[0].mxu0
      %v3083 = vpop.f32.mrb[0].mxu0
      %v3084 = vadd.f32 %v2948, %v3083
      %v3085 = vpop.f32.mrb[0].mxu0
      %3086 = vmatprep.mubr.bf16.mxu0 0
      %3087 = vmatmul.mubr.bf16.gmra.mrb[0].mxu0 %v2918
      %v3088 = vpop.f32.mrb[0].mxu0
      %v3089 = vadd.f32 %v2948, %v3088
      %v3090 = vpop.f32.mrb[0].mxu0
      %v3091 = vpop.f32.mrb[0].mxu0
      %v3092 = vadd.f32 %v2948, %v3091
      %v3093 = vpop.f32.mrb[0].mxu0
      %3094 = vmatprep.mubr.bf16.mxu0 0
      %3095 = vmatmul.mubr.bf16.gmra.mrb[0].mxu0 %v2919
      %v3096 = vpop.f32.mrb[0].mxu0
      %v3097 = vadd.f32 %v2948, %v3096
      %v3098 = vpop.f32.mrb[0].mxu0
      %v3099 = vpop.f32.mrb[0].mxu0
      %v3100 = vadd.f32 %v2948, %v3099
      %v3101 = vpop.f32.mrb[0].mxu0
      %3102 = vmatprep.mubr.bf16.mxu0 0
      %3103 = vmatmul.mubr.bf16.gmra.mrb[0].mxu0 %v2920
      %v3104 = vpop.f32.mrb[0].mxu0
      %v3105 = vadd.f32 %v2948, %v3104
      %v3106 = vpop.f32.mrb[0].mxu0
      %v3107 = vpop.f32.mrb[0].mxu0
      %v3108 = vadd.f32 %v2948, %v3107
      %v3109 = vpop.f32.mrb[0].mxu0
      %3110 = vmatprep.mubr.bf16.mxu0 0
      %3111 = vmatmul.mubr.bf16.gmra.mrb[0].mxu0 %v2921
      %v3112 = vpop.f32.mrb[0].mxu0
      %v3113 = vadd.f32 %v2948, %v3112
      %v3114 = vpop.f32.mrb[0].mxu0
      %v3115 = vpop.f32.mrb[0].mxu0
      %v3116 = vadd.f32 %v2948, %v3115
      %v3117 = vpop.f32.mrb[0].mxu0
      %3118 = vmatprep.mubr.bf16.mxu0 0
      %3119 = vmatmul.mubr.bf16.gmra.mrb[0].mxu0 %v2922
      %v3120 = vpop.f32.mrb[0].mxu0
      %v3121 = vadd.f32 %v2948, %v3120
      %v3122 = vpop.f32.mrb[0].mxu0
      %v3123 = vpop.f32.mrb[0].mxu0
      %v3124 = vadd.f32 %v2948, %v3123
      %v3125 = vpop.f32.mrb[0].mxu0
      %3126 = vmatprep.mubr.bf16.mxu0 0
      %3127 = vmatmul.mubr.bf16.gmra.mrb[0].mxu0 %v2923
      %v3128 = vpop.f32.mrb[0].mxu0
      %v3129 = vadd.f32 %v2948, %v3128
      %v3130 = vpop.f32.mrb[0].mxu0
      %v3131 = vpop.f32.mrb[0].mxu0
      %v3132 = vadd.f32 %v2948, %v3131
      %v3133 = vpop.f32.mrb[0].mxu0
      %3134 = vmatprep.mubr.bf16.mxu0 0
      %3135 = vmatmul.mubr.bf16.gmra.mrb[0].mxu0 %v2924
      %v3136 = vpop.f32.mrb[0].mxu0
      %v3137 = vadd.f32 %v2948, %v3136
      %v3138 = vpop.f32.mrb[0].mxu0
      %v3139 = vpop.f32.mrb[0].mxu0
      %v3140 = vadd.f32 %v2948, %v3139
      %v3141 = vpop.f32.mrb[0].mxu0
      %3142 = vmatprep.mubr.bf16.mxu0 0
      %3143 = vmatmul.mubr.bf16.gmra.mrb[0].mxu0 %v2925
      %v3144 = vpop.f32.mrb[0].mxu0
      %v3145 = vadd.f32 %v2948, %v3144
      %v3146 = vpop.f32.mrb[0].mxu0
      %v3147 = vpop.f32.mrb[0].mxu0
      %v3148 = vadd.f32 %v2948, %v3147
      %v3149 = vpop.f32.mrb[0].mxu0
      %3150 = vmatprep.mubr.bf16.mxu0 0
      %3151 = vmatmul.mubr.bf16.gmra.mrb[0].mxu0 %v2926
      %v3152 = vpop.f32.mrb[0].mxu0
      %v3153 = vadd.f32 %v2948, %v3152
      %v3154 = vpop.f32.mrb[0].mxu0
      %v3155 = vpop.f32.mrb[0].mxu0
      %v3156 = vadd.f32 %v2948, %v3155
      %v3157 = vpop.f32.mrb[0].mxu0
      %3158 = vdwg.mxu0
      %v3159 = vmax.f32 %v3033, 0.0
      %v3160 = vmax.f32 %v3036, 0.0
      %v3161 = vmax.f32 %v3041, 0.0
      %v3162 = vmax.f32 %v3044, 0.0
      %v3163 = vmax.f32 %v3049, 0.0
      %v3164 = vmax.f32 %v3052, 0.0
      %v3165 = vmax.f32 %v3057, 0.0
      %v3166 = vmax.f32 %v3060, 0.0
      %v3167 = vmax.f32 %v3065, 0.0
      %v3168 = vmax.f32 %v3068, 0.0
      %v3169 = vmax.f32 %v3073, 0.0
      %v3170 = vmax.f32 %v3076, 0.0
      %v3171 = vmax.f32 %v3081, 0.0
      %v3172 = vmax.f32 %v3084, 0.0
      %v3173 = vmax.f32 %v3089, 0.0
      %v3174 = vmax.f32 %v3092, 0.0
      %v3175 = vmax.f32 %v3097, 0.0
      %v3176 = vmax.f32 %v3100, 0.0
      %v3177 = vmax.f32 %v3105, 0.0
      %v3178 = vmax.f32 %v3108, 0.0
      %v3179 = vmax.f32 %v3113, 0.0
      %v3180 = vmax.f32 %v3116, 0.0
      %v3181 = vmax.f32 %v3121, 0.0
      %v3182 = vmax.f32 %v3124, 0.0
      %v3183 = vmax.f32 %v3129, 0.0
      %v3184 = vmax.f32 %v3132, 0.0
      %v3185 = vmax.f32 %v3137, 0.0
      %v3186 = vmax.f32 %v3140, 0.0
      %v3187 = vmax.f32 %v3145, 0.0
      %v3188 = vmax.f32 %v3148, 0.0
      %v3189 = vmax.f32 %v3153, 0.0
      %v3190 = vmax.f32 %v3156, 0.0
      %v3191 = vpack.c.bf16 %v3160, %v3159
      %v3192 = vpack.c.bf16 %v3162, %v3161
      %v3193 = vpack.c.bf16 %v3164, %v3163
      %v3194 = vpack.c.bf16 %v3166, %v3165
      %v3195 = vpack.c.bf16 %v3168, %v3167
      %v3196 = vpack.c.bf16 %v3170, %v3169
      %v3197 = vpack.c.bf16 %v3172, %v3171
      %v3198 = vpack.c.bf16 %v3174, %v3173
      %v3199 = vpack.c.bf16 %v3176, %v3175
      %v3200 = vpack.c.bf16 %v3178, %v3177
      %v3201 = vpack.c.bf16 %v3180, %v3179
      %v3202 = vpack.c.bf16 %v3182, %v3181
      %v3203 = vpack.c.bf16 %v3184, %v3183
      %v3204 = vpack.c.bf16 %v3186, %v3185
      %v3205 = vpack.c.bf16 %v3188, %v3187
      %v3206 = vpack.c.bf16 %v3190, %v3189
      %v3207 = vld [vmem:[%s9] sm:$0xff]
      %v3208 = vld [vmem:[%s9 + $0x8] sm:$0xff]
      %v3209 = vld [vmem:[%s9 + $0x10] sm:$0xff]
      %v3210 = vld [vmem:[%s9 + $0x18] sm:$0xff]
      %v3211 = vld [vmem:[%s9 + $0x20] sm:$0xff]
      %v3212 = vld [vmem:[%s9 + $0x28] sm:$0xff]
      %v3213 = vld [vmem:[%s9 + $0x30] sm:$0xff]
      %v3214 = vld [vmem:[%s9 + $0x38] sm:$0xff]
      %v3215 = vld [vmem:[%s9 + $0x40] sm:$0xff]
      %v3216 = vld [vmem:[%s9 + $0x48] sm:$0xff]
      %v3217 = vld [vmem:[%s9 + $0x50] sm:$0xff]
      %v3218 = vld [vmem:[%s9 + $0x58] sm:$0xff]
      %v3219 = vld [vmem:[%s9 + $0x60] sm:$0xff]
      %v3220 = vld [vmem:[%s9 + $0x68] sm:$0xff]
      %v3221 = vld [vmem:[%s9 + $0x70] sm:$0xff]
      %v3222 = vld [vmem:[%s9 + $0x78] sm:$0xff]
      %v3223 = vld [vmem:[%s10] sm:$0x3]
      %v3225 = vlaneseq
      %v3226 = vshrl.u32 %v3225, 7
      %v3227 = vsub.s32 0, %v3226
      %v3228 = vrot.slane %v3223, %v3227
      %v3229 = vlaneseq
      %v3230 = vshrl.u32 %v3229, 7
      %v3231 = vsub.s32 1, %v3230
      %v3232 = vrot.slane %v3223, %v3231
      %v3251 = vunpack.c.l.b16 %v3207
      %v3252 = vunpack.c.h.b16 %v3207
      %v3253 = vunpack.c.l.b16 %v3208
      %v3254 = vunpack.c.h.b16 %v3208
      %v3255 = vunpack.c.l.b16 %v3209
      %v3256 = vunpack.c.h.b16 %v3209
      %v3257 = vunpack.c.l.b16 %v3210
      %v3258 = vunpack.c.h.b16 %v3210
      %v3259 = vunpack.c.l.b16 %v3211
      %v3260 = vunpack.c.h.b16 %v3211
      %v3261 = vunpack.c.l.b16 %v3212
      %v3262 = vunpack.c.h.b16 %v3212
      %v3263 = vunpack.c.l.b16 %v3213
      %v3264 = vunpack.c.h.b16 %v3213
      %v3265 = vunpack.c.l.b16 %v3214
      %v3266 = vunpack.c.h.b16 %v3214
      %v3267 = vunpack.c.l.b16 %v3215
      %v3268 = vunpack.c.h.b16 %v3215
      %v3269 = vunpack.c.l.b16 %v3216
      %v3270 = vunpack.c.h.b16 %v3216
      %v3271 = vunpack.c.l.b16 %v3217
      %v3272 = vunpack.c.h.b16 %v3217
      %v3273 = vunpack.c.l.b16 %v3218
      %v3274 = vunpack.c.h.b16 %v3218
      %v3275 = vunpack.c.l.b16 %v3219
      %v3276 = vunpack.c.h.b16 %v3219
      %v3277 = vunpack.c.l.b16 %v3220
      %v3278 = vunpack.c.h.b16 %v3220
      %v3279 = vunpack.c.l.b16 %v3221
      %v3280 = vunpack.c.h.b16 %v3221
      %v3281 = vunpack.c.l.b16 %v3222
      %v3282 = vunpack.c.h.b16 %v3222
      %v3283 = vpack.c.b16 %v3253, %v3251
      %v3284 = vpack.c.b16 %v3254, %v3252
      %v3285 = vpack.c.b16 %v3257, %v3255
      %v3286 = vpack.c.b16 %v3258, %v3256
      %v3287 = vpack.c.b16 %v3261, %v3259
      %v3288 = vpack.c.b16 %v3262, %v3260
      %v3289 = vpack.c.b16 %v3265, %v3263
      %v3290 = vpack.c.b16 %v3266, %v3264
      %v3291 = vpack.c.b16 %v3269, %v3267
      %v3292 = vpack.c.b16 %v3270, %v3268
      %v3293 = vpack.c.b16 %v3273, %v3271
      %v3294 = vpack.c.b16 %v3274, %v3272
      %v3295 = vpack.c.b16 %v3277, %v3275
      %v3296 = vpack.c.b16 %v3278, %v3276
      %v3297 = vpack.c.b16 %v3281, %v3279
      %v3298 = vpack.c.b16 %v3282, %v3280
      %3315 = vmatprep.subr.bf16.mxu0 %v3284
      %3316 = vmatpush1.bf16.msra.mxu0 %v3283
      %3317 = vmatprep.subr.bf16.mxu0 %v3286
      %3318 = vmatpush1.bf16.msra.mxu0 %v3285
      %3319 = vmatprep.subr.bf16.mxu0 %v3288
      %3320 = vmatpush1.bf16.msra.mxu0 %v3287
      %3321 = vmatprep.subr.bf16.mxu0 %v3290
      %3322 = vmatpush1.bf16.msra.mxu0 %v3289
      %3323 = vmatprep.subr.bf16.mxu0 %v3292
      %3324 = vmatpush1.bf16.msra.mxu0 %v3291
      %3325 = vmatprep.subr.bf16.mxu0 %v3294
      %3326 = vmatpush1.bf16.msra.mxu0 %v3293
      %3327 = vmatprep.subr.bf16.mxu0 %v3296
      %3328 = vmatpush1.bf16.msra.mxu0 %v3295
      %3329 = vmatprep.subr.bf16.mxu0 %v3298
      %3330 = vmatpush1.bf16.msra.mxu0 %v3297
      %3331 = vmatprep.subr.bf16.mxu0 0
      %3332 = vmatpush1.bf16.msra.mxu0 0
      %3333 = vmatprep.subr.bf16.mxu0 0
      %3334 = vmatpush1.bf16.msra.mxu0 0
      %3335 = vmatprep.subr.bf16.mxu0 0
      %3336 = vmatpush1.bf16.msra.mxu0 0
      %3337 = vmatprep.subr.bf16.mxu0 0
      %3338 = vmatpush1.bf16.msra.mxu0 0
      %3339 = vmatprep.subr.bf16.mxu0 0
      %3340 = vmatpush1.bf16.msra.mxu0 0
      %3341 = vmatprep.subr.bf16.mxu0 0
      %3342 = vmatpush1.bf16.msra.mxu0 0
      %3343 = vmatprep.subr.bf16.mxu0 0
      %3344 = vmatpush1.bf16.msra.mxu0 0
      %3345 = vmatprep.subr.bf16.mxu0 0
      %3346 = vmatpush1.bf16.msra.mxu0 0
      %3347 = vmatprep.mubr.bf16.mxu0 0
      %3348 = vmatmul.mubr.bf16.gmra.mrb[0].mxu0 %v3191
      %v3349 = vpop.f32.mrb[0].mxu0
      %v3350 = vadd.f32 %v3228, %v3349
      %v3351 = vpop.f32.mrb[0].mxu0
      %v3352 = vadd.f32 %v3232, %v3351
      %v3353 = vpop.f32.mrb[0].mxu0
      %v3354 = vadd.f32 %v3228, %v3353
      %v3355 = vpop.f32.mrb[0].mxu0
      %v3356 = vadd.f32 %v3232, %v3355
      %3357 = vmatprep.mubr.bf16.mxu0 0
      %3358 = vmatmul.mubr.bf16.gmra.mrb[0].mxu0 %v3192
      %v3359 = vpop.f32.mrb[0].mxu0
      %v3360 = vadd.f32 %v3228, %v3359
      %v3361 = vpop.f32.mrb[0].mxu0
      %v3362 = vadd.f32 %v3232, %v3361
      %v3363 = vpop.f32.mrb[0].mxu0
      %v3364 = vadd.f32 %v3228, %v3363
      %v3365 = vpop.f32.mrb[0].mxu0
      %v3366 = vadd.f32 %v3232, %v3365
      %3367 = vmatprep.mubr.bf16.mxu0 0
      %3368 = vmatmul.mubr.bf16.gmra.mrb[0].mxu0 %v3193
      %v3369 = vpop.f32.mrb[0].mxu0
      %v3370 = vadd.f32 %v3228, %v3369
      %v3371 = vpop.f32.mrb[0].mxu0
      %v3372 = vadd.f32 %v3232, %v3371
      %v3373 = vpop.f32.mrb[0].mxu0
      %v3374 = vadd.f32 %v3228, %v3373
      %v3375 = vpop.f32.mrb[0].mxu0
      %v3376 = vadd.f32 %v3232, %v3375
      %3377 = vmatprep.mubr.bf16.mxu0 0
      %3378 = vmatmul.mubr.bf16.gmra.mrb[0].mxu0 %v3194
      %v3379 = vpop.f32.mrb[0].mxu0
      %v3380 = vadd.f32 %v3228, %v3379
      %v3381 = vpop.f32.mrb[0].mxu0
      %v3382 = vadd.f32 %v3232, %v3381
      %v3383 = vpop.f32.mrb[0].mxu0
      %v3384 = vadd.f32 %v3228, %v3383
      %v3385 = vpop.f32.mrb[0].mxu0
      %v3386 = vadd.f32 %v3232, %v3385
      %3387 = vmatprep.mubr.bf16.mxu0 0
      %3388 = vmatmul.mubr.bf16.gmra.mrb[0].mxu0 %v3195
      %v3389 = vpop.f32.mrb[0].mxu0
      %v3390 = vadd.f32 %v3228, %v3389
      %v3391 = vpop.f32.mrb[0].mxu0
      %v3392 = vadd.f32 %v3232, %v3391
      %v3393 = vpop.f32.mrb[0].mxu0
      %v3394 = vadd.f32 %v3228, %v3393
      %v3395 = vpop.f32.mrb[0].mxu0
      %v3396 = vadd.f32 %v3232, %v3395
      %3397 = vmatprep.mubr.bf16.mxu0 0
      %3398 = vmatmul.mubr.bf16.gmra.mrb[0].mxu0 %v3196
      %v3399 = vpop.f32.mrb[0].mxu0
      %v3400 = vadd.f32 %v3228, %v3399
      %v3401 = vpop.f32.mrb[0].mxu0
      %v3402 = vadd.f32 %v3232, %v3401
      %v3403 = vpop.f32.mrb[0].mxu0
      %v3404 = vadd.f32 %v3228, %v3403
      %v3405 = vpop.f32.mrb[0].mxu0
      %v3406 = vadd.f32 %v3232, %v3405
      %3407 = vmatprep.mubr.bf16.mxu0 0
      %3408 = vmatmul.mubr.bf16.gmra.mrb[0].mxu0 %v3197
      %v3409 = vpop.f32.mrb[0].mxu0
      %v3410 = vadd.f32 %v3228, %v3409
      %v3411 = vpop.f32.mrb[0].mxu0
      %v3412 = vadd.f32 %v3232, %v3411
      %v3413 = vpop.f32.mrb[0].mxu0
      %v3414 = vadd.f32 %v3228, %v3413
      %v3415 = vpop.f32.mrb[0].mxu0
      %v3416 = vadd.f32 %v3232, %v3415
      %3417 = vmatprep.mubr.bf16.mxu0 0
      %3418 = vmatmul.mubr.bf16.gmra.mrb[0].mxu0 %v3198
      %v3419 = vpop.f32.mrb[0].mxu0
      %v3420 = vadd.f32 %v3228, %v3419
      %v3421 = vpop.f32.mrb[0].mxu0
      %v3422 = vadd.f32 %v3232, %v3421
      %v3423 = vpop.f32.mrb[0].mxu0
      %v3424 = vadd.f32 %v3228, %v3423
      %v3425 = vpop.f32.mrb[0].mxu0
      %v3426 = vadd.f32 %v3232, %v3425
      %3427 = vmatprep.mubr.bf16.mxu0 0
      %3428 = vmatmul.mubr.bf16.gmra.mrb[0].mxu0 %v3199
      %v3429 = vpop.f32.mrb[0].mxu0
      %v3430 = vadd.f32 %v3228, %v3429
      %v3431 = vpop.f32.mrb[0].mxu0
      %v3432 = vadd.f32 %v3232, %v3431
      %v3433 = vpop.f32.mrb[0].mxu0
      %v3434 = vadd.f32 %v3228, %v3433
      %v3435 = vpop.f32.mrb[0].mxu0
      %v3436 = vadd.f32 %v3232, %v3435
      %3437 = vmatprep.mubr.bf16.mxu0 0
      %3438 = vmatmul.mubr.bf16.gmra.mrb[0].mxu0 %v3200
      %v3439 = vpop.f32.mrb[0].mxu0
      %v3440 = vadd.f32 %v3228, %v3439
      %v3441 = vpop.f32.mrb[0].mxu0
      %v3442 = vadd.f32 %v3232, %v3441
      %v3443 = vpop.f32.mrb[0].mxu0
      %v3444 = vadd.f32 %v3228, %v3443
      %v3445 = vpop.f32.mrb[0].mxu0
      %v3446 = vadd.f32 %v3232, %v3445
      %3447 = vmatprep.mubr.bf16.mxu0 0
      %3448 = vmatmul.mubr.bf16.gmra.mrb[0].mxu0 %v3201
      %v3449 = vpop.f32.mrb[0].mxu0
      %v3450 = vadd.f32 %v3228, %v3449
      %v3451 = vpop.f32.mrb[0].mxu0
      %v3452 = vadd.f32 %v3232, %v3451
      %v3453 = vpop.f32.mrb[0].mxu0
      %v3454 = vadd.f32 %v3228, %v3453
      %v3455 = vpop.f32.mrb[0].mxu0
      %v3456 = vadd.f32 %v3232, %v3455
      %3457 = vmatprep.mubr.bf16.mxu0 0
      %3458 = vmatmul.mubr.bf16.gmra.mrb[0].mxu0 %v3202
      %v3459 = vpop.f32.mrb[0].mxu0
      %v3460 = vadd.f32 %v3228, %v3459
      %v3461 = vpop.f32.mrb[0].mxu0
      %v3462 = vadd.f32 %v3232, %v3461
      %v3463 = vpop.f32.mrb[0].mxu0
      %v3464 = vadd.f32 %v3228, %v3463
      %v3465 = vpop.f32.mrb[0].mxu0
      %v3466 = vadd.f32 %v3232, %v3465
      %3467 = vmatprep.mubr.bf16.mxu0 0
      %3468 = vmatmul.mubr.bf16.gmra.mrb[0].mxu0 %v3203
      %v3469 = vpop.f32.mrb[0].mxu0
      %v3470 = vadd.f32 %v3228, %v3469
      %v3471 = vpop.f32.mrb[0].mxu0
      %v3472 = vadd.f32 %v3232, %v3471
      %v3473 = vpop.f32.mrb[0].mxu0
      %v3474 = vadd.f32 %v3228, %v3473
      %v3475 = vpop.f32.mrb[0].mxu0
      %v3476 = vadd.f32 %v3232, %v3475
      %3477 = vmatprep.mubr.bf16.mxu0 0
      %3478 = vmatmul.mubr.bf16.gmra.mrb[0].mxu0 %v3204
      %v3479 = vpop.f32.mrb[0].mxu0
      %v3480 = vadd.f32 %v3228, %v3479
      %v3481 = vpop.f32.mrb[0].mxu0
      %v3482 = vadd.f32 %v3232, %v3481
      %v3483 = vpop.f32.mrb[0].mxu0
      %v3484 = vadd.f32 %v3228, %v3483
      %v3485 = vpop.f32.mrb[0].mxu0
      %v3486 = vadd.f32 %v3232, %v3485
      %3487 = vmatprep.mubr.bf16.mxu0 0
      %3488 = vmatmul.mubr.bf16.gmra.mrb[0].mxu0 %v3205
      %v3489 = vpop.f32.mrb[0].mxu0
      %v3490 = vadd.f32 %v3228, %v3489
      %v3491 = vpop.f32.mrb[0].mxu0
      %v3492 = vadd.f32 %v3232, %v3491
      %v3493 = vpop.f32.mrb[0].mxu0
      %v3494 = vadd.f32 %v3228, %v3493
      %v3495 = vpop.f32.mrb[0].mxu0
      %v3496 = vadd.f32 %v3232, %v3495
      %3497 = vmatprep.mubr.bf16.mxu0 0
      %3498 = vmatmul.mubr.bf16.gmra.mrb[0].mxu0 %v3206
      %v3499 = vpop.f32.mrb[0].mxu0
      %v3500 = vadd.f32 %v3228, %v3499
      %v3501 = vpop.f32.mrb[0].mxu0
      %v3502 = vadd.f32 %v3232, %v3501
      %v3503 = vpop.f32.mrb[0].mxu0
      %v3504 = vadd.f32 %v3228, %v3503
      %v3505 = vpop.f32.mrb[0].mxu0
      %v3506 = vadd.f32 %v3232, %v3505
      %3507 = vdwg.mxu0
      %v3508 = vmax.f32 %v3350, 0.0
      %v3509 = vmax.f32 %v3352, 0.0
      %v3510 = vmax.f32 %v3354, 0.0
      %v3511 = vmax.f32 %v3356, 0.0
      %v3512 = vmax.f32 %v3360, 0.0
      %v3513 = vmax.f32 %v3362, 0.0
      %v3514 = vmax.f32 %v3364, 0.0
      %v3515 = vmax.f32 %v3366, 0.0
      %v3516 = vmax.f32 %v3370, 0.0
      %v3517 = vmax.f32 %v3372, 0.0
      %v3518 = vmax.f32 %v3374, 0.0
      %v3519 = vmax.f32 %v3376, 0.0
      %v3520 = vmax.f32 %v3380, 0.0
      %v3521 = vmax.f32 %v3382, 0.0
      %v3522 = vmax.f32 %v3384, 0.0
      %v3523 = vmax.f32 %v3386, 0.0
      %v3524 = vmax.f32 %v3390, 0.0
      %v3525 = vmax.f32 %v3392, 0.0
      %v3526 = vmax.f32 %v3394, 0.0
      %v3527 = vmax.f32 %v3396, 0.0
      %v3528 = vmax.f32 %v3400, 0.0
      %v3529 = vmax.f32 %v3402, 0.0
      %v3530 = vmax.f32 %v3404, 0.0
      %v3531 = vmax.f32 %v3406, 0.0
      %v3532 = vmax.f32 %v3410, 0.0
      %v3533 = vmax.f32 %v3412, 0.0
      %v3534 = vmax.f32 %v3414, 0.0
      %v3535 = vmax.f32 %v3416, 0.0
      %v3536 = vmax.f32 %v3420, 0.0
      %v3537 = vmax.f32 %v3422, 0.0
      %v3538 = vmax.f32 %v3424, 0.0
      %v3539 = vmax.f32 %v3426, 0.0
      %v3540 = vmax.f32 %v3430, 0.0
      %v3541 = vmax.f32 %v3432, 0.0
      %v3542 = vmax.f32 %v3434, 0.0
      %v3543 = vmax.f32 %v3436, 0.0
      %v3544 = vmax.f32 %v3440, 0.0
      %v3545 = vmax.f32 %v3442, 0.0
      %v3546 = vmax.f32 %v3444, 0.0
      %v3547 = vmax.f32 %v3446, 0.0
      %v3548 = vmax.f32 %v3450, 0.0
      %v3549 = vmax.f32 %v3452, 0.0
      %v3550 = vmax.f32 %v3454, 0.0
      %v3551 = vmax.f32 %v3456, 0.0
      %v3552 = vmax.f32 %v3460, 0.0
      %v3553 = vmax.f32 %v3462, 0.0
      %v3554 = vmax.f32 %v3464, 0.0
      %v3555 = vmax.f32 %v3466, 0.0
      %v3556 = vmax.f32 %v3470, 0.0
      %v3557 = vmax.f32 %v3472, 0.0
      %v3558 = vmax.f32 %v3474, 0.0
      %v3559 = vmax.f32 %v3476, 0.0
      %v3560 = vmax.f32 %v3480, 0.0
      %v3561 = vmax.f32 %v3482, 0.0
      %v3562 = vmax.f32 %v3484, 0.0
      %v3563 = vmax.f32 %v3486, 0.0
      %v3564 = vmax.f32 %v3490, 0.0
      %v3565 = vmax.f32 %v3492, 0.0
      %v3566 = vmax.f32 %v3494, 0.0
      %v3567 = vmax.f32 %v3496, 0.0
      %v3568 = vmax.f32 %v3500, 0.0
      %v3569 = vmax.f32 %v3502, 0.0
      %v3570 = vmax.f32 %v3504, 0.0
      %v3571 = vmax.f32 %v3506, 0.0
      %v3572 = vpack.c.bf16 %v3510, %v3508
      %v3573 = vpack.c.bf16 %v3511, %v3509
      %v3574 = vpack.c.bf16 %v3514, %v3512
      %v3575 = vpack.c.bf16 %v3515, %v3513
      %v3576 = vpack.c.bf16 %v3518, %v3516
      %v3577 = vpack.c.bf16 %v3519, %v3517
      %v3578 = vpack.c.bf16 %v3522, %v3520
      %v3579 = vpack.c.bf16 %v3523, %v3521
      %v3580 = vpack.c.bf16 %v3526, %v3524
      %v3581 = vpack.c.bf16 %v3527, %v3525
      %v3582 = vpack.c.bf16 %v3530, %v3528
      %v3583 = vpack.c.bf16 %v3531, %v3529
      %v3584 = vpack.c.bf16 %v3534, %v3532
      %v3585 = vpack.c.bf16 %v3535, %v3533
      %v3586 = vpack.c.bf16 %v3538, %v3536
      %v3587 = vpack.c.bf16 %v3539, %v3537
      %v3588 = vpack.c.bf16 %v3542, %v3540
      %v3589 = vpack.c.bf16 %v3543, %v3541
      %v3590 = vpack.c.bf16 %v3546, %v3544
      %v3591 = vpack.c.bf16 %v3547, %v3545
      %v3592 = vpack.c.bf16 %v3550, %v3548
      %v3593 = vpack.c.bf16 %v3551, %v3549
      %v3594 = vpack.c.bf16 %v3554, %v3552
      %v3595 = vpack.c.bf16 %v3555, %v3553
      %v3596 = vpack.c.bf16 %v3558, %v3556
      %v3597 = vpack.c.bf16 %v3559, %v3557
      %v3598 = vpack.c.bf16 %v3562, %v3560
      %v3599 = vpack.c.bf16 %v3563, %v3561
      %v3600 = vpack.c.bf16 %v3566, %v3564
      %v3601 = vpack.c.bf16 %v3567, %v3565
      %v3602 = vpack.c.bf16 %v3570, %v3568
      %v3603 = vpack.c.bf16 %v3571, %v3569
      %v3604 = vld [vmem:[%s11] sm:$0xff]
      %v3605 = vld [vmem:[%s11 + $0x8] sm:$0xff]
      %v3606 = vld [vmem:[%s11 + $0x10] sm:$0xff]
      %v3607 = vld [vmem:[%s11 + $0x18] sm:$0xf]
      %v3608 = vld [vmem:[%s11 + $0x1c] sm:$0xff]
      %v3609 = vld [vmem:[%s11 + $0x24] sm:$0xff]
      %v3610 = vld [vmem:[%s11 + $0x2c] sm:$0xff]
      %v3611 = vld [vmem:[%s11 + $0x34] sm:$0xf]
      %v3612 = vld [vmem:[%s11 + $0x38] sm:$0xff]
      %v3613 = vld [vmem:[%s11 + $0x40] sm:$0xff]
      %v3614 = vld [vmem:[%s11 + $0x48] sm:$0xff]
      %v3615 = vld [vmem:[%s11 + $0x50] sm:$0xf]
      %v3616 = vld [vmem:[%s11 + $0x54] sm:$0xff]
      %v3617 = vld [vmem:[%s11 + $0x5c] sm:$0xff]
      %v3618 = vld [vmem:[%s11 + $0x64] sm:$0xff]
      %v3619 = vld [vmem:[%s11 + $0x6c] sm:$0xf]
      %v3620 = vld [vmem:[%s11 + $0x70] sm:$0xff]
      %v3621 = vld [vmem:[%s11 + $0x78] sm:$0xff]
      %v3622 = vld [vmem:[%s11 + $0x80] sm:$0xff]
      %v3623 = vld [vmem:[%s11 + $0x88] sm:$0xf]
      %v3624 = vld [vmem:[%s11 + $0x8c] sm:$0xff]
      %v3625 = vld [vmem:[%s11 + $0x94] sm:$0xff]
      %v3626 = vld [vmem:[%s11 + $0x9c] sm:$0xff]
      %v3627 = vld [vmem:[%s11 + $0xa4] sm:$0xf]
      %v3628 = vld [vmem:[%s11 + $0xa8] sm:$0xff]
      %v3629 = vld [vmem:[%s11 + $0xb0] sm:$0xff]
      %v3630 = vld [vmem:[%s11 + $0xb8] sm:$0xff]
      %v3631 = vld [vmem:[%s11 + $0xc0] sm:$0xf]
      %v3632 = vld [vmem:[%s11 + $0xc4] sm:$0xff]
      %v3633 = vld [vmem:[%s11 + $0xcc] sm:$0xff]
      %v3634 = vld [vmem:[%s11 + $0xd4] sm:$0xff]
      %v3635 = vld [vmem:[%s11 + $0xdc] sm:$0xf]
      %v3636 = vld [vmem:[%s11 + $0xe0] sm:$0xff]
      %v3637 = vld [vmem:[%s11 + $0xe8] sm:$0xff]
      %v3638 = vld [vmem:[%s11 + $0xf0] sm:$0xff]
      %v3639 = vld [vmem:[%s11 + $0xf8] sm:$0xf]
      %v3640 = vld [vmem:[%s11 + $0xfc] sm:$0xff]
      %v3641 = vld [vmem:[%s11 + $0x104] sm:$0xff]
      %v3642 = vld [vmem:[%s11 + $0x10c] sm:$0xff]
      %v3643 = vld [vmem:[%s11 + $0x114] sm:$0xf]
      %v3644 = vld [vmem:[%s11 + $0x118] sm:$0xff]
      %v3645 = vld [vmem:[%s11 + $0x120] sm:$0xff]
      %v3646 = vld [vmem:[%s11 + $0x128] sm:$0xff]
      %v3647 = vld [vmem:[%s11 + $0x130] sm:$0xf]
      %v3648 = vld [vmem:[%s11 + $0x134] sm:$0xff]
      %v3649 = vld [vmem:[%s11 + $0x13c] sm:$0xff]
      %v3650 = vld [vmem:[%s11 + $0x144] sm:$0xff]
      %v3651 = vld [vmem:[%s11 + $0x14c] sm:$0xf]
      %v3652 = vld [vmem:[%s11 + $0x150] sm:$0xff]
      %v3653 = vld [vmem:[%s11 + $0x158] sm:$0xff]
      %v3654 = vld [vmem:[%s11 + $0x160] sm:$0xff]
      %v3655 = vld [vmem:[%s11 + $0x168] sm:$0xf]
      %v3656 = vld [vmem:[%s11 + $0x16c] sm:$0xff]
      %v3657 = vld [vmem:[%s11 + $0x174] sm:$0xff]
      %v3658 = vld [vmem:[%s11 + $0x17c] sm:$0xff]
      %v3659 = vld [vmem:[%s11 + $0x184] sm:$0xf]
      %v3660 = vld [vmem:[%s11 + $0x188] sm:$0xff]
      %v3661 = vld [vmem:[%s11 + $0x190] sm:$0xff]
      %v3662 = vld [vmem:[%s11 + $0x198] sm:$0xff]
      %v3663 = vld [vmem:[%s11 + $0x1a0] sm:$0xf]
      %v3664 = vld [vmem:[%s11 + $0x1a4] sm:$0xff]
      %v3665 = vld [vmem:[%s11 + $0x1ac] sm:$0xff]
      %v3666 = vld [vmem:[%s11 + $0x1b4] sm:$0xff]
      %v3667 = vld [vmem:[%s11 + $0x1bc] sm:$0xf]
      %v3668 = vld [vmem:[%s11 + $0x1c0] sm:$0xff]
      %v3669 = vld [vmem:[%s11 + $0x1c8] sm:$0xff]
      %v3670 = vld [vmem:[%s11 + $0x1d0] sm:$0xff]
      %v3671 = vld [vmem:[%s11 + $0x1d8] sm:$0xf]
      %v3672 = vld [vmem:[%s11 + $0x1dc] sm:$0xff]
      %v3673 = vld [vmem:[%s11 + $0x1e4] sm:$0xff]
      %v3674 = vld [vmem:[%s11 + $0x1ec] sm:$0xff]
      %v3675 = vld [vmem:[%s11 + $0x1f4] sm:$0xf]
      %v3676 = vld [vmem:[%s11 + $0x1f8] sm:$0xff]
      %v3677 = vld [vmem:[%s11 + $0x200] sm:$0xff]
      %v3678 = vld [vmem:[%s11 + $0x208] sm:$0xff]
      %v3679 = vld [vmem:[%s11 + $0x210] sm:$0xf]
      %v3680 = vld [vmem:[%s11 + $0x214] sm:$0xff]
      %v3681 = vld [vmem:[%s11 + $0x21c] sm:$0xff]
      %v3682 = vld [vmem:[%s11 + $0x224] sm:$0xff]
      %v3683 = vld [vmem:[%s11 + $0x22c] sm:$0xf]
      %v3684 = vld [vmem:[%s11 + $0x230] sm:$0xff]
      %v3685 = vld [vmem:[%s11 + $0x238] sm:$0xff]
      %v3686 = vld [vmem:[%s11 + $0x240] sm:$0xff]
      %v3687 = vld [vmem:[%s11 + $0x248] sm:$0xf]
      %v3688 = vld [vmem:[%s11 + $0x24c] sm:$0xff]
      %v3689 = vld [vmem:[%s11 + $0x254] sm:$0xff]
      %v3690 = vld [vmem:[%s11 + $0x25c] sm:$0xff]
      %v3691 = vld [vmem:[%s11 + $0x264] sm:$0xf]
      %v3692 = vld [vmem:[%s11 + $0x268] sm:$0xff]
      %v3693 = vld [vmem:[%s11 + $0x270] sm:$0xff]
      %v3694 = vld [vmem:[%s11 + $0x278] sm:$0xff]
      %v3695 = vld [vmem:[%s11 + $0x280] sm:$0xf]
      %v3696 = vld [vmem:[%s11 + $0x284] sm:$0xff]
      %v3697 = vld [vmem:[%s11 + $0x28c] sm:$0xff]
      %v3698 = vld [vmem:[%s11 + $0x294] sm:$0xff]
      %v3699 = vld [vmem:[%s11 + $0x29c] sm:$0xf]
      %v3700 = vld [vmem:[%s11 + $0x2a0] sm:$0xff]
      %v3701 = vld [vmem:[%s11 + $0x2a8] sm:$0xff]
      %v3702 = vld [vmem:[%s11 + $0x2b0] sm:$0xff]
      %v3703 = vld [vmem:[%s11 + $0x2b8] sm:$0xf]
      %v3704 = vld [vmem:[%s11 + $0x2bc] sm:$0xff]
      %v3705 = vld [vmem:[%s11 + $0x2c4] sm:$0xff]
      %v3706 = vld [vmem:[%s11 + $0x2cc] sm:$0xff]
      %v3707 = vld [vmem:[%s11 + $0x2d4] sm:$0xf]
      %v3708 = vld [vmem:[%s11 + $0x2d8] sm:$0xff]
      %v3709 = vld [vmem:[%s11 + $0x2e0] sm:$0xff]
      %v3710 = vld [vmem:[%s11 + $0x2e8] sm:$0xff]
      %v3711 = vld [vmem:[%s11 + $0x2f0] sm:$0xf]
      %v3712 = vld [vmem:[%s11 + $0x2f4] sm:$0xff]
      %v3713 = vld [vmem:[%s11 + $0x2fc] sm:$0xff]
      %v3714 = vld [vmem:[%s11 + $0x304] sm:$0xff]
      %v3715 = vld [vmem:[%s11 + $0x30c] sm:$0xf]
      %v3716 = vld [vmem:[%s11 + $0x310] sm:$0xff]
      %v3717 = vld [vmem:[%s11 + $0x318] sm:$0xff]
      %v3718 = vld [vmem:[%s11 + $0x320] sm:$0xff]
      %v3719 = vld [vmem:[%s11 + $0x328] sm:$0xf]
      %v3720 = vld [vmem:[%s11 + $0x32c] sm:$0xff]
      %v3721 = vld [vmem:[%s11 + $0x334] sm:$0xff]
      %v3722 = vld [vmem:[%s11 + $0x33c] sm:$0xff]
      %v3723 = vld [vmem:[%s11 + $0x344] sm:$0xf]
      %v3724 = vld [vmem:[%s11 + $0x348] sm:$0xff]
      %v3725 = vld [vmem:[%s11 + $0x350] sm:$0xff]
      %v3726 = vld [vmem:[%s11 + $0x358] sm:$0xff]
      %v3727 = vld [vmem:[%s11 + $0x360] sm:$0xf]
      %v3728 = vld [vmem:[%s11 + $0x364] sm:$0xff]
      %v3729 = vld [vmem:[%s11 + $0x36c] sm:$0xff]
      %v3730 = vld [vmem:[%s11 + $0x374] sm:$0xff]
      %v3731 = vld [vmem:[%s11 + $0x37c] sm:$0xf]
      %v3732 = vld [vmem:[%s12] sm:$0x7f]
      %v3734 = vlaneseq
      %v3735 = vshrl.u32 %v3734, 7
      %v3736 = vsub.s32 0, %v3735
      %v3737 = vrot.slane %v3732, %v3736
      %v3738 = vlaneseq
      %v3739 = vshrl.u32 %v3738, 7
      %v3740 = vsub.s32 1, %v3739
      %v3741 = vrot.slane %v3732, %v3740
      %v3742 = vlaneseq
      %v3743 = vshrl.u32 %v3742, 7
      %v3744 = vsub.s32 2, %v3743
      %v3745 = vrot.slane %v3732, %v3744
      %v3746 = vlaneseq
      %v3747 = vshrl.u32 %v3746, 7
      %v3748 = vsub.s32 3, %v3747
      %v3749 = vrot.slane %v3732, %v3748
      %v3750 = vlaneseq
      %v3751 = vshrl.u32 %v3750, 7
      %v3752 = vsub.s32 4, %v3751
      %v3753 = vrot.slane %v3732, %v3752
      %v3754 = vlaneseq
      %v3755 = vshrl.u32 %v3754, 7
      %v3756 = vsub.s32 5, %v3755
      %v3757 = vrot.slane %v3732, %v3756
      %v3758 = vlaneseq
      %v3759 = vshrl.u32 %v3758, 7
      %v3760 = vsub.s32 6, %v3759
      %v3761 = vrot.slane %v3732, %v3760
      %v3897 = vunpack.c.l.b16 %v3604
      %v3898 = vunpack.c.h.b16 %v3604
      %v3899 = vunpack.c.l.b16 %v3605
      %v3900 = vunpack.c.h.b16 %v3605
      %v3901 = vunpack.c.l.b16 %v3606
      %v3902 = vunpack.c.h.b16 %v3606
      %v3903 = vunpack.c.l.b16 %v3607
      %v3904 = vunpack.c.l.b16 %v3608
      %v3905 = vunpack.c.h.b16 %v3608
      %v3906 = vunpack.c.l.b16 %v3609
      %v3907 = vunpack.c.h.b16 %v3609
      %v3908 = vunpack.c.l.b16 %v3610
      %v3909 = vunpack.c.h.b16 %v3610
      %v3910 = vunpack.c.l.b16 %v3611
      %v3911 = vunpack.c.l.b16 %v3612
      %v3912 = vunpack.c.h.b16 %v3612
      %v3913 = vunpack.c.l.b16 %v3613
      %v3914 = vunpack.c.h.b16 %v3613
      %v3915 = vunpack.c.l.b16 %v3614
      %v3916 = vunpack.c.h.b16 %v3614
      %v3917 = vunpack.c.l.b16 %v3615
      %v3918 = vunpack.c.l.b16 %v3616
      %v3919 = vunpack.c.h.b16 %v3616
      %v3920 = vunpack.c.l.b16 %v3617
      %v3921 = vunpack.c.h.b16 %v3617
      %v3922 = vunpack.c.l.b16 %v3618
      %v3923 = vunpack.c.h.b16 %v3618
      %v3924 = vunpack.c.l.b16 %v3619
      %v3925 = vunpack.c.l.b16 %v3620
      %v3926 = vunpack.c.h.b16 %v3620
      %v3927 = vunpack.c.l.b16 %v3621
      %v3928 = vunpack.c.h.b16 %v3621
      %v3929 = vunpack.c.l.b16 %v3622
      %v3930 = vunpack.c.h.b16 %v3622
      %v3931 = vunpack.c.l.b16 %v3623
      %v3932 = vunpack.c.l.b16 %v3624
      %v3933 = vunpack.c.h.b16 %v3624
      %v3934 = vunpack.c.l.b16 %v3625
      %v3935 = vunpack.c.h.b16 %v3625
      %v3936 = vunpack.c.l.b16 %v3626
      %v3937 = vunpack.c.h.b16 %v3626
      %v3938 = vunpack.c.l.b16 %v3627
      %v3939 = vunpack.c.l.b16 %v3628
      %v3940 = vunpack.c.h.b16 %v3628
      %v3941 = vunpack.c.l.b16 %v3629
      %v3942 = vunpack.c.h.b16 %v3629
      %v3943 = vunpack.c.l.b16 %v3630
      %v3944 = vunpack.c.h.b16 %v3630
      %v3945 = vunpack.c.l.b16 %v3631
      %v3946 = vunpack.c.l.b16 %v3632
      %v3947 = vunpack.c.h.b16 %v3632
      %v3948 = vunpack.c.l.b16 %v3633
      %v3949 = vunpack.c.h.b16 %v3633
      %v3950 = vunpack.c.l.b16 %v3634
      %v3951 = vunpack.c.h.b16 %v3634
      %v3952 = vunpack.c.l.b16 %v3635
      %v3953 = vunpack.c.l.b16 %v3636
      %v3954 = vunpack.c.h.b16 %v3636
      %v3955 = vunpack.c.l.b16 %v3637
      %v3956 = vunpack.c.h.b16 %v3637
      %v3957 = vunpack.c.l.b16 %v3638
      %v3958 = vunpack.c.h.b16 %v3638
      %v3959 = vunpack.c.l.b16 %v3639
      %v3960 = vunpack.c.l.b16 %v3640
      %v3961 = vunpack.c.h.b16 %v3640
      %v3962 = vunpack.c.l.b16 %v3641
      %v3963 = vunpack.c.h.b16 %v3641
      %v3964 = vunpack.c.l.b16 %v3642
      %v3965 = vunpack.c.h.b16 %v3642
      %v3966 = vunpack.c.l.b16 %v3643
      %v3967 = vunpack.c.l.b16 %v3644
      %v3968 = vunpack.c.h.b16 %v3644
      %v3969 = vunpack.c.l.b16 %v3645
      %v3970 = vunpack.c.h.b16 %v3645
      %v3971 = vunpack.c.l.b16 %v3646
      %v3972 = vunpack.c.h.b16 %v3646
      %v3973 = vunpack.c.l.b16 %v3647
      %v3974 = vunpack.c.l.b16 %v3648
      %v3975 = vunpack.c.h.b16 %v3648
      %v3976 = vunpack.c.l.b16 %v3649
      %v3977 = vunpack.c.h.b16 %v3649
      %v3978 = vunpack.c.l.b16 %v3650
      %v3979 = vunpack.c.h.b16 %v3650
      %v3980 = vunpack.c.l.b16 %v3651
      %v3981 = vunpack.c.l.b16 %v3652
      %v3982 = vunpack.c.h.b16 %v3652
      %v3983 = vunpack.c.l.b16 %v3653
      %v3984 = vunpack.c.h.b16 %v3653
      %v3985 = vunpack.c.l.b16 %v3654
      %v3986 = vunpack.c.h.b16 %v3654
      %v3987 = vunpack.c.l.b16 %v3655
      %v3988 = vunpack.c.l.b16 %v3656
      %v3989 = vunpack.c.h.b16 %v3656
      %v3990 = vunpack.c.l.b16 %v3657
      %v3991 = vunpack.c.h.b16 %v3657
      %v3992 = vunpack.c.l.b16 %v3658
      %v3993 = vunpack.c.h.b16 %v3658
      %v3994 = vunpack.c.l.b16 %v3659
      %v3995 = vunpack.c.l.b16 %v3660
      %v3996 = vunpack.c.h.b16 %v3660
      %v3997 = vunpack.c.l.b16 %v3661
      %v3998 = vunpack.c.h.b16 %v3661
      %v3999 = vunpack.c.l.b16 %v3662
      %v4000 = vunpack.c.h.b16 %v3662
      %v4001 = vunpack.c.l.b16 %v3663
      %v4002 = vunpack.c.l.b16 %v3664
      %v4003 = vunpack.c.h.b16 %v3664
      %v4004 = vunpack.c.l.b16 %v3665
      %v4005 = vunpack.c.h.b16 %v3665
      %v4006 = vunpack.c.l.b16 %v3666
      %v4007 = vunpack.c.h.b16 %v3666
      %v4008 = vunpack.c.l.b16 %v3667
      %v4009 = vunpack.c.l.b16 %v3668
      %v4010 = vunpack.c.h.b16 %v3668
      %v4011 = vunpack.c.l.b16 %v3669
      %v4012 = vunpack.c.h.b16 %v3669
      %v4013 = vunpack.c.l.b16 %v3670
      %v4014 = vunpack.c.h.b16 %v3670
      %v4015 = vunpack.c.l.b16 %v3671
      %v4016 = vunpack.c.l.b16 %v3672
      %v4017 = vunpack.c.h.b16 %v3672
      %v4018 = vunpack.c.l.b16 %v3673
      %v4019 = vunpack.c.h.b16 %v3673
      %v4020 = vunpack.c.l.b16 %v3674
      %v4021 = vunpack.c.h.b16 %v3674
      %v4022 = vunpack.c.l.b16 %v3675
      %v4023 = vunpack.c.l.b16 %v3676
      %v4024 = vunpack.c.h.b16 %v3676
      %v4025 = vunpack.c.l.b16 %v3677
      %v4026 = vunpack.c.h.b16 %v3677
      %v4027 = vunpack.c.l.b16 %v3678
      %v4028 = vunpack.c.h.b16 %v3678
      %v4029 = vunpack.c.l.b16 %v3679
      %v4030 = vunpack.c.l.b16 %v3680
      %v4031 = vunpack.c.h.b16 %v3680
      %v4032 = vunpack.c.l.b16 %v3681
      %v4033 = vunpack.c.h.b16 %v3681
      %v4034 = vunpack.c.l.b16 %v3682
      %v4035 = vunpack.c.h.b16 %v3682
      %v4036 = vunpack.c.l.b16 %v3683
      %v4037 = vunpack.c.l.b16 %v3684
      %v4038 = vunpack.c.h.b16 %v3684
      %v4039 = vunpack.c.l.b16 %v3685
      %v4040 = vunpack.c.h.b16 %v3685
      %v4041 = vunpack.c.l.b16 %v3686
      %v4042 = vunpack.c.h.b16 %v3686
      %v4043 = vunpack.c.l.b16 %v3687
      %v4044 = vunpack.c.l.b16 %v3688
      %v4045 = vunpack.c.h.b16 %v3688
      %v4046 = vunpack.c.l.b16 %v3689
      %v4047 = vunpack.c.h.b16 %v3689
      %v4048 = vunpack.c.l.b16 %v3690
      %v4049 = vunpack.c.h.b16 %v3690
      %v4050 = vunpack.c.l.b16 %v3691
      %v4051 = vunpack.c.l.b16 %v3692
      %v4052 = vunpack.c.h.b16 %v3692
      %v4053 = vunpack.c.l.b16 %v3693
      %v4054 = vunpack.c.h.b16 %v3693
      %v4055 = vunpack.c.l.b16 %v3694
      %v4056 = vunpack.c.h.b16 %v3694
      %v4057 = vunpack.c.l.b16 %v3695
      %v4058 = vunpack.c.l.b16 %v3696
      %v4059 = vunpack.c.h.b16 %v3696
      %v4060 = vunpack.c.l.b16 %v3697
      %v4061 = vunpack.c.h.b16 %v3697
      %v4062 = vunpack.c.l.b16 %v3698
      %v4063 = vunpack.c.h.b16 %v3698
      %v4064 = vunpack.c.l.b16 %v3699
      %v4065 = vunpack.c.l.b16 %v3700
      %v4066 = vunpack.c.h.b16 %v3700
      %v4067 = vunpack.c.l.b16 %v3701
      %v4068 = vunpack.c.h.b16 %v3701
      %v4069 = vunpack.c.l.b16 %v3702
      %v4070 = vunpack.c.h.b16 %v3702
      %v4071 = vunpack.c.l.b16 %v3703
      %v4072 = vunpack.c.l.b16 %v3704
      %v4073 = vunpack.c.h.b16 %v3704
      %v4074 = vunpack.c.l.b16 %v3705
      %v4075 = vunpack.c.h.b16 %v3705
      %v4076 = vunpack.c.l.b16 %v3706
      %v4077 = vunpack.c.h.b16 %v3706
      %v4078 = vunpack.c.l.b16 %v3707
      %v4079 = vunpack.c.l.b16 %v3708
      %v4080 = vunpack.c.h.b16 %v3708
      %v4081 = vunpack.c.l.b16 %v3709
      %v4082 = vunpack.c.h.b16 %v3709
      %v4083 = vunpack.c.l.b16 %v3710
      %v4084 = vunpack.c.h.b16 %v3710
      %v4085 = vunpack.c.l.b16 %v3711
      %v4086 = vunpack.c.l.b16 %v3712
      %v4087 = vunpack.c.h.b16 %v3712
      %v4088 = vunpack.c.l.b16 %v3713
      %v4089 = vunpack.c.h.b16 %v3713
      %v4090 = vunpack.c.l.b16 %v3714
      %v4091 = vunpack.c.h.b16 %v3714
      %v4092 = vunpack.c.l.b16 %v3715
      %v4093 = vunpack.c.l.b16 %v3716
      %v4094 = vunpack.c.h.b16 %v3716
      %v4095 = vunpack.c.l.b16 %v3717
      %v4096 = vunpack.c.h.b16 %v3717
      %v4097 = vunpack.c.l.b16 %v3718
      %v4098 = vunpack.c.h.b16 %v3718
      %v4099 = vunpack.c.l.b16 %v3719
      %v4100 = vunpack.c.l.b16 %v3720
      %v4101 = vunpack.c.h.b16 %v3720
      %v4102 = vunpack.c.l.b16 %v3721
      %v4103 = vunpack.c.h.b16 %v3721
      %v4104 = vunpack.c.l.b16 %v3722
      %v4105 = vunpack.c.h.b16 %v3722
      %v4106 = vunpack.c.l.b16 %v3723
      %v4107 = vunpack.c.l.b16 %v3724
      %v4108 = vunpack.c.h.b16 %v3724
      %v4109 = vunpack.c.l.b16 %v3725
      %v4110 = vunpack.c.h.b16 %v3725
      %v4111 = vunpack.c.l.b16 %v3726
      %v4112 = vunpack.c.h.b16 %v3726
      %v4113 = vunpack.c.l.b16 %v3727
      %v4114 = vunpack.c.l.b16 %v3728
      %v4115 = vunpack.c.h.b16 %v3728
      %v4116 = vunpack.c.l.b16 %v3729
      %v4117 = vunpack.c.h.b16 %v3729
      %v4118 = vunpack.c.l.b16 %v3730
      %v4119 = vunpack.c.h.b16 %v3730
      %v4120 = vunpack.c.l.b16 %v3731
      %v4121 = vpack.c.b16 %v3904, %v3897
      %v4122 = vpack.c.b16 %v3905, %v3898
      %v4123 = vpack.c.b16 %v3906, %v3899
      %v4124 = vpack.c.b16 %v3907, %v3900
      %v4125 = vpack.c.b16 %v3908, %v3901
      %v4126 = vpack.c.b16 %v3909, %v3902
      %v4127 = vpack.c.b16 %v3910, %v3903
      %v4128 = vpack.c.b16 %v3918, %v3911
      %v4129 = vpack.c.b16 %v3919, %v3912
      %v4130 = vpack.c.b16 %v3920, %v3913
      %v4131 = vpack.c.b16 %v3921, %v3914
      %v4132 = vpack.c.b16 %v3922, %v3915
      %v4133 = vpack.c.b16 %v3923, %v3916
      %v4134 = vpack.c.b16 %v3924, %v3917
      %v4135 = vpack.c.b16 %v3932, %v3925
      %v4136 = vpack.c.b16 %v3933, %v3926
      %v4137 = vpack.c.b16 %v3934, %v3927
      %v4138 = vpack.c.b16 %v3935, %v3928
      %v4139 = vpack.c.b16 %v3936, %v3929
      %v4140 = vpack.c.b16 %v3937, %v3930
      %v4141 = vpack.c.b16 %v3938, %v3931
      %v4142 = vpack.c.b16 %v3946, %v3939
      %v4143 = vpack.c.b16 %v3947, %v3940
      %v4144 = vpack.c.b16 %v3948, %v3941
      %v4145 = vpack.c.b16 %v3949, %v3942
      %v4146 = vpack.c.b16 %v3950, %v3943
      %v4147 = vpack.c.b16 %v3951, %v3944
      %v4148 = vpack.c.b16 %v3952, %v3945
      %v4149 = vpack.c.b16 %v3960, %v3953
      %v4150 = vpack.c.b16 %v3961, %v3954
      %v4151 = vpack.c.b16 %v3962, %v3955
      %v4152 = vpack.c.b16 %v3963, %v3956
      %v4153 = vpack.c.b16 %v3964, %v3957
      %v4154 = vpack.c.b16 %v3965, %v3958
      %v4155 = vpack.c.b16 %v3966, %v3959
      %v4156 = vpack.c.b16 %v3974, %v3967
      %v4157 = vpack.c.b16 %v3975, %v3968
      %v4158 = vpack.c.b16 %v3976, %v3969
      %v4159 = vpack.c.b16 %v3977, %v3970
      %v4160 = vpack.c.b16 %v3978, %v3971
      %v4161 = vpack.c.b16 %v3979, %v3972
      %v4162 = vpack.c.b16 %v3980, %v3973
      %v4163 = vpack.c.b16 %v3988, %v3981
      %v4164 = vpack.c.b16 %v3989, %v3982
      %v4165 = vpack.c.b16 %v3990, %v3983
      %v4166 = vpack.c.b16 %v3991, %v3984
      %v4167 = vpack.c.b16 %v3992, %v3985
      %v4168 = vpack.c.b16 %v3993, %v3986
      %v4169 = vpack.c.b16 %v3994, %v3987
      %v4170 = vpack.c.b16 %v4002, %v3995
      %v4171 = vpack.c.b16 %v4003, %v3996
      %v4172 = vpack.c.b16 %v4004, %v3997
      %v4173 = vpack.c.b16 %v4005, %v3998
      %v4174 = vpack.c.b16 %v4006, %v3999
      %v4175 = vpack.c.b16 %v4007, %v4000
      %v4176 = vpack.c.b16 %v4008, %v4001
      %v4177 = vpack.c.b16 %v4016, %v4009
      %v4178 = vpack.c.b16 %v4017, %v4010
      %v4179 = vpack.c.b16 %v4018, %v4011
      %v4180 = vpack.c.b16 %v4019, %v4012
      %v4181 = vpack.c.b16 %v4020, %v4013
      %v4182 = vpack.c.b16 %v4021, %v4014
      %v4183 = vpack.c.b16 %v4022, %v4015
      %v4184 = vpack.c.b16 %v4030, %v4023
      %v4185 = vpack.c.b16 %v4031, %v4024
      %v4186 = vpack.c.b16 %v4032, %v4025
      %v4187 = vpack.c.b16 %v4033, %v4026
      %v4188 = vpack.c.b16 %v4034, %v4027
      %v4189 = vpack.c.b16 %v4035, %v4028
      %v4190 = vpack.c.b16 %v4036, %v4029
      %v4191 = vpack.c.b16 %v4044, %v4037
      %v4192 = vpack.c.b16 %v4045, %v4038
      %v4193 = vpack.c.b16 %v4046, %v4039
      %v4194 = vpack.c.b16 %v4047, %v4040
      %v4195 = vpack.c.b16 %v4048, %v4041
      %v4196 = vpack.c.b16 %v4049, %v4042
      %v4197 = vpack.c.b16 %v4050, %v4043
      %v4198 = vpack.c.b16 %v4058, %v4051
      %v4199 = vpack.c.b16 %v4059, %v4052
      %v4200 = vpack.c.b16 %v4060, %v4053
      %v4201 = vpack.c.b16 %v4061, %v4054
      %v4202 = vpack.c.b16 %v4062, %v4055
      %v4203 = vpack.c.b16 %v4063, %v4056
      %v4204 = vpack.c.b16 %v4064, %v4057
      %v4205 = vpack.c.b16 %v4072, %v4065
      %v4206 = vpack.c.b16 %v4073, %v4066
      %v4207 = vpack.c.b16 %v4074, %v4067
      %v4208 = vpack.c.b16 %v4075, %v4068
      %v4209 = vpack.c.b16 %v4076, %v4069
      %v4210 = vpack.c.b16 %v4077, %v4070
      %v4211 = vpack.c.b16 %v4078, %v4071
      %v4212 = vpack.c.b16 %v4086, %v4079
      %v4213 = vpack.c.b16 %v4087, %v4080
      %v4214 = vpack.c.b16 %v4088, %v4081
      %v4215 = vpack.c.b16 %v4089, %v4082
      %v4216 = vpack.c.b16 %v4090, %v4083
      %v4217 = vpack.c.b16 %v4091, %v4084
      %v4218 = vpack.c.b16 %v4092, %v4085
      %v4219 = vpack.c.b16 %v4100, %v4093
      %v4220 = vpack.c.b16 %v4101, %v4094
      %v4221 = vpack.c.b16 %v4102, %v4095
      %v4222 = vpack.c.b16 %v4103, %v4096
      %v4223 = vpack.c.b16 %v4104, %v4097
      %v4224 = vpack.c.b16 %v4105, %v4098
      %v4225 = vpack.c.b16 %v4106, %v4099
      %v4226 = vpack.c.b16 %v4114, %v4107
      %v4227 = vpack.c.b16 %v4115, %v4108
      %v4228 = vpack.c.b16 %v4116, %v4109
      %v4229 = vpack.c.b16 %v4117, %v4110
      %v4230 = vpack.c.b16 %v4118, %v4111
      %v4231 = vpack.c.b16 %v4119, %v4112
      %v4232 = vpack.c.b16 %v4120, %v4113
      %4345 = vmatprep.subr.bf16.mxu0 %v4122
      %4346 = vmatpush1.bf16.msra.mxu0 %v4121
      %4347 = vmatprep.subr.bf16.mxu0 %v4129
      %4348 = vmatpush1.bf16.msra.mxu0 %v4128
      %4349 = vmatprep.subr.bf16.mxu0 %v4136
      %4350 = vmatpush1.bf16.msra.mxu0 %v4135
      %4351 = vmatprep.subr.bf16.mxu0 %v4143
      %4352 = vmatpush1.bf16.msra.mxu0 %v4142
      %4353 = vmatprep.subr.bf16.mxu0 %v4150
      %4354 = vmatpush1.bf16.msra.mxu0 %v4149
      %4355 = vmatprep.subr.bf16.mxu0 %v4157
      %4356 = vmatpush1.bf16.msra.mxu0 %v4156
      %4357 = vmatprep.subr.bf16.mxu0 %v4164
      %4358 = vmatpush1.bf16.msra.mxu0 %v4163
      %4359 = vmatprep.subr.bf16.mxu0 %v4171
      %4360 = vmatpush1.bf16.msra.mxu0 %v4170
      %4361 = vmatprep.subr.bf16.mxu0 %v4178
      %4362 = vmatpush1.bf16.msra.mxu0 %v4177
      %4363 = vmatprep.subr.bf16.mxu0 %v4185
      %4364 = vmatpush1.bf16.msra.mxu0 %v4184
      %4365 = vmatprep.subr.bf16.mxu0 %v4192
      %4366 = vmatpush1.bf16.msra.mxu0 %v4191
      %4367 = vmatprep.subr.bf16.mxu0 %v4199
      %4368 = vmatpush1.bf16.msra.mxu0 %v4198
      %4369 = vmatprep.subr.bf16.mxu0 %v4206
      %4370 = vmatpush1.bf16.msra.mxu0 %v4205
      %4371 = vmatprep.subr.bf16.mxu0 %v4213
      %4372 = vmatpush1.bf16.msra.mxu0 %v4212
      %4373 = vmatprep.subr.bf16.mxu0 %v4220
      %4374 = vmatpush1.bf16.msra.mxu0 %v4219
      %4375 = vmatprep.subr.bf16.mxu0 %v4227
      %4376 = vmatpush1.bf16.msra.mxu0 %v4226
      %4377 = vmatprep.mubr.bf16.mxu0 %v3573
      %4378 = vmatmul.mubr.bf16.gmra.mrb[0].mxu0 %v3572
      %v4379 = vpop.f32.mrb[0].mxu0
      %v4380 = vadd.f32 %v3737, %v4379
      %v4381 = vpop.f32.mrb[0].mxu0
      %v4382 = vadd.f32 %v3741, %v4381
      %v4383 = vpop.f32.mrb[0].mxu0
      %v4384 = vadd.f32 %v3737, %v4383
      %v4385 = vpop.f32.mrb[0].mxu0
      %v4386 = vadd.f32 %v3741, %v4385
      %4387 = vmatprep.mubr.bf16.mxu0 %v3575
      %4388 = vmatmul.mubr.bf16.gmra.mrb[0].mxu0 %v3574
      %v4389 = vpop.f32.mrb[0].mxu0
      %v4390 = vadd.f32 %v3737, %v4389
      %v4391 = vpop.f32.mrb[0].mxu0
      %v4392 = vadd.f32 %v3741, %v4391
      %v4393 = vpop.f32.mrb[0].mxu0
      %v4394 = vadd.f32 %v3737, %v4393
      %v4395 = vpop.f32.mrb[0].mxu0
      %v4396 = vadd.f32 %v3741, %v4395
      %4397 = vmatprep.mubr.bf16.mxu0 %v3577
      %4398 = vmatmul.mubr.bf16.gmra.mrb[0].mxu0 %v3576
      %v4399 = vpop.f32.mrb[0].mxu0
      %v4400 = vadd.f32 %v3737, %v4399
      %v4401 = vpop.f32.mrb[0].mxu0
      %v4402 = vadd.f32 %v3741, %v4401
      %v4403 = vpop.f32.mrb[0].mxu0
      %v4404 = vadd.f32 %v3737, %v4403
      %v4405 = vpop.f32.mrb[0].mxu0
      %v4406 = vadd.f32 %v3741, %v4405
      %4407 = vmatprep.mubr.bf16.mxu0 %v3579
      %4408 = vmatmul.mubr.bf16.gmra.mrb[0].mxu0 %v3578
      %v4409 = vpop.f32.mrb[0].mxu0
      %v4410 = vadd.f32 %v3737, %v4409
      %v4411 = vpop.f32.mrb[0].mxu0
      %v4412 = vadd.f32 %v3741, %v4411
      %v4413 = vpop.f32.mrb[0].mxu0
      %v4414 = vadd.f32 %v3737, %v4413
      %v4415 = vpop.f32.mrb[0].mxu0
      %v4416 = vadd.f32 %v3741, %v4415
      %4417 = vmatprep.mubr.bf16.mxu0 %v3581
      %4418 = vmatmul.mubr.bf16.gmra.mrb[0].mxu0 %v3580
      %v4419 = vpop.f32.mrb[0].mxu0
      %v4420 = vadd.f32 %v3737, %v4419
      %v4421 = vpop.f32.mrb[0].mxu0
      %v4422 = vadd.f32 %v3741, %v4421
      %v4423 = vpop.f32.mrb[0].mxu0
      %v4424 = vadd.f32 %v3737, %v4423
      %v4425 = vpop.f32.mrb[0].mxu0
      %v4426 = vadd.f32 %v3741, %v4425
      %4427 = vmatprep.mubr.bf16.mxu0 %v3583
      %4428 = vmatmul.mubr.bf16.gmra.mrb[0].mxu0 %v3582
      %v4429 = vpop.f32.mrb[0].mxu0
      %v4430 = vadd.f32 %v3737, %v4429
      %v4431 = vpop.f32.mrb[0].mxu0
      %v4432 = vadd.f32 %v3741, %v4431
      %v4433 = vpop.f32.mrb[0].mxu0
      %v4434 = vadd.f32 %v3737, %v4433
      %v4435 = vpop.f32.mrb[0].mxu0
      %v4436 = vadd.f32 %v3741, %v4435
      %4437 = vmatprep.mubr.bf16.mxu0 %v3585
      %4438 = vmatmul.mubr.bf16.gmra.mrb[0].mxu0 %v3584
      %v4439 = vpop.f32.mrb[0].mxu0
      %v4440 = vadd.f32 %v3737, %v4439
      %v4441 = vpop.f32.mrb[0].mxu0
      %v4442 = vadd.f32 %v3741, %v4441
      %v4443 = vpop.f32.mrb[0].mxu0
      %v4444 = vadd.f32 %v3737, %v4443
      %v4445 = vpop.f32.mrb[0].mxu0
      %v4446 = vadd.f32 %v3741, %v4445
      %4447 = vmatprep.mubr.bf16.mxu0 %v3587
      %4448 = vmatmul.mubr.bf16.gmra.mrb[0].mxu0 %v3586
      %v4449 = vpop.f32.mrb[0].mxu0
      %v4450 = vadd.f32 %v3737, %v4449
      %v4451 = vpop.f32.mrb[0].mxu0
      %v4452 = vadd.f32 %v3741, %v4451
      %v4453 = vpop.f32.mrb[0].mxu0
      %v4454 = vadd.f32 %v3737, %v4453
      %v4455 = vpop.f32.mrb[0].mxu0
      %v4456 = vadd.f32 %v3741, %v4455
      %4457 = vmatprep.mubr.bf16.mxu0 %v3589
      %4458 = vmatmul.mubr.bf16.gmra.mrb[0].mxu0 %v3588
      %v4459 = vpop.f32.mrb[0].mxu0
      %v4460 = vadd.f32 %v3737, %v4459
      %v4461 = vpop.f32.mrb[0].mxu0
      %v4462 = vadd.f32 %v3741, %v4461
      %v4463 = vpop.f32.mrb[0].mxu0
      %v4464 = vadd.f32 %v3737, %v4463
      %v4465 = vpop.f32.mrb[0].mxu0
      %v4466 = vadd.f32 %v3741, %v4465
      %4467 = vmatprep.mubr.bf16.mxu0 %v3591
      %4468 = vmatmul.mubr.bf16.gmra.mrb[0].mxu0 %v3590
      %v4469 = vpop.f32.mrb[0].mxu0
      %v4470 = vadd.f32 %v3737, %v4469
      %v4471 = vpop.f32.mrb[0].mxu0
      %v4472 = vadd.f32 %v3741, %v4471
      %v4473 = vpop.f32.mrb[0].mxu0
      %v4474 = vadd.f32 %v3737, %v4473
      %v4475 = vpop.f32.mrb[0].mxu0
      %v4476 = vadd.f32 %v3741, %v4475
      %4477 = vmatprep.mubr.bf16.mxu0 %v3593
      %4478 = vmatmul.mubr.bf16.gmra.mrb[0].mxu0 %v3592
      %v4479 = vpop.f32.mrb[0].mxu0
      %v4480 = vadd.f32 %v3737, %v4479
      %v4481 = vpop.f32.mrb[0].mxu0
      %v4482 = vadd.f32 %v3741, %v4481
      %v4483 = vpop.f32.mrb[0].mxu0
      %v4484 = vadd.f32 %v3737, %v4483
      %v4485 = vpop.f32.mrb[0].mxu0
      %v4486 = vadd.f32 %v3741, %v4485
      %4487 = vmatprep.mubr.bf16.mxu0 %v3595
      %4488 = vmatmul.mubr.bf16.gmra.mrb[0].mxu0 %v3594
      %v4489 = vpop.f32.mrb[0].mxu0
      %v4490 = vadd.f32 %v3737, %v4489
      %v4491 = vpop.f32.mrb[0].mxu0
      %v4492 = vadd.f32 %v3741, %v4491
      %v4493 = vpop.f32.mrb[0].mxu0
      %v4494 = vadd.f32 %v3737, %v4493
      %v4495 = vpop.f32.mrb[0].mxu0
      %v4496 = vadd.f32 %v3741, %v4495
      %4497 = vmatprep.mubr.bf16.mxu0 %v3597
      %4498 = vmatmul.mubr.bf16.gmra.mrb[0].mxu0 %v3596
      %v4499 = vpop.f32.mrb[0].mxu0
      %v4500 = vadd.f32 %v3737, %v4499
      %v4501 = vpop.f32.mrb[0].mxu0
      %v4502 = vadd.f32 %v3741, %v4501
      %v4503 = vpop.f32.mrb[0].mxu0
      %v4504 = vadd.f32 %v3737, %v4503
      %v4505 = vpop.f32.mrb[0].mxu0
      %v4506 = vadd.f32 %v3741, %v4505
      %4507 = vmatprep.mubr.bf16.mxu0 %v3599
      %4508 = vmatmul.mubr.bf16.gmra.mrb[0].mxu0 %v3598
      %v4509 = vpop.f32.mrb[0].mxu0
      %v4510 = vadd.f32 %v3737, %v4509
      %v4511 = vpop.f32.mrb[0].mxu0
      %v4512 = vadd.f32 %v3741, %v4511
      %v4513 = vpop.f32.mrb[0].mxu0
      %v4514 = vadd.f32 %v3737, %v4513
      %v4515 = vpop.f32.mrb[0].mxu0
      %v4516 = vadd.f32 %v3741, %v4515
      %4517 = vmatprep.mubr.bf16.mxu0 %v3601
      %4518 = vmatmul.mubr.bf16.gmra.mrb[0].mxu0 %v3600
      %v4519 = vpop.f32.mrb[0].mxu0
      %v4520 = vadd.f32 %v3737, %v4519
      %v4521 = vpop.f32.mrb[0].mxu0
      %v4522 = vadd.f32 %v3741, %v4521
      %v4523 = vpop.f32.mrb[0].mxu0
      %v4524 = vadd.f32 %v3737, %v4523
      %v4525 = vpop.f32.mrb[0].mxu0
      %v4526 = vadd.f32 %v3741, %v4525
      %4527 = vmatprep.mubr.bf16.mxu0 %v3603
      %4528 = vmatmul.mubr.bf16.gmra.mrb[0].mxu0 %v3602
      %v4529 = vpop.f32.mrb[0].mxu0
      %v4530 = vadd.f32 %v3737, %v4529
      %v4531 = vpop.f32.mrb[0].mxu0
      %v4532 = vadd.f32 %v3741, %v4531
      %v4533 = vpop.f32.mrb[0].mxu0
      %v4534 = vadd.f32 %v3737, %v4533
      %v4535 = vpop.f32.mrb[0].mxu0
      %v4536 = vadd.f32 %v3741, %v4535
      %4537 = vdwg.mxu0
      %4538 = vmatprep.subr.bf16.mxu0 %v4124
      %4539 = vmatpush1.bf16.msra.mxu0 %v4123
      %4540 = vmatprep.subr.bf16.mxu0 %v4131
      %4541 = vmatpush1.bf16.msra.mxu0 %v4130
      %4542 = vmatprep.subr.bf16.mxu0 %v4138
      %4543 = vmatpush1.bf16.msra.mxu0 %v4137
      %4544 = vmatprep.subr.bf16.mxu0 %v4145
      %4545 = vmatpush1.bf16.msra.mxu0 %v4144
      %4546 = vmatprep.subr.bf16.mxu0 %v4152
      %4547 = vmatpush1.bf16.msra.mxu0 %v4151
      %4548 = vmatprep.subr.bf16.mxu0 %v4159
      %4549 = vmatpush1.bf16.msra.mxu0 %v4158
      %4550 = vmatprep.subr.bf16.mxu0 %v4166
      %4551 = vmatpush1.bf16.msra.mxu0 %v4165
      %4552 = vmatprep.subr.bf16.mxu0 %v4173
      %4553 = vmatpush1.bf16.msra.mxu0 %v4172
      %4554 = vmatprep.subr.bf16.mxu0 %v4180
      %4555 = vmatpush1.bf16.msra.mxu0 %v4179
      %4556 = vmatprep.subr.bf16.mxu0 %v4187
      %4557 = vmatpush1.bf16.msra.mxu0 %v4186
      %4558 = vmatprep.subr.bf16.mxu0 %v4194
      %4559 = vmatpush1.bf16.msra.mxu0 %v4193
      %4560 = vmatprep.subr.bf16.mxu0 %v4201
      %4561 = vmatpush1.bf16.msra.mxu0 %v4200
      %4562 = vmatprep.subr.bf16.mxu0 %v4208
      %4563 = vmatpush1.bf16.msra.mxu0 %v4207
      %4564 = vmatprep.subr.bf16.mxu0 %v4215
      %4565 = vmatpush1.bf16.msra.mxu0 %v4214
      %4566 = vmatprep.subr.bf16.mxu0 %v4222
      %4567 = vmatpush1.bf16.msra.mxu0 %v4221
      %4568 = vmatprep.subr.bf16.mxu0 %v4229
      %4569 = vmatpush1.bf16.msra.mxu0 %v4228
      %4570 = vmatprep.mubr.bf16.mxu0 %v3573
      %4571 = vmatmul.mubr.bf16.gmra.mrb[0].mxu0 %v3572
      %v4572 = vpop.f32.mrb[0].mxu0
      %v4573 = vadd.f32 %v3745, %v4572
      %v4574 = vpop.f32.mrb[0].mxu0
      %v4575 = vadd.f32 %v3749, %v4574
      %v4576 = vpop.f32.mrb[0].mxu0
      %v4577 = vadd.f32 %v3745, %v4576
      %v4578 = vpop.f32.mrb[0].mxu0
      %v4579 = vadd.f32 %v3749, %v4578
      %4580 = vmatprep.mubr.bf16.mxu0 %v3575
      %4581 = vmatmul.mubr.bf16.gmra.mrb[0].mxu0 %v3574
      %v4582 = vpop.f32.mrb[0].mxu0
      %v4583 = vadd.f32 %v3745, %v4582
      %v4584 = vpop.f32.mrb[0].mxu0
      %v4585 = vadd.f32 %v3749, %v4584
      %v4586 = vpop.f32.mrb[0].mxu0
      %v4587 = vadd.f32 %v3745, %v4586
      %v4588 = vpop.f32.mrb[0].mxu0
      %v4589 = vadd.f32 %v3749, %v4588
      %4590 = vmatprep.mubr.bf16.mxu0 %v3577
      %4591 = vmatmul.mubr.bf16.gmra.mrb[0].mxu0 %v3576
      %v4592 = vpop.f32.mrb[0].mxu0
      %v4593 = vadd.f32 %v3745, %v4592
      %v4594 = vpop.f32.mrb[0].mxu0
      %v4595 = vadd.f32 %v3749, %v4594
      %v4596 = vpop.f32.mrb[0].mxu0
      %v4597 = vadd.f32 %v3745, %v4596
      %v4598 = vpop.f32.mrb[0].mxu0
      %v4599 = vadd.f32 %v3749, %v4598
      %4600 = vmatprep.mubr.bf16.mxu0 %v3579
      %4601 = vmatmul.mubr.bf16.gmra.mrb[0].mxu0 %v3578
      %v4602 = vpop.f32.mrb[0].mxu0
      %v4603 = vadd.f32 %v3745, %v4602
      %v4604 = vpop.f32.mrb[0].mxu0
      %v4605 = vadd.f32 %v3749, %v4604
      %v4606 = vpop.f32.mrb[0].mxu0
      %v4607 = vadd.f32 %v3745, %v4606
      %v4608 = vpop.f32.mrb[0].mxu0
      %v4609 = vadd.f32 %v3749, %v4608
      %4610 = vmatprep.mubr.bf16.mxu0 %v3581
      %4611 = vmatmul.mubr.bf16.gmra.mrb[0].mxu0 %v3580
      %v4612 = vpop.f32.mrb[0].mxu0
      %v4613 = vadd.f32 %v3745, %v4612
      %v4614 = vpop.f32.mrb[0].mxu0
      %v4615 = vadd.f32 %v3749, %v4614
      %v4616 = vpop.f32.mrb[0].mxu0
      %v4617 = vadd.f32 %v3745, %v4616
      %v4618 = vpop.f32.mrb[0].mxu0
      %v4619 = vadd.f32 %v3749, %v4618
      %4620 = vmatprep.mubr.bf16.mxu0 %v3583
      %4621 = vmatmul.mubr.bf16.gmra.mrb[0].mxu0 %v3582
      %v4622 = vpop.f32.mrb[0].mxu0
      %v4623 = vadd.f32 %v3745, %v4622
      %v4624 = vpop.f32.mrb[0].mxu0
      %v4625 = vadd.f32 %v3749, %v4624
      %v4626 = vpop.f32.mrb[0].mxu0
      %v4627 = vadd.f32 %v3745, %v4626
      %v4628 = vpop.f32.mrb[0].mxu0
      %v4629 = vadd.f32 %v3749, %v4628
      %4630 = vmatprep.mubr.bf16.mxu0 %v3585
      %4631 = vmatmul.mubr.bf16.gmra.mrb[0].mxu0 %v3584
      %v4632 = vpop.f32.mrb[0].mxu0
      %v4633 = vadd.f32 %v3745, %v4632
      %v4634 = vpop.f32.mrb[0].mxu0
      %v4635 = vadd.f32 %v3749, %v4634
      %v4636 = vpop.f32.mrb[0].mxu0
      %v4637 = vadd.f32 %v3745, %v4636
      %v4638 = vpop.f32.mrb[0].mxu0
      %v4639 = vadd.f32 %v3749, %v4638
      %4640 = vmatprep.mubr.bf16.mxu0 %v3587
      %4641 = vmatmul.mubr.bf16.gmra.mrb[0].mxu0 %v3586
      %v4642 = vpop.f32.mrb[0].mxu0
      %v4643 = vadd.f32 %v3745, %v4642
      %v4644 = vpop.f32.mrb[0].mxu0
      %v4645 = vadd.f32 %v3749, %v4644
      %v4646 = vpop.f32.mrb[0].mxu0
      %v4647 = vadd.f32 %v3745, %v4646
      %v4648 = vpop.f32.mrb[0].mxu0
      %v4649 = vadd.f32 %v3749, %v4648
      %4650 = vmatprep.mubr.bf16.mxu0 %v3589
      %4651 = vmatmul.mubr.bf16.gmra.mrb[0].mxu0 %v3588
      %v4652 = vpop.f32.mrb[0].mxu0
      %v4653 = vadd.f32 %v3745, %v4652
      %v4654 = vpop.f32.mrb[0].mxu0
      %v4655 = vadd.f32 %v3749, %v4654
      %v4656 = vpop.f32.mrb[0].mxu0
      %v4657 = vadd.f32 %v3745, %v4656
      %v4658 = vpop.f32.mrb[0].mxu0
      %v4659 = vadd.f32 %v3749, %v4658
      %4660 = vmatprep.mubr.bf16.mxu0 %v3591
      %4661 = vmatmul.mubr.bf16.gmra.mrb[0].mxu0 %v3590
      %v4662 = vpop.f32.mrb[0].mxu0
      %v4663 = vadd.f32 %v3745, %v4662
      %v4664 = vpop.f32.mrb[0].mxu0
      %v4665 = vadd.f32 %v3749, %v4664
      %v4666 = vpop.f32.mrb[0].mxu0
      %v4667 = vadd.f32 %v3745, %v4666
      %v4668 = vpop.f32.mrb[0].mxu0
      %v4669 = vadd.f32 %v3749, %v4668
      %4670 = vmatprep.mubr.bf16.mxu0 %v3593
      %4671 = vmatmul.mubr.bf16.gmra.mrb[0].mxu0 %v3592
      %v4672 = vpop.f32.mrb[0].mxu0
      %v4673 = vadd.f32 %v3745, %v4672
      %v4674 = vpop.f32.mrb[0].mxu0
      %v4675 = vadd.f32 %v3749, %v4674
      %v4676 = vpop.f32.mrb[0].mxu0
      %v4677 = vadd.f32 %v3745, %v4676
      %v4678 = vpop.f32.mrb[0].mxu0
      %v4679 = vadd.f32 %v3749, %v4678
      %4680 = vmatprep.mubr.bf16.mxu0 %v3595
      %4681 = vmatmul.mubr.bf16.gmra.mrb[0].mxu0 %v3594
      %v4682 = vpop.f32.mrb[0].mxu0
      %v4683 = vadd.f32 %v3745, %v4682
      %v4684 = vpop.f32.mrb[0].mxu0
      %v4685 = vadd.f32 %v3749, %v4684
      %v4686 = vpop.f32.mrb[0].mxu0
      %v4687 = vadd.f32 %v3745, %v4686
      %v4688 = vpop.f32.mrb[0].mxu0
      %v4689 = vadd.f32 %v3749, %v4688
      %4690 = vmatprep.mubr.bf16.mxu0 %v3597
      %4691 = vmatmul.mubr.bf16.gmra.mrb[0].mxu0 %v3596
      %v4692 = vpop.f32.mrb[0].mxu0
      %v4693 = vadd.f32 %v3745, %v4692
      %v4694 = vpop.f32.mrb[0].mxu0
      %v4695 = vadd.f32 %v3749, %v4694
      %v4696 = vpop.f32.mrb[0].mxu0
      %v4697 = vadd.f32 %v3745, %v4696
      %v4698 = vpop.f32.mrb[0].mxu0
      %v4699 = vadd.f32 %v3749, %v4698
      %4700 = vmatprep.mubr.bf16.mxu0 %v3599
      %4701 = vmatmul.mubr.bf16.gmra.mrb[0].mxu0 %v3598
      %v4702 = vpop.f32.mrb[0].mxu0
      %v4703 = vadd.f32 %v3745, %v4702
      %v4704 = vpop.f32.mrb[0].mxu0
      %v4705 = vadd.f32 %v3749, %v4704
      %v4706 = vpop.f32.mrb[0].mxu0
      %v4707 = vadd.f32 %v3745, %v4706
      %v4708 = vpop.f32.mrb[0].mxu0
      %v4709 = vadd.f32 %v3749, %v4708
      %4710 = vmatprep.mubr.bf16.mxu0 %v3601
      %4711 = vmatmul.mubr.bf16.gmra.mrb[0].mxu0 %v3600
      %v4712 = vpop.f32.mrb[0].mxu0
      %v4713 = vadd.f32 %v3745, %v4712
      %v4714 = vpop.f32.mrb[0].mxu0
      %v4715 = vadd.f32 %v3749, %v4714
      %v4716 = vpop.f32.mrb[0].mxu0
      %v4717 = vadd.f32 %v3745, %v4716
      %v4718 = vpop.f32.mrb[0].mxu0
      %v4719 = vadd.f32 %v3749, %v4718
      %4720 = vmatprep.mubr.bf16.mxu0 %v3603
      %4721 = vmatmul.mubr.bf16.gmra.mrb[0].mxu0 %v3602
      %v4722 = vpop.f32.mrb[0].mxu0
      %v4723 = vadd.f32 %v3745, %v4722
      %v4724 = vpop.f32.mrb[0].mxu0
      %v4725 = vadd.f32 %v3749, %v4724
      %v4726 = vpop.f32.mrb[0].mxu0
      %v4727 = vadd.f32 %v3745, %v4726
      %v4728 = vpop.f32.mrb[0].mxu0
      %v4729 = vadd.f32 %v3749, %v4728
      %4730 = vdwg.mxu0
      %4731 = vmatprep.subr.bf16.mxu0 %v4126
      %4732 = vmatpush1.bf16.msra.mxu0 %v4125
      %4733 = vmatprep.subr.bf16.mxu0 %v4133
      %4734 = vmatpush1.bf16.msra.mxu0 %v4132
      %4735 = vmatprep.subr.bf16.mxu0 %v4140
      %4736 = vmatpush1.bf16.msra.mxu0 %v4139
      %4737 = vmatprep.subr.bf16.mxu0 %v4147
      %4738 = vmatpush1.bf16.msra.mxu0 %v4146
      %4739 = vmatprep.subr.bf16.mxu0 %v4154
      %4740 = vmatpush1.bf16.msra.mxu0 %v4153
      %4741 = vmatprep.subr.bf16.mxu0 %v4161
      %4742 = vmatpush1.bf16.msra.mxu0 %v4160
      %4743 = vmatprep.subr.bf16.mxu0 %v4168
      %4744 = vmatpush1.bf16.msra.mxu0 %v4167
      %4745 = vmatprep.subr.bf16.mxu0 %v4175
      %4746 = vmatpush1.bf16.msra.mxu0 %v4174
      %4747 = vmatprep.subr.bf16.mxu0 %v4182
      %4748 = vmatpush1.bf16.msra.mxu0 %v4181
      %4749 = vmatprep.subr.bf16.mxu0 %v4189
      %4750 = vmatpush1.bf16.msra.mxu0 %v4188
      %4751 = vmatprep.subr.bf16.mxu0 %v4196
      %4752 = vmatpush1.bf16.msra.mxu0 %v4195
      %4753 = vmatprep.subr.bf16.mxu0 %v4203
      %4754 = vmatpush1.bf16.msra.mxu0 %v4202
      %4755 = vmatprep.subr.bf16.mxu0 %v4210
      %4756 = vmatpush1.bf16.msra.mxu0 %v4209
      %4757 = vmatprep.subr.bf16.mxu0 %v4217
      %4758 = vmatpush1.bf16.msra.mxu0 %v4216
      %4759 = vmatprep.subr.bf16.mxu0 %v4224
      %4760 = vmatpush1.bf16.msra.mxu0 %v4223
      %4761 = vmatprep.subr.bf16.mxu0 %v4231
      %4762 = vmatpush1.bf16.msra.mxu0 %v4230
      %4763 = vmatprep.mubr.bf16.mxu0 %v3573
      %4764 = vmatmul.mubr.bf16.gmra.mrb[0].mxu0 %v3572
      %v4765 = vpop.f32.mrb[0].mxu0
      %v4766 = vadd.f32 %v3753, %v4765
      %v4767 = vpop.f32.mrb[0].mxu0
      %v4768 = vadd.f32 %v3757, %v4767
      %v4769 = vpop.f32.mrb[0].mxu0
      %v4770 = vadd.f32 %v3753, %v4769
      %v4771 = vpop.f32.mrb[0].mxu0
      %v4772 = vadd.f32 %v3757, %v4771
      %4773 = vmatprep.mubr.bf16.mxu0 %v3575
      %4774 = vmatmul.mubr.bf16.gmra.mrb[0].mxu0 %v3574
      %v4775 = vpop.f32.mrb[0].mxu0
      %v4776 = vadd.f32 %v3753, %v4775
      %v4777 = vpop.f32.mrb[0].mxu0
      %v4778 = vadd.f32 %v3757, %v4777
      %v4779 = vpop.f32.mrb[0].mxu0
      %v4780 = vadd.f32 %v3753, %v4779
      %v4781 = vpop.f32.mrb[0].mxu0
      %v4782 = vadd.f32 %v3757, %v4781
      %4783 = vmatprep.mubr.bf16.mxu0 %v3577
      %4784 = vmatmul.mubr.bf16.gmra.mrb[0].mxu0 %v3576
      %v4785 = vpop.f32.mrb[0].mxu0
      %v4786 = vadd.f32 %v3753, %v4785
      %v4787 = vpop.f32.mrb[0].mxu0
      %v4788 = vadd.f32 %v3757, %v4787
      %v4789 = vpop.f32.mrb[0].mxu0
      %v4790 = vadd.f32 %v3753, %v4789
      %v4791 = vpop.f32.mrb[0].mxu0
      %v4792 = vadd.f32 %v3757, %v4791
      %4793 = vmatprep.mubr.bf16.mxu0 %v3579
      %4794 = vmatmul.mubr.bf16.gmra.mrb[0].mxu0 %v3578
      %v4795 = vpop.f32.mrb[0].mxu0
      %v4796 = vadd.f32 %v3753, %v4795
      %v4797 = vpop.f32.mrb[0].mxu0
      %v4798 = vadd.f32 %v3757, %v4797
      %v4799 = vpop.f32.mrb[0].mxu0
      %v4800 = vadd.f32 %v3753, %v4799
      %v4801 = vpop.f32.mrb[0].mxu0
      %v4802 = vadd.f32 %v3757, %v4801
      %4803 = vmatprep.mubr.bf16.mxu0 %v3581
      %4804 = vmatmul.mubr.bf16.gmra.mrb[0].mxu0 %v3580
      %v4805 = vpop.f32.mrb[0].mxu0
      %v4806 = vadd.f32 %v3753, %v4805
      %v4807 = vpop.f32.mrb[0].mxu0
      %v4808 = vadd.f32 %v3757, %v4807
      %v4809 = vpop.f32.mrb[0].mxu0
      %v4810 = vadd.f32 %v3753, %v4809
      %v4811 = vpop.f32.mrb[0].mxu0
      %v4812 = vadd.f32 %v3757, %v4811
      %4813 = vmatprep.mubr.bf16.mxu0 %v3583
      %4814 = vmatmul.mubr.bf16.gmra.mrb[0].mxu0 %v3582
      %v4815 = vpop.f32.mrb[0].mxu0
      %v4816 = vadd.f32 %v3753, %v4815
      %v4817 = vpop.f32.mrb[0].mxu0
      %v4818 = vadd.f32 %v3757, %v4817
      %v4819 = vpop.f32.mrb[0].mxu0
      %v4820 = vadd.f32 %v3753, %v4819
      %v4821 = vpop.f32.mrb[0].mxu0
      %v4822 = vadd.f32 %v3757, %v4821
      %4823 = vmatprep.mubr.bf16.mxu0 %v3585
      %4824 = vmatmul.mubr.bf16.gmra.mrb[0].mxu0 %v3584
      %v4825 = vpop.f32.mrb[0].mxu0
      %v4826 = vadd.f32 %v3753, %v4825
      %v4827 = vpop.f32.mrb[0].mxu0
      %v4828 = vadd.f32 %v3757, %v4827
      %v4829 = vpop.f32.mrb[0].mxu0
      %v4830 = vadd.f32 %v3753, %v4829
      %v4831 = vpop.f32.mrb[0].mxu0
      %v4832 = vadd.f32 %v3757, %v4831
      %4833 = vmatprep.mubr.bf16.mxu0 %v3587
      %4834 = vmatmul.mubr.bf16.gmra.mrb[0].mxu0 %v3586
      %v4835 = vpop.f32.mrb[0].mxu0
      %v4836 = vadd.f32 %v3753, %v4835
      %v4837 = vpop.f32.mrb[0].mxu0
      %v4838 = vadd.f32 %v3757, %v4837
      %v4839 = vpop.f32.mrb[0].mxu0
      %v4840 = vadd.f32 %v3753, %v4839
      %v4841 = vpop.f32.mrb[0].mxu0
      %v4842 = vadd.f32 %v3757, %v4841
      %4843 = vmatprep.mubr.bf16.mxu0 %v3589
      %4844 = vmatmul.mubr.bf16.gmra.mrb[0].mxu0 %v3588
      %v4845 = vpop.f32.mrb[0].mxu0
      %v4846 = vadd.f32 %v3753, %v4845
      %v4847 = vpop.f32.mrb[0].mxu0
      %v4848 = vadd.f32 %v3757, %v4847
      %v4849 = vpop.f32.mrb[0].mxu0
      %v4850 = vadd.f32 %v3753, %v4849
      %v4851 = vpop.f32.mrb[0].mxu0
      %v4852 = vadd.f32 %v3757, %v4851
      %4853 = vmatprep.mubr.bf16.mxu0 %v3591
      %4854 = vmatmul.mubr.bf16.gmra.mrb[0].mxu0 %v3590
      %v4855 = vpop.f32.mrb[0].mxu0
      %v4856 = vadd.f32 %v3753, %v4855
      %v4857 = vpop.f32.mrb[0].mxu0
      %v4858 = vadd.f32 %v3757, %v4857
      %v4859 = vpop.f32.mrb[0].mxu0
      %v4860 = vadd.f32 %v3753, %v4859
      %v4861 = vpop.f32.mrb[0].mxu0
      %v4862 = vadd.f32 %v3757, %v4861
      %4863 = vmatprep.mubr.bf16.mxu0 %v3593
      %4864 = vmatmul.mubr.bf16.gmra.mrb[0].mxu0 %v3592
      %v4865 = vpop.f32.mrb[0].mxu0
      %v4866 = vadd.f32 %v3753, %v4865
      %v4867 = vpop.f32.mrb[0].mxu0
      %v4868 = vadd.f32 %v3757, %v4867
      %v4869 = vpop.f32.mrb[0].mxu0
      %v4870 = vadd.f32 %v3753, %v4869
      %v4871 = vpop.f32.mrb[0].mxu0
      %v4872 = vadd.f32 %v3757, %v4871
      %4873 = vmatprep.mubr.bf16.mxu0 %v3595
      %4874 = vmatmul.mubr.bf16.gmra.mrb[0].mxu0 %v3594
      %v4875 = vpop.f32.mrb[0].mxu0
      %v4876 = vadd.f32 %v3753, %v4875
      %v4877 = vpop.f32.mrb[0].mxu0
      %v4878 = vadd.f32 %v3757, %v4877
      %v4879 = vpop.f32.mrb[0].mxu0
      %v4880 = vadd.f32 %v3753, %v4879
      %v4881 = vpop.f32.mrb[0].mxu0
      %v4882 = vadd.f32 %v3757, %v4881
      %4883 = vmatprep.mubr.bf16.mxu0 %v3597
      %4884 = vmatmul.mubr.bf16.gmra.mrb[0].mxu0 %v3596
      %v4885 = vpop.f32.mrb[0].mxu0
      %v4886 = vadd.f32 %v3753, %v4885
      %v4887 = vpop.f32.mrb[0].mxu0
      %v4888 = vadd.f32 %v3757, %v4887
      %v4889 = vpop.f32.mrb[0].mxu0
      %v4890 = vadd.f32 %v3753, %v4889
      %v4891 = vpop.f32.mrb[0].mxu0
      %v4892 = vadd.f32 %v3757, %v4891
      %4893 = vmatprep.mubr.bf16.mxu0 %v3599
      %4894 = vmatmul.mubr.bf16.gmra.mrb[0].mxu0 %v3598
      %v4895 = vpop.f32.mrb[0].mxu0
      %v4896 = vadd.f32 %v3753, %v4895
      %v4897 = vpop.f32.mrb[0].mxu0
      %v4898 = vadd.f32 %v3757, %v4897
      %v4899 = vpop.f32.mrb[0].mxu0
      %v4900 = vadd.f32 %v3753, %v4899
      %v4901 = vpop.f32.mrb[0].mxu0
      %v4902 = vadd.f32 %v3757, %v4901
      %4903 = vmatprep.mubr.bf16.mxu0 %v3601
      %4904 = vmatmul.mubr.bf16.gmra.mrb[0].mxu0 %v3600
      %v4905 = vpop.f32.mrb[0].mxu0
      %v4906 = vadd.f32 %v3753, %v4905
      %v4907 = vpop.f32.mrb[0].mxu0
      %v4908 = vadd.f32 %v3757, %v4907
      %v4909 = vpop.f32.mrb[0].mxu0
      %v4910 = vadd.f32 %v3753, %v4909
      %v4911 = vpop.f32.mrb[0].mxu0
      %v4912 = vadd.f32 %v3757, %v4911
      %4913 = vmatprep.mubr.bf16.mxu0 %v3603
      %4914 = vmatmul.mubr.bf16.gmra.mrb[0].mxu0 %v3602
      %v4915 = vpop.f32.mrb[0].mxu0
      %v4916 = vadd.f32 %v3753, %v4915
      %v4917 = vpop.f32.mrb[0].mxu0
      %v4918 = vadd.f32 %v3757, %v4917
      %v4919 = vpop.f32.mrb[0].mxu0
      %v4920 = vadd.f32 %v3753, %v4919
      %v4921 = vpop.f32.mrb[0].mxu0
      %v4922 = vadd.f32 %v3757, %v4921
      %4923 = vdwg.mxu0
      %4924 = vmatprep.subr.bf16.mxu0 0
      %4925 = vmatpush1.bf16.msra.mxu0 %v4127
      %4926 = vmatprep.subr.bf16.mxu0 0
      %4927 = vmatpush1.bf16.msra.mxu0 %v4134
      %4928 = vmatprep.subr.bf16.mxu0 0
      %4929 = vmatpush1.bf16.msra.mxu0 %v4141
      %4930 = vmatprep.subr.bf16.mxu0 0
      %4931 = vmatpush1.bf16.msra.mxu0 %v4148
      %4932 = vmatprep.subr.bf16.mxu0 0
      %4933 = vmatpush1.bf16.msra.mxu0 %v4155
      %4934 = vmatprep.subr.bf16.mxu0 0
      %4935 = vmatpush1.bf16.msra.mxu0 %v4162
      %4936 = vmatprep.subr.bf16.mxu0 0
      %4937 = vmatpush1.bf16.msra.mxu0 %v4169
      %4938 = vmatprep.subr.bf16.mxu0 0
      %4939 = vmatpush1.bf16.msra.mxu0 %v4176
      %4940 = vmatprep.subr.bf16.mxu0 0
      %4941 = vmatpush1.bf16.msra.mxu0 %v4183
      %4942 = vmatprep.subr.bf16.mxu0 0
      %4943 = vmatpush1.bf16.msra.mxu0 %v4190
      %4944 = vmatprep.subr.bf16.mxu0 0
      %4945 = vmatpush1.bf16.msra.mxu0 %v4197
      %4946 = vmatprep.subr.bf16.mxu0 0
      %4947 = vmatpush1.bf16.msra.mxu0 %v4204
      %4948 = vmatprep.subr.bf16.mxu0 0
      %4949 = vmatpush1.bf16.msra.mxu0 %v4211
      %4950 = vmatprep.subr.bf16.mxu0 0
      %4951 = vmatpush1.bf16.msra.mxu0 %v4218
      %4952 = vmatprep.subr.bf16.mxu0 0
      %4953 = vmatpush1.bf16.msra.mxu0 %v4225
      %4954 = vmatprep.subr.bf16.mxu0 0
      %4955 = vmatpush1.bf16.msra.mxu0 %v4232
      %4956 = vmatprep.mubr.bf16.mxu0 %v3573
      %4957 = vmatmul.mubr.bf16.gmra.mrb[0].mxu0 %v3572
      %v4958 = vpop.f32.mrb[0].mxu0
      %v4959 = vadd.f32 %v3761, %v4958
      %v4960 = vpop.f32.mrb[0].mxu0
      %v4961 = vpop.f32.mrb[0].mxu0
      %v4962 = vadd.f32 %v3761, %v4961
      %v4963 = vpop.f32.mrb[0].mxu0
      %4964 = vmatprep.mubr.bf16.mxu0 %v3575
      %4965 = vmatmul.mubr.bf16.gmra.mrb[0].mxu0 %v3574
      %v4966 = vpop.f32.mrb[0].mxu0
      %v4967 = vadd.f32 %v3761, %v4966
      %v4968 = vpop.f32.mrb[0].mxu0
      %v4969 = vpop.f32.mrb[0].mxu0
      %v4970 = vadd.f32 %v3761, %v4969
      %v4971 = vpop.f32.mrb[0].mxu0
      %4972 = vmatprep.mubr.bf16.mxu0 %v3577
      %4973 = vmatmul.mubr.bf16.gmra.mrb[0].mxu0 %v3576
      %v4974 = vpop.f32.mrb[0].mxu0
      %v4975 = vadd.f32 %v3761, %v4974
      %v4976 = vpop.f32.mrb[0].mxu0
      %v4977 = vpop.f32.mrb[0].mxu0
      %v4978 = vadd.f32 %v3761, %v4977
      %v4979 = vpop.f32.mrb[0].mxu0
      %4980 = vmatprep.mubr.bf16.mxu0 %v3579
      %4981 = vmatmul.mubr.bf16.gmra.mrb[0].mxu0 %v3578
      %v4982 = vpop.f32.mrb[0].mxu0
      %v4983 = vadd.f32 %v3761, %v4982
      %v4984 = vpop.f32.mrb[0].mxu0
      %v4985 = vpop.f32.mrb[0].mxu0
      %v4986 = vadd.f32 %v3761, %v4985
      %v4987 = vpop.f32.mrb[0].mxu0
      %4988 = vmatprep.mubr.bf16.mxu0 %v3581
      %4989 = vmatmul.mubr.bf16.gmra.mrb[0].mxu0 %v3580
      %v4990 = vpop.f32.mrb[0].mxu0
      %v4991 = vadd.f32 %v3761, %v4990
      %v4992 = vpop.f32.mrb[0].mxu0
      %v4993 = vpop.f32.mrb[0].mxu0
      %v4994 = vadd.f32 %v3761, %v4993
      %v4995 = vpop.f32.mrb[0].mxu0
      %4996 = vmatprep.mubr.bf16.mxu0 %v3583
      %4997 = vmatmul.mubr.bf16.gmra.mrb[0].mxu0 %v3582
      %v4998 = vpop.f32.mrb[0].mxu0
      %v4999 = vadd.f32 %v3761, %v4998
      %v5000 = vpop.f32.mrb[0].mxu0
      %v5001 = vpop.f32.mrb[0].mxu0
      %v5002 = vadd.f32 %v3761, %v5001
      %v5003 = vpop.f32.mrb[0].mxu0
      %5004 = vmatprep.mubr.bf16.mxu0 %v3585
      %5005 = vmatmul.mubr.bf16.gmra.mrb[0].mxu0 %v3584
      %v5006 = vpop.f32.mrb[0].mxu0
      %v5007 = vadd.f32 %v3761, %v5006
      %v5008 = vpop.f32.mrb[0].mxu0
      %v5009 = vpop.f32.mrb[0].mxu0
      %v5010 = vadd.f32 %v3761, %v5009
      %v5011 = vpop.f32.mrb[0].mxu0
      %5012 = vmatprep.mubr.bf16.mxu0 %v3587
      %5013 = vmatmul.mubr.bf16.gmra.mrb[0].mxu0 %v3586
      %v5014 = vpop.f32.mrb[0].mxu0
      %v5015 = vadd.f32 %v3761, %v5014
      %v5016 = vpop.f32.mrb[0].mxu0
      %v5017 = vpop.f32.mrb[0].mxu0
      %v5018 = vadd.f32 %v3761, %v5017
      %v5019 = vpop.f32.mrb[0].mxu0
      %5020 = vmatprep.mubr.bf16.mxu0 %v3589
      %5021 = vmatmul.mubr.bf16.gmra.mrb[0].mxu0 %v3588
      %v5022 = vpop.f32.mrb[0].mxu0
      %v5023 = vadd.f32 %v3761, %v5022
      %v5024 = vpop.f32.mrb[0].mxu0
      %v5025 = vpop.f32.mrb[0].mxu0
      %v5026 = vadd.f32 %v3761, %v5025
      %v5027 = vpop.f32.mrb[0].mxu0
      %5028 = vmatprep.mubr.bf16.mxu0 %v3591
      %5029 = vmatmul.mubr.bf16.gmra.mrb[0].mxu0 %v3590
      %v5030 = vpop.f32.mrb[0].mxu0
      %v5031 = vadd.f32 %v3761, %v5030
      %v5032 = vpop.f32.mrb[0].mxu0
      %v5033 = vpop.f32.mrb[0].mxu0
      %v5034 = vadd.f32 %v3761, %v5033
      %v5035 = vpop.f32.mrb[0].mxu0
      %5036 = vmatprep.mubr.bf16.mxu0 %v3593
      %5037 = vmatmul.mubr.bf16.gmra.mrb[0].mxu0 %v3592
      %v5038 = vpop.f32.mrb[0].mxu0
      %v5039 = vadd.f32 %v3761, %v5038
      %v5040 = vpop.f32.mrb[0].mxu0
      %v5041 = vpop.f32.mrb[0].mxu0
      %v5042 = vadd.f32 %v3761, %v5041
      %v5043 = vpop.f32.mrb[0].mxu0
      %5044 = vmatprep.mubr.bf16.mxu0 %v3595
      %5045 = vmatmul.mubr.bf16.gmra.mrb[0].mxu0 %v3594
      %v5046 = vpop.f32.mrb[0].mxu0
      %v5047 = vadd.f32 %v3761, %v5046
      %v5048 = vpop.f32.mrb[0].mxu0
      %v5049 = vpop.f32.mrb[0].mxu0
      %v5050 = vadd.f32 %v3761, %v5049
      %v5051 = vpop.f32.mrb[0].mxu0
      %5052 = vmatprep.mubr.bf16.mxu0 %v3597
      %5053 = vmatmul.mubr.bf16.gmra.mrb[0].mxu0 %v3596
      %v5054 = vpop.f32.mrb[0].mxu0
      %v5055 = vadd.f32 %v3761, %v5054
      %v5056 = vpop.f32.mrb[0].mxu0
      %v5057 = vpop.f32.mrb[0].mxu0
      %v5058 = vadd.f32 %v3761, %v5057
      %v5059 = vpop.f32.mrb[0].mxu0
      %5060 = vmatprep.mubr.bf16.mxu0 %v3599
      %5061 = vmatmul.mubr.bf16.gmra.mrb[0].mxu0 %v3598
      %v5062 = vpop.f32.mrb[0].mxu0
      %v5063 = vadd.f32 %v3761, %v5062
      %v5064 = vpop.f32.mrb[0].mxu0
      %v5065 = vpop.f32.mrb[0].mxu0
      %v5066 = vadd.f32 %v3761, %v5065
      %v5067 = vpop.f32.mrb[0].mxu0
      %5068 = vmatprep.mubr.bf16.mxu0 %v3601
      %5069 = vmatmul.mubr.bf16.gmra.mrb[0].mxu0 %v3600
      %v5070 = vpop.f32.mrb[0].mxu0
      %v5071 = vadd.f32 %v3761, %v5070
      %v5072 = vpop.f32.mrb[0].mxu0
      %v5073 = vpop.f32.mrb[0].mxu0
      %v5074 = vadd.f32 %v3761, %v5073
      %v5075 = vpop.f32.mrb[0].mxu0
      %5076 = vmatprep.mubr.bf16.mxu0 %v3603
      %5077 = vmatmul.mubr.bf16.gmra.mrb[0].mxu0 %v3602
      %v5078 = vpop.f32.mrb[0].mxu0
      %v5079 = vadd.f32 %v3761, %v5078
      %v5080 = vpop.f32.mrb[0].mxu0
      %v5081 = vpop.f32.mrb[0].mxu0
      %v5082 = vadd.f32 %v3761, %v5081
      %v5083 = vpop.f32.mrb[0].mxu0
      %5084 = vdwg.mxu0
      %v5085 = vmul.f32 %v4380, 0.5
      %v5086 = vmul.f32 %v4382, 0.5
      %v5087 = vmul.f32 %v4573, 0.5
      %v5088 = vmul.f32 %v4575, 0.5
      %v5089 = vmul.f32 %v4766, 0.5
      %v5090 = vmul.f32 %v4768, 0.5
      %v5091 = vmul.f32 %v4959, 0.5
      %v5092 = vmul.f32 %v4384, 0.5
      %v5093 = vmul.f32 %v4386, 0.5
      %v5094 = vmul.f32 %v4577, 0.5
      %v5095 = vmul.f32 %v4579, 0.5
      %v5096 = vmul.f32 %v4770, 0.5
      %v5097 = vmul.f32 %v4772, 0.5
      %v5098 = vmul.f32 %v4962, 0.5
      %v5099 = vmul.f32 %v4390, 0.5
      %v5100 = vmul.f32 %v4392, 0.5
      %v5101 = vmul.f32 %v4583, 0.5
      %v5102 = vmul.f32 %v4585, 0.5
      %v5103 = vmul.f32 %v4776, 0.5
      %v5104 = vmul.f32 %v4778, 0.5
      %v5105 = vmul.f32 %v4967, 0.5
      %v5106 = vmul.f32 %v4394, 0.5
      %v5107 = vmul.f32 %v4396, 0.5
      %v5108 = vmul.f32 %v4587, 0.5
      %v5109 = vmul.f32 %v4589, 0.5
      %v5110 = vmul.f32 %v4780, 0.5
      %v5111 = vmul.f32 %v4782, 0.5
      %v5112 = vmul.f32 %v4970, 0.5
      %v5113 = vmul.f32 %v4400, 0.5
      %v5114 = vmul.f32 %v4402, 0.5
      %v5115 = vmul.f32 %v4593, 0.5
      %v5116 = vmul.f32 %v4595, 0.5
      %v5117 = vmul.f32 %v4786, 0.5
      %v5118 = vmul.f32 %v4788, 0.5
      %v5119 = vmul.f32 %v4975, 0.5
      %v5120 = vmul.f32 %v4404, 0.5
      %v5121 = vmul.f32 %v4406, 0.5
      %v5122 = vmul.f32 %v4597, 0.5
      %v5123 = vmul.f32 %v4599, 0.5
      %v5124 = vmul.f32 %v4790, 0.5
      %v5125 = vmul.f32 %v4792, 0.5
      %v5126 = vmul.f32 %v4978, 0.5
      %v5127 = vmul.f32 %v4410, 0.5
      %v5128 = vmul.f32 %v4412, 0.5
      %v5129 = vmul.f32 %v4603, 0.5
      %v5130 = vmul.f32 %v4605, 0.5
      %v5131 = vmul.f32 %v4796, 0.5
      %v5132 = vmul.f32 %v4798, 0.5
      %v5133 = vmul.f32 %v4983, 0.5
      %v5134 = vmul.f32 %v4414, 0.5
      %v5135 = vmul.f32 %v4416, 0.5
      %v5136 = vmul.f32 %v4607, 0.5
      %v5137 = vmul.f32 %v4609, 0.5
      %v5138 = vmul.f32 %v4800, 0.5
      %v5139 = vmul.f32 %v4802, 0.5
      %v5140 = vmul.f32 %v4986, 0.5
      %v5141 = vmul.f32 %v4420, 0.5
      %v5142 = vmul.f32 %v4422, 0.5
      %v5143 = vmul.f32 %v4613, 0.5
      %v5144 = vmul.f32 %v4615, 0.5
      %v5145 = vmul.f32 %v4806, 0.5
      %v5146 = vmul.f32 %v4808, 0.5
      %v5147 = vmul.f32 %v4991, 0.5
      %v5148 = vmul.f32 %v4424, 0.5
      %v5149 = vmul.f32 %v4426, 0.5
      %v5150 = vmul.f32 %v4617, 0.5
      %v5151 = vmul.f32 %v4619, 0.5
      %v5152 = vmul.f32 %v4810, 0.5
      %v5153 = vmul.f32 %v4812, 0.5
      %v5154 = vmul.f32 %v4994, 0.5
      %v5155 = vmul.f32 %v4430, 0.5
      %v5156 = vmul.f32 %v4432, 0.5
      %v5157 = vmul.f32 %v4623, 0.5
      %v5158 = vmul.f32 %v4625, 0.5
      %v5159 = vmul.f32 %v4816, 0.5
      %v5160 = vmul.f32 %v4818, 0.5
      %v5161 = vmul.f32 %v4999, 0.5
      %v5162 = vmul.f32 %v4434, 0.5
      %v5163 = vmul.f32 %v4436, 0.5
      %v5164 = vmul.f32 %v4627, 0.5
      %v5165 = vmul.f32 %v4629, 0.5
      %v5166 = vmul.f32 %v4820, 0.5
      %v5167 = vmul.f32 %v4822, 0.5
      %v5168 = vmul.f32 %v5002, 0.5
      %v5169 = vmul.f32 %v4440, 0.5
      %v5170 = vmul.f32 %v4442, 0.5
      %v5171 = vmul.f32 %v4633, 0.5
      %v5172 = vmul.f32 %v4635, 0.5
      %v5173 = vmul.f32 %v4826, 0.5
      %v5174 = vmul.f32 %v4828, 0.5
      %v5175 = vmul.f32 %v5007, 0.5
      %v5176 = vmul.f32 %v4444, 0.5
      %v5177 = vmul.f32 %v4446, 0.5
      %v5178 = vmul.f32 %v4637, 0.5
      %v5179 = vmul.f32 %v4639, 0.5
      %v5180 = vmul.f32 %v4830, 0.5
      %v5181 = vmul.f32 %v4832, 0.5
      %v5182 = vmul.f32 %v5010, 0.5
      %v5183 = vmul.f32 %v4450, 0.5
      %v5184 = vmul.f32 %v4452, 0.5
      %v5185 = vmul.f32 %v4643, 0.5
      %v5186 = vmul.f32 %v4645, 0.5
      %v5187 = vmul.f32 %v4836, 0.5
      %v5188 = vmul.f32 %v4838, 0.5
      %v5189 = vmul.f32 %v5015, 0.5
      %v5190 = vmul.f32 %v4454, 0.5
      %v5191 = vmul.f32 %v4456, 0.5
      %v5192 = vmul.f32 %v4647, 0.5
      %v5193 = vmul.f32 %v4649, 0.5
      %v5194 = vmul.f32 %v4840, 0.5
      %v5195 = vmul.f32 %v4842, 0.5
      %v5196 = vmul.f32 %v5018, 0.5
      %v5197 = vmul.f32 %v4460, 0.5
      %v5198 = vmul.f32 %v4462, 0.5
      %v5199 = vmul.f32 %v4653, 0.5
      %v5200 = vmul.f32 %v4655, 0.5
      %v5201 = vmul.f32 %v4846, 0.5
      %v5202 = vmul.f32 %v4848, 0.5
      %v5203 = vmul.f32 %v5023, 0.5
      %v5204 = vmul.f32 %v4464, 0.5
      %v5205 = vmul.f32 %v4466, 0.5
      %v5206 = vmul.f32 %v4657, 0.5
      %v5207 = vmul.f32 %v4659, 0.5
      %v5208 = vmul.f32 %v4850, 0.5
      %v5209 = vmul.f32 %v4852, 0.5
      %v5210 = vmul.f32 %v5026, 0.5
      %v5211 = vmul.f32 %v4470, 0.5
      %v5212 = vmul.f32 %v4472, 0.5
      %v5213 = vmul.f32 %v4663, 0.5
      %v5214 = vmul.f32 %v4665, 0.5
      %v5215 = vmul.f32 %v4856, 0.5
      %v5216 = vmul.f32 %v4858, 0.5
      %v5217 = vmul.f32 %v5031, 0.5
      %v5218 = vmul.f32 %v4474, 0.5
      %v5219 = vmul.f32 %v4476, 0.5
      %v5220 = vmul.f32 %v4667, 0.5
      %v5221 = vmul.f32 %v4669, 0.5
      %v5222 = vmul.f32 %v4860, 0.5
      %v5223 = vmul.f32 %v4862, 0.5
      %v5224 = vmul.f32 %v5034, 0.5
      %v5225 = vmul.f32 %v4480, 0.5
      %v5226 = vmul.f32 %v4482, 0.5
      %v5227 = vmul.f32 %v4673, 0.5
      %v5228 = vmul.f32 %v4675, 0.5
      %v5229 = vmul.f32 %v4866, 0.5
      %v5230 = vmul.f32 %v4868, 0.5
      %v5231 = vmul.f32 %v5039, 0.5
      %v5232 = vmul.f32 %v4484, 0.5
      %v5233 = vmul.f32 %v4486, 0.5
      %v5234 = vmul.f32 %v4677, 0.5
      %v5235 = vmul.f32 %v4679, 0.5
      %v5236 = vmul.f32 %v4870, 0.5
      %v5237 = vmul.f32 %v4872, 0.5
      %v5238 = vmul.f32 %v5042, 0.5
      %v5239 = vmul.f32 %v4490, 0.5
      %v5240 = vmul.f32 %v4492, 0.5
      %v5241 = vmul.f32 %v4683, 0.5
      %v5242 = vmul.f32 %v4685, 0.5
      %v5243 = vmul.f32 %v4876, 0.5
      %v5244 = vmul.f32 %v4878, 0.5
      %v5245 = vmul.f32 %v5047, 0.5
      %v5246 = vmul.f32 %v4494, 0.5
      %v5247 = vmul.f32 %v4496, 0.5
      %v5248 = vmul.f32 %v4687, 0.5
      %v5249 = vmul.f32 %v4689, 0.5
      %v5250 = vmul.f32 %v4880, 0.5
      %v5251 = vmul.f32 %v4882, 0.5
      %v5252 = vmul.f32 %v5050, 0.5
      %v5253 = vmul.f32 %v4500, 0.5
      %v5254 = vmul.f32 %v4502, 0.5
      %v5255 = vmul.f32 %v4693, 0.5
      %v5256 = vmul.f32 %v4695, 0.5
      %v5257 = vmul.f32 %v4886, 0.5
      %v5258 = vmul.f32 %v4888, 0.5
      %v5259 = vmul.f32 %v5055, 0.5
      %v5260 = vmul.f32 %v4504, 0.5
      %v5261 = vmul.f32 %v4506, 0.5
      %v5262 = vmul.f32 %v4697, 0.5
      %v5263 = vmul.f32 %v4699, 0.5
      %v5264 = vmul.f32 %v4890, 0.5
      %v5265 = vmul.f32 %v4892, 0.5
      %v5266 = vmul.f32 %v5058, 0.5
      %v5267 = vmul.f32 %v4510, 0.5
      %v5268 = vmul.f32 %v4512, 0.5
      %v5269 = vmul.f32 %v4703, 0.5
      %v5270 = vmul.f32 %v4705, 0.5
      %v5271 = vmul.f32 %v4896, 0.5
      %v5272 = vmul.f32 %v4898, 0.5
      %v5273 = vmul.f32 %v5063, 0.5
      %v5274 = vmul.f32 %v4514, 0.5
      %v5275 = vmul.f32 %v4516, 0.5
      %v5276 = vmul.f32 %v4707, 0.5
      %v5277 = vmul.f32 %v4709, 0.5
      %v5278 = vmul.f32 %v4900, 0.5
      %v5279 = vmul.f32 %v4902, 0.5
      %v5280 = vmul.f32 %v5066, 0.5
      %v5281 = vmul.f32 %v4520, 0.5
      %v5282 = vmul.f32 %v4522, 0.5
      %v5283 = vmul.f32 %v4713, 0.5
      %v5284 = vmul.f32 %v4715, 0.5
      %v5285 = vmul.f32 %v4906, 0.5
      %v5286 = vmul.f32 %v4908, 0.5
      %v5287 = vmul.f32 %v5071, 0.5
      %v5288 = vmul.f32 %v4524, 0.5
      %v5289 = vmul.f32 %v4526, 0.5
      %v5290 = vmul.f32 %v4717, 0.5
      %v5291 = vmul.f32 %v4719, 0.5
      %v5292 = vmul.f32 %v4910, 0.5
      %v5293 = vmul.f32 %v4912, 0.5
      %v5294 = vmul.f32 %v5074, 0.5
      %v5295 = vmul.f32 %v4530, 0.5
      %v5296 = vmul.f32 %v4532, 0.5
      %v5297 = vmul.f32 %v4723, 0.5
      %v5298 = vmul.f32 %v4725, 0.5
      %v5299 = vmul.f32 %v4916, 0.5
      %v5300 = vmul.f32 %v4918, 0.5
      %v5301 = vmul.f32 %v5079, 0.5
      %v5302 = vmul.f32 %v4534, 0.5
      %v5303 = vmul.f32 %v4536, 0.5
      %v5304 = vmul.f32 %v4727, 0.5
      %v5305 = vmul.f32 %v4729, 0.5
      %v5306 = vmul.f32 %v4920, 0.5
      %v5307 = vmul.f32 %v4922, 0.5
      %v5308 = vmul.f32 %v5082, 0.5
      %v5309 = vtanh.pop %v5085
      %v5310 = vtanh.pop %v5086
      %v5311 = vtanh.pop %v5087
      %v5312 = vtanh.pop %v5088
      %v5313 = vtanh.pop %v5089
      %v5314 = vtanh.pop %v5090
      %v5315 = vtanh.pop %v5091
      %v5316 = vtanh.pop %v5092
      %v5317 = vtanh.pop %v5093
      %v5318 = vtanh.pop %v5094
      %v5319 = vtanh.pop %v5095
      %v5320 = vtanh.pop %v5096
      %v5321 = vtanh.pop %v5097
      %v5322 = vtanh.pop %v5098
      %v5323 = vtanh.pop %v5099
      %v5324 = vtanh.pop %v5100
      %v5325 = vtanh.pop %v5101
      %v5326 = vtanh.pop %v5102
      %v5327 = vtanh.pop %v5103
      %v5328 = vtanh.pop %v5104
      %v5329 = vtanh.pop %v5105
      %v5330 = vtanh.pop %v5106
      %v5331 = vtanh.pop %v5107
      %v5332 = vtanh.pop %v5108
      %v5333 = vtanh.pop %v5109
      %v5334 = vtanh.pop %v5110
      %v5335 = vtanh.pop %v5111
      %v5336 = vtanh.pop %v5112
      %v5337 = vtanh.pop %v5113
      %v5338 = vtanh.pop %v5114
      %v5339 = vtanh.pop %v5115
      %v5340 = vtanh.pop %v5116
      %v5341 = vtanh.pop %v5117
      %v5342 = vtanh.pop %v5118
      %v5343 = vtanh.pop %v5119
      %v5344 = vtanh.pop %v5120
      %v5345 = vtanh.pop %v5121
      %v5346 = vtanh.pop %v5122
      %v5347 = vtanh.pop %v5123
      %v5348 = vtanh.pop %v5124
      %v5349 = vtanh.pop %v5125
      %v5350 = vtanh.pop %v5126
      %v5351 = vtanh.pop %v5127
      %v5352 = vtanh.pop %v5128
      %v5353 = vtanh.pop %v5129
      %v5354 = vtanh.pop %v5130
      %v5355 = vtanh.pop %v5131
      %v5356 = vtanh.pop %v5132
      %v5357 = vtanh.pop %v5133
      %v5358 = vtanh.pop %v5134
      %v5359 = vtanh.pop %v5135
      %v5360 = vtanh.pop %v5136
      %v5361 = vtanh.pop %v5137
      %v5362 = vtanh.pop %v5138
      %v5363 = vtanh.pop %v5139
      %v5364 = vtanh.pop %v5140
      %v5365 = vtanh.pop %v5141
      %v5366 = vtanh.pop %v5142
      %v5367 = vtanh.pop %v5143
      %v5368 = vtanh.pop %v5144
      %v5369 = vtanh.pop %v5145
      %v5370 = vtanh.pop %v5146
      %v5371 = vtanh.pop %v5147
      %v5372 = vtanh.pop %v5148
      %v5373 = vtanh.pop %v5149
      %v5374 = vtanh.pop %v5150
      %v5375 = vtanh.pop %v5151
      %v5376 = vtanh.pop %v5152
      %v5377 = vtanh.pop %v5153
      %v5378 = vtanh.pop %v5154
      %v5379 = vtanh.pop %v5155
      %v5380 = vtanh.pop %v5156
      %v5381 = vtanh.pop %v5157
      %v5382 = vtanh.pop %v5158
      %v5383 = vtanh.pop %v5159
      %v5384 = vtanh.pop %v5160
      %v5385 = vtanh.pop %v5161
      %v5386 = vtanh.pop %v5162
      %v5387 = vtanh.pop %v5163
      %v5388 = vtanh.pop %v5164
      %v5389 = vtanh.pop %v5165
      %v5390 = vtanh.pop %v5166
      %v5391 = vtanh.pop %v5167
      %v5392 = vtanh.pop %v5168
      %v5393 = vtanh.pop %v5169
      %v5394 = vtanh.pop %v5170
      %v5395 = vtanh.pop %v5171
      %v5396 = vtanh.pop %v5172
      %v5397 = vtanh.pop %v5173
      %v5398 = vtanh.pop %v5174
      %v5399 = vtanh.pop %v5175
      %v5400 = vtanh.pop %v5176
      %v5401 = vtanh.pop %v5177
      %v5402 = vtanh.pop %v5178
      %v5403 = vtanh.pop %v5179
      %v5404 = vtanh.pop %v5180
      %v5405 = vtanh.pop %v5181
      %v5406 = vtanh.pop %v5182
      %v5407 = vtanh.pop %v5183
      %v5408 = vtanh.pop %v5184
      %v5409 = vtanh.pop %v5185
      %v5410 = vtanh.pop %v5186
      %v5411 = vtanh.pop %v5187
      %v5412 = vtanh.pop %v5188
      %v5413 = vtanh.pop %v5189
      %v5414 = vtanh.pop %v5190
      %v5415 = vtanh.pop %v5191
      %v5416 = vtanh.pop %v5192
      %v5417 = vtanh.pop %v5193
      %v5418 = vtanh.pop %v5194
      %v5419 = vtanh.pop %v5195
      %v5420 = vtanh.pop %v5196
      %v5421 = vtanh.pop %v5197
      %v5422 = vtanh.pop %v5198
      %v5423 = vtanh.pop %v5199
      %v5424 = vtanh.pop %v5200
      %v5425 = vtanh.pop %v5201
      %v5426 = vtanh.pop %v5202
      %v5427 = vtanh.pop %v5203
      %v5428 = vtanh.pop %v5204
      %v5429 = vtanh.pop %v5205
      %v5430 = vtanh.pop %v5206
      %v5431 = vtanh.pop %v5207
      %v5432 = vtanh.pop %v5208
      %v5433 = vtanh.pop %v5209
      %v5434 = vtanh.pop %v5210
      %v5435 = vtanh.pop %v5211
      %v5436 = vtanh.pop %v5212
      %v5437 = vtanh.pop %v5213
      %v5438 = vtanh.pop %v5214
      %v5439 = vtanh.pop %v5215
      %v5440 = vtanh.pop %v5216
      %v5441 = vtanh.pop %v5217
      %v5442 = vtanh.pop %v5218
      %v5443 = vtanh.pop %v5219
      %v5444 = vtanh.pop %v5220
      %v5445 = vtanh.pop %v5221
      %v5446 = vtanh.pop %v5222
      %v5447 = vtanh.pop %v5223
      %v5448 = vtanh.pop %v5224
      %v5449 = vtanh.pop %v5225
      %v5450 = vtanh.pop %v5226
      %v5451 = vtanh.pop %v5227
      %v5452 = vtanh.pop %v5228
      %v5453 = vtanh.pop %v5229
      %v5454 = vtanh.pop %v5230
      %v5455 = vtanh.pop %v5231
      %v5456 = vtanh.pop %v5232
      %v5457 = vtanh.pop %v5233
      %v5458 = vtanh.pop %v5234
      %v5459 = vtanh.pop %v5235
      %v5460 = vtanh.pop %v5236
      %v5461 = vtanh.pop %v5237
      %v5462 = vtanh.pop %v5238
      %v5463 = vtanh.pop %v5239
      %v5464 = vtanh.pop %v5240
      %v5465 = vtanh.pop %v5241
      %v5466 = vtanh.pop %v5242
      %v5467 = vtanh.pop %v5243
      %v5468 = vtanh.pop %v5244
      %v5469 = vtanh.pop %v5245
      %v5470 = vtanh.pop %v5246
      %v5471 = vtanh.pop %v5247
      %v5472 = vtanh.pop %v5248
      %v5473 = vtanh.pop %v5249
      %v5474 = vtanh.pop %v5250
      %v5475 = vtanh.pop %v5251
      %v5476 = vtanh.pop %v5252
      %v5477 = vtanh.pop %v5253
      %v5478 = vtanh.pop %v5254
      %v5479 = vtanh.pop %v5255
      %v5480 = vtanh.pop %v5256
      %v5481 = vtanh.pop %v5257
      %v5482 = vtanh.pop %v5258
      %v5483 = vtanh.pop %v5259
      %v5484 = vtanh.pop %v5260
      %v5485 = vtanh.pop %v5261
      %v5486 = vtanh.pop %v5262
      %v5487 = vtanh.pop %v5263
      %v5488 = vtanh.pop %v5264
      %v5489 = vtanh.pop %v5265
      %v5490 = vtanh.pop %v5266
      %v5491 = vtanh.pop %v5267
      %v5492 = vtanh.pop %v5268
      %v5493 = vtanh.pop %v5269
      %v5494 = vtanh.pop %v5270
      %v5495 = vtanh.pop %v5271
      %v5496 = vtanh.pop %v5272
      %v5497 = vtanh.pop %v5273
      %v5498 = vtanh.pop %v5274
      %v5499 = vtanh.pop %v5275
      %v5500 = vtanh.pop %v5276
      %v5501 = vtanh.pop %v5277
      %v5502 = vtanh.pop %v5278
      %v5503 = vtanh.pop %v5279
      %v5504 = vtanh.pop %v5280
      %v5505 = vtanh.pop %v5281
      %v5506 = vtanh.pop %v5282
      %v5507 = vtanh.pop %v5283
      %v5508 = vtanh.pop %v5284
      %v5509 = vtanh.pop %v5285
      %v5510 = vtanh.pop %v5286
      %v5511 = vtanh.pop %v5287
      %v5512 = vtanh.pop %v5288
      %v5513 = vtanh.pop %v5289
      %v5514 = vtanh.pop %v5290
      %v5515 = vtanh.pop %v5291
      %v5516 = vtanh.pop %v5292
      %v5517 = vtanh.pop %v5293
      %v5518 = vtanh.pop %v5294
      %v5519 = vtanh.pop %v5295
      %v5520 = vtanh.pop %v5296
      %v5521 = vtanh.pop %v5297
      %v5522 = vtanh.pop %v5298
      %v5523 = vtanh.pop %v5299
      %v5524 = vtanh.pop %v5300
      %v5525 = vtanh.pop %v5301
      %v5526 = vtanh.pop %v5302
      %v5527 = vtanh.pop %v5303
      %v5528 = vtanh.pop %v5304
      %v5529 = vtanh.pop %v5305
      %v5530 = vtanh.pop %v5306
      %v5531 = vtanh.pop %v5307
      %v5532 = vtanh.pop %v5308
      %v5533 = vmul.f32 %v5309, 0.5
      %v5534 = vmul.f32 %v5310, 0.5
      %v5535 = vmul.f32 %v5311, 0.5
      %v5536 = vmul.f32 %v5312, 0.5
      %v5537 = vmul.f32 %v5313, 0.5
      %v5538 = vmul.f32 %v5314, 0.5
      %v5539 = vmul.f32 %v5315, 0.5
      %v5540 = vmul.f32 %v5316, 0.5
      %v5541 = vmul.f32 %v5317, 0.5
      %v5542 = vmul.f32 %v5318, 0.5
      %v5543 = vmul.f32 %v5319, 0.5
      %v5544 = vmul.f32 %v5320, 0.5
      %v5545 = vmul.f32 %v5321, 0.5
      %v5546 = vmul.f32 %v5322, 0.5
      %v5547 = vmul.f32 %v5323, 0.5
      %v5548 = vmul.f32 %v5324, 0.5
      %v5549 = vmul.f32 %v5325, 0.5
      %v5550 = vmul.f32 %v5326, 0.5
      %v5551 = vmul.f32 %v5327, 0.5
      %v5552 = vmul.f32 %v5328, 0.5
      %v5553 = vmul.f32 %v5329, 0.5
      %v5554 = vmul.f32 %v5330, 0.5
      %v5555 = vmul.f32 %v5331, 0.5
      %v5556 = vmul.f32 %v5332, 0.5
      %v5557 = vmul.f32 %v5333, 0.5
      %v5558 = vmul.f32 %v5334, 0.5
      %v5559 = vmul.f32 %v5335, 0.5
      %v5560 = vmul.f32 %v5336, 0.5
      %v5561 = vmul.f32 %v5337, 0.5
      %v5562 = vmul.f32 %v5338, 0.5
      %v5563 = vmul.f32 %v5339, 0.5
      %v5564 = vmul.f32 %v5340, 0.5
      %v5565 = vmul.f32 %v5341, 0.5
      %v5566 = vmul.f32 %v5342, 0.5
      %v5567 = vmul.f32 %v5343, 0.5
      %v5568 = vmul.f32 %v5344, 0.5
      %v5569 = vmul.f32 %v5345, 0.5
      %v5570 = vmul.f32 %v5346, 0.5
      %v5571 = vmul.f32 %v5347, 0.5
      %v5572 = vmul.f32 %v5348, 0.5
      %v5573 = vmul.f32 %v5349, 0.5
      %v5574 = vmul.f32 %v5350, 0.5
      %v5575 = vmul.f32 %v5351, 0.5
      %v5576 = vmul.f32 %v5352, 0.5
      %v5577 = vmul.f32 %v5353, 0.5
      %v5578 = vmul.f32 %v5354, 0.5
      %v5579 = vmul.f32 %v5355, 0.5
      %v5580 = vmul.f32 %v5356, 0.5
      %v5581 = vmul.f32 %v5357, 0.5
      %v5582 = vmul.f32 %v5358, 0.5
      %v5583 = vmul.f32 %v5359, 0.5
      %v5584 = vmul.f32 %v5360, 0.5
      %v5585 = vmul.f32 %v5361, 0.5
      %v5586 = vmul.f32 %v5362, 0.5
      %v5587 = vmul.f32 %v5363, 0.5
      %v5588 = vmul.f32 %v5364, 0.5
      %v5589 = vmul.f32 %v5365, 0.5
      %v5590 = vmul.f32 %v5366, 0.5
      %v5591 = vmul.f32 %v5367, 0.5
      %v5592 = vmul.f32 %v5368, 0.5
      %v5593 = vmul.f32 %v5369, 0.5
      %v5594 = vmul.f32 %v5370, 0.5
      %v5595 = vmul.f32 %v5371, 0.5
      %v5596 = vmul.f32 %v5372, 0.5
      %v5597 = vmul.f32 %v5373, 0.5
      %v5598 = vmul.f32 %v5374, 0.5
      %v5599 = vmul.f32 %v5375, 0.5
      %v5600 = vmul.f32 %v5376, 0.5
      %v5601 = vmul.f32 %v5377, 0.5
      %v5602 = vmul.f32 %v5378, 0.5
      %v5603 = vmul.f32 %v5379, 0.5
      %v5604 = vmul.f32 %v5380, 0.5
      %v5605 = vmul.f32 %v5381, 0.5
      %v5606 = vmul.f32 %v5382, 0.5
      %v5607 = vmul.f32 %v5383, 0.5
      %v5608 = vmul.f32 %v5384, 0.5
      %v5609 = vmul.f32 %v5385, 0.5
      %v5610 = vmul.f32 %v5386, 0.5
      %v5611 = vmul.f32 %v5387, 0.5
      %v5612 = vmul.f32 %v5388, 0.5
      %v5613 = vmul.f32 %v5389, 0.5
      %v5614 = vmul.f32 %v5390, 0.5
      %v5615 = vmul.f32 %v5391, 0.5
      %v5616 = vmul.f32 %v5392, 0.5
      %v5617 = vmul.f32 %v5393, 0.5
      %v5618 = vmul.f32 %v5394, 0.5
      %v5619 = vmul.f32 %v5395, 0.5
      %v5620 = vmul.f32 %v5396, 0.5
      %v5621 = vmul.f32 %v5397, 0.5
      %v5622 = vmul.f32 %v5398, 0.5
      %v5623 = vmul.f32 %v5399, 0.5
      %v5624 = vmul.f32 %v5400, 0.5
      %v5625 = vmul.f32 %v5401, 0.5
      %v5626 = vmul.f32 %v5402, 0.5
      %v5627 = vmul.f32 %v5403, 0.5
      %v5628 = vmul.f32 %v5404, 0.5
      %v5629 = vmul.f32 %v5405, 0.5
      %v5630 = vmul.f32 %v5406, 0.5
      %v5631 = vmul.f32 %v5407, 0.5
      %v5632 = vmul.f32 %v5408, 0.5
      %v5633 = vmul.f32 %v5409, 0.5
      %v5634 = vmul.f32 %v5410, 0.5
      %v5635 = vmul.f32 %v5411, 0.5
      %v5636 = vmul.f32 %v5412, 0.5
      %v5637 = vmul.f32 %v5413, 0.5
      %v5638 = vmul.f32 %v5414, 0.5
      %v5639 = vmul.f32 %v5415, 0.5
      %v5640 = vmul.f32 %v5416, 0.5
      %v5641 = vmul.f32 %v5417, 0.5
      %v5642 = vmul.f32 %v5418, 0.5
      %v5643 = vmul.f32 %v5419, 0.5
      %v5644 = vmul.f32 %v5420, 0.5
      %v5645 = vmul.f32 %v5421, 0.5
      %v5646 = vmul.f32 %v5422, 0.5
      %v5647 = vmul.f32 %v5423, 0.5
      %v5648 = vmul.f32 %v5424, 0.5
      %v5649 = vmul.f32 %v5425, 0.5
      %v5650 = vmul.f32 %v5426, 0.5
      %v5651 = vmul.f32 %v5427, 0.5
      %v5652 = vmul.f32 %v5428, 0.5
      %v5653 = vmul.f32 %v5429, 0.5
      %v5654 = vmul.f32 %v5430, 0.5
      %v5655 = vmul.f32 %v5431, 0.5
      %v5656 = vmul.f32 %v5432, 0.5
      %v5657 = vmul.f32 %v5433, 0.5
      %v5658 = vmul.f32 %v5434, 0.5
      %v5659 = vmul.f32 %v5435, 0.5
      %v5660 = vmul.f32 %v5436, 0.5
      %v5661 = vmul.f32 %v5437, 0.5
      %v5662 = vmul.f32 %v5438, 0.5
      %v5663 = vmul.f32 %v5439, 0.5
      %v5664 = vmul.f32 %v5440, 0.5
      %v5665 = vmul.f32 %v5441, 0.5
      %v5666 = vmul.f32 %v5442, 0.5
      %v5667 = vmul.f32 %v5443, 0.5
      %v5668 = vmul.f32 %v5444, 0.5
      %v5669 = vmul.f32 %v5445, 0.5
      %v5670 = vmul.f32 %v5446, 0.5
      %v5671 = vmul.f32 %v5447, 0.5
      %v5672 = vmul.f32 %v5448, 0.5
      %v5673 = vmul.f32 %v5449, 0.5
      %v5674 = vmul.f32 %v5450, 0.5
      %v5675 = vmul.f32 %v5451, 0.5
      %v5676 = vmul.f32 %v5452, 0.5
      %v5677 = vmul.f32 %v5453, 0.5
      %v5678 = vmul.f32 %v5454, 0.5
      %v5679 = vmul.f32 %v5455, 0.5
      %v5680 = vmul.f32 %v5456, 0.5
      %v5681 = vmul.f32 %v5457, 0.5
      %v5682 = vmul.f32 %v5458, 0.5
      %v5683 = vmul.f32 %v5459, 0.5
      %v5684 = vmul.f32 %v5460, 0.5
      %v5685 = vmul.f32 %v5461, 0.5
      %v5686 = vmul.f32 %v5462, 0.5
      %v5687 = vmul.f32 %v5463, 0.5
      %v5688 = vmul.f32 %v5464, 0.5
      %v5689 = vmul.f32 %v5465, 0.5
      %v5690 = vmul.f32 %v5466, 0.5
      %v5691 = vmul.f32 %v5467, 0.5
      %v5692 = vmul.f32 %v5468, 0.5
      %v5693 = vmul.f32 %v5469, 0.5
      %v5694 = vmul.f32 %v5470, 0.5
      %v5695 = vmul.f32 %v5471, 0.5
      %v5696 = vmul.f32 %v5472, 0.5
      %v5697 = vmul.f32 %v5473, 0.5
      %v5698 = vmul.f32 %v5474, 0.5
      %v5699 = vmul.f32 %v5475, 0.5
      %v5700 = vmul.f32 %v5476, 0.5
      %v5701 = vmul.f32 %v5477, 0.5
      %v5702 = vmul.f32 %v5478, 0.5
      %v5703 = vmul.f32 %v5479, 0.5
      %v5704 = vmul.f32 %v5480, 0.5
      %v5705 = vmul.f32 %v5481, 0.5
      %v5706 = vmul.f32 %v5482, 0.5
      %v5707 = vmul.f32 %v5483, 0.5
      %v5708 = vmul.f32 %v5484, 0.5
      %v5709 = vmul.f32 %v5485, 0.5
      %v5710 = vmul.f32 %v5486, 0.5
      %v5711 = vmul.f32 %v5487, 0.5
      %v5712 = vmul.f32 %v5488, 0.5
      %v5713 = vmul.f32 %v5489, 0.5
      %v5714 = vmul.f32 %v5490, 0.5
      %v5715 = vmul.f32 %v5491, 0.5
      %v5716 = vmul.f32 %v5492, 0.5
      %v5717 = vmul.f32 %v5493, 0.5
      %v5718 = vmul.f32 %v5494, 0.5
      %v5719 = vmul.f32 %v5495, 0.5
      %v5720 = vmul.f32 %v5496, 0.5
      %v5721 = vmul.f32 %v5497, 0.5
      %v5722 = vmul.f32 %v5498, 0.5
      %v5723 = vmul.f32 %v5499, 0.5
      %v5724 = vmul.f32 %v5500, 0.5
      %v5725 = vmul.f32 %v5501, 0.5
      %v5726 = vmul.f32 %v5502, 0.5
      %v5727 = vmul.f32 %v5503, 0.5
      %v5728 = vmul.f32 %v5504, 0.5
      %v5729 = vmul.f32 %v5505, 0.5
      %v5730 = vmul.f32 %v5506, 0.5
      %v5731 = vmul.f32 %v5507, 0.5
      %v5732 = vmul.f32 %v5508, 0.5
      %v5733 = vmul.f32 %v5509, 0.5
      %v5734 = vmul.f32 %v5510, 0.5
      %v5735 = vmul.f32 %v5511, 0.5
      %v5736 = vmul.f32 %v5512, 0.5
      %v5737 = vmul.f32 %v5513, 0.5
      %v5738 = vmul.f32 %v5514, 0.5
      %v5739 = vmul.f32 %v5515, 0.5
      %v5740 = vmul.f32 %v5516, 0.5
      %v5741 = vmul.f32 %v5517, 0.5
      %v5742 = vmul.f32 %v5518, 0.5
      %v5743 = vmul.f32 %v5519, 0.5
      %v5744 = vmul.f32 %v5520, 0.5
      %v5745 = vmul.f32 %v5521, 0.5
      %v5746 = vmul.f32 %v5522, 0.5
      %v5747 = vmul.f32 %v5523, 0.5
      %v5748 = vmul.f32 %v5524, 0.5
      %v5749 = vmul.f32 %v5525, 0.5
      %v5750 = vmul.f32 %v5526, 0.5
      %v5751 = vmul.f32 %v5527, 0.5
      %v5752 = vmul.f32 %v5528, 0.5
      %v5753 = vmul.f32 %v5529, 0.5
      %v5754 = vmul.f32 %v5530, 0.5
      %v5755 = vmul.f32 %v5531, 0.5
      %v5756 = vmul.f32 %v5532, 0.5
      %v5757 = vadd.f32 %v5533, 0.5
      %v5758 = vadd.f32 %v5534, 0.5
      %v5759 = vadd.f32 %v5535, 0.5
      %v5760 = vadd.f32 %v5536, 0.5
      %v5761 = vadd.f32 %v5537, 0.5
      %v5762 = vadd.f32 %v5538, 0.5
      %v5763 = vadd.f32 %v5539, 0.5
      %v5764 = vadd.f32 %v5540, 0.5
      %v5765 = vadd.f32 %v5541, 0.5
      %v5766 = vadd.f32 %v5542, 0.5
      %v5767 = vadd.f32 %v5543, 0.5
      %v5768 = vadd.f32 %v5544, 0.5
      %v5769 = vadd.f32 %v5545, 0.5
      %v5770 = vadd.f32 %v5546, 0.5
      %v5771 = vadd.f32 %v5547, 0.5
      %v5772 = vadd.f32 %v5548, 0.5
      %v5773 = vadd.f32 %v5549, 0.5
      %v5774 = vadd.f32 %v5550, 0.5
      %v5775 = vadd.f32 %v5551, 0.5
      %v5776 = vadd.f32 %v5552, 0.5
      %v5777 = vadd.f32 %v5553, 0.5
      %v5778 = vadd.f32 %v5554, 0.5
      %v5779 = vadd.f32 %v5555, 0.5
      %v5780 = vadd.f32 %v5556, 0.5
      %v5781 = vadd.f32 %v5557, 0.5
      %v5782 = vadd.f32 %v5558, 0.5
      %v5783 = vadd.f32 %v5559, 0.5
      %v5784 = vadd.f32 %v5560, 0.5
      %v5785 = vadd.f32 %v5561, 0.5
      %v5786 = vadd.f32 %v5562, 0.5
      %v5787 = vadd.f32 %v5563, 0.5
      %v5788 = vadd.f32 %v5564, 0.5
      %v5789 = vadd.f32 %v5565, 0.5
      %v5790 = vadd.f32 %v5566, 0.5
      %v5791 = vadd.f32 %v5567, 0.5
      %v5792 = vadd.f32 %v5568, 0.5
      %v5793 = vadd.f32 %v5569, 0.5
      %v5794 = vadd.f32 %v5570, 0.5
      %v5795 = vadd.f32 %v5571, 0.5
      %v5796 = vadd.f32 %v5572, 0.5
      %v5797 = vadd.f32 %v5573, 0.5
      %v5798 = vadd.f32 %v5574, 0.5
      %v5799 = vadd.f32 %v5575, 0.5
      %v5800 = vadd.f32 %v5576, 0.5
      %v5801 = vadd.f32 %v5577, 0.5
      %v5802 = vadd.f32 %v5578, 0.5
      %v5803 = vadd.f32 %v5579, 0.5
      %v5804 = vadd.f32 %v5580, 0.5
      %v5805 = vadd.f32 %v5581, 0.5
      %v5806 = vadd.f32 %v5582, 0.5
      %v5807 = vadd.f32 %v5583, 0.5
      %v5808 = vadd.f32 %v5584, 0.5
      %v5809 = vadd.f32 %v5585, 0.5
      %v5810 = vadd.f32 %v5586, 0.5
      %v5811 = vadd.f32 %v5587, 0.5
      %v5812 = vadd.f32 %v5588, 0.5
      %v5813 = vadd.f32 %v5589, 0.5
      %v5814 = vadd.f32 %v5590, 0.5
      %v5815 = vadd.f32 %v5591, 0.5
      %v5816 = vadd.f32 %v5592, 0.5
      %v5817 = vadd.f32 %v5593, 0.5
      %v5818 = vadd.f32 %v5594, 0.5
      %v5819 = vadd.f32 %v5595, 0.5
      %v5820 = vadd.f32 %v5596, 0.5
      %v5821 = vadd.f32 %v5597, 0.5
      %v5822 = vadd.f32 %v5598, 0.5
      %v5823 = vadd.f32 %v5599, 0.5
      %v5824 = vadd.f32 %v5600, 0.5
      %v5825 = vadd.f32 %v5601, 0.5
      %v5826 = vadd.f32 %v5602, 0.5
      %v5827 = vadd.f32 %v5603, 0.5
      %v5828 = vadd.f32 %v5604, 0.5
      %v5829 = vadd.f32 %v5605, 0.5
      %v5830 = vadd.f32 %v5606, 0.5
      %v5831 = vadd.f32 %v5607, 0.5
      %v5832 = vadd.f32 %v5608, 0.5
      %v5833 = vadd.f32 %v5609, 0.5
      %v5834 = vadd.f32 %v5610, 0.5
      %v5835 = vadd.f32 %v5611, 0.5
      %v5836 = vadd.f32 %v5612, 0.5
      %v5837 = vadd.f32 %v5613, 0.5
      %v5838 = vadd.f32 %v5614, 0.5
      %v5839 = vadd.f32 %v5615, 0.5
      %v5840 = vadd.f32 %v5616, 0.5
      %v5841 = vadd.f32 %v5617, 0.5
      %v5842 = vadd.f32 %v5618, 0.5
      %v5843 = vadd.f32 %v5619, 0.5
      %v5844 = vadd.f32 %v5620, 0.5
      %v5845 = vadd.f32 %v5621, 0.5
      %v5846 = vadd.f32 %v5622, 0.5
      %v5847 = vadd.f32 %v5623, 0.5
      %v5848 = vadd.f32 %v5624, 0.5
      %v5849 = vadd.f32 %v5625, 0.5
      %v5850 = vadd.f32 %v5626, 0.5
      %v5851 = vadd.f32 %v5627, 0.5
      %v5852 = vadd.f32 %v5628, 0.5
      %v5853 = vadd.f32 %v5629, 0.5
      %v5854 = vadd.f32 %v5630, 0.5
      %v5855 = vadd.f32 %v5631, 0.5
      %v5856 = vadd.f32 %v5632, 0.5
      %v5857 = vadd.f32 %v5633, 0.5
      %v5858 = vadd.f32 %v5634, 0.5
      %v5859 = vadd.f32 %v5635, 0.5
      %v5860 = vadd.f32 %v5636, 0.5
      %v5861 = vadd.f32 %v5637, 0.5
      %v5862 = vadd.f32 %v5638, 0.5
      %v5863 = vadd.f32 %v5639, 0.5
      %v5864 = vadd.f32 %v5640, 0.5
      %v5865 = vadd.f32 %v5641, 0.5
      %v5866 = vadd.f32 %v5642, 0.5
      %v5867 = vadd.f32 %v5643, 0.5
      %v5868 = vadd.f32 %v5644, 0.5
      %v5869 = vadd.f32 %v5645, 0.5
      %v5870 = vadd.f32 %v5646, 0.5
      %v5871 = vadd.f32 %v5647, 0.5
      %v5872 = vadd.f32 %v5648, 0.5
      %v5873 = vadd.f32 %v5649, 0.5
      %v5874 = vadd.f32 %v5650, 0.5
      %v5875 = vadd.f32 %v5651, 0.5
      %v5876 = vadd.f32 %v5652, 0.5
      %v5877 = vadd.f32 %v5653, 0.5
      %v5878 = vadd.f32 %v5654, 0.5
      %v5879 = vadd.f32 %v5655, 0.5
      %v5880 = vadd.f32 %v5656, 0.5
      %v5881 = vadd.f32 %v5657, 0.5
      %v5882 = vadd.f32 %v5658, 0.5
      %v5883 = vadd.f32 %v5659, 0.5
      %v5884 = vadd.f32 %v5660, 0.5
      %v5885 = vadd.f32 %v5661, 0.5
      %v5886 = vadd.f32 %v5662, 0.5
      %v5887 = vadd.f32 %v5663, 0.5
      %v5888 = vadd.f32 %v5664, 0.5
      %v5889 = vadd.f32 %v5665, 0.5
      %v5890 = vadd.f32 %v5666, 0.5
      %v5891 = vadd.f32 %v5667, 0.5
      %v5892 = vadd.f32 %v5668, 0.5
      %v5893 = vadd.f32 %v5669, 0.5
      %v5894 = vadd.f32 %v5670, 0.5
      %v5895 = vadd.f32 %v5671, 0.5
      %v5896 = vadd.f32 %v5672, 0.5
      %v5897 = vadd.f32 %v5673, 0.5
      %v5898 = vadd.f32 %v5674, 0.5
      %v5899 = vadd.f32 %v5675, 0.5
      %v5900 = vadd.f32 %v5676, 0.5
      %v5901 = vadd.f32 %v5677, 0.5
      %v5902 = vadd.f32 %v5678, 0.5
      %v5903 = vadd.f32 %v5679, 0.5
      %v5904 = vadd.f32 %v5680, 0.5
      %v5905 = vadd.f32 %v5681, 0.5
      %v5906 = vadd.f32 %v5682, 0.5
      %v5907 = vadd.f32 %v5683, 0.5
      %v5908 = vadd.f32 %v5684, 0.5
      %v5909 = vadd.f32 %v5685, 0.5
      %v5910 = vadd.f32 %v5686, 0.5
      %v5911 = vadd.f32 %v5687, 0.5
      %v5912 = vadd.f32 %v5688, 0.5
      %v5913 = vadd.f32 %v5689, 0.5
      %v5914 = vadd.f32 %v5690, 0.5
      %v5915 = vadd.f32 %v5691, 0.5
      %v5916 = vadd.f32 %v5692, 0.5
      %v5917 = vadd.f32 %v5693, 0.5
      %v5918 = vadd.f32 %v5694, 0.5
      %v5919 = vadd.f32 %v5695, 0.5
      %v5920 = vadd.f32 %v5696, 0.5
      %v5921 = vadd.f32 %v5697, 0.5
      %v5922 = vadd.f32 %v5698, 0.5
      %v5923 = vadd.f32 %v5699, 0.5
      %v5924 = vadd.f32 %v5700, 0.5
      %v5925 = vadd.f32 %v5701, 0.5
      %v5926 = vadd.f32 %v5702, 0.5
      %v5927 = vadd.f32 %v5703, 0.5
      %v5928 = vadd.f32 %v5704, 0.5
      %v5929 = vadd.f32 %v5705, 0.5
      %v5930 = vadd.f32 %v5706, 0.5
      %v5931 = vadd.f32 %v5707, 0.5
      %v5932 = vadd.f32 %v5708, 0.5
      %v5933 = vadd.f32 %v5709, 0.5
      %v5934 = vadd.f32 %v5710, 0.5
      %v5935 = vadd.f32 %v5711, 0.5
      %v5936 = vadd.f32 %v5712, 0.5
      %v5937 = vadd.f32 %v5713, 0.5
      %v5938 = vadd.f32 %v5714, 0.5
      %v5939 = vadd.f32 %v5715, 0.5
      %v5940 = vadd.f32 %v5716, 0.5
      %v5941 = vadd.f32 %v5717, 0.5
      %v5942 = vadd.f32 %v5718, 0.5
      %v5943 = vadd.f32 %v5719, 0.5
      %v5944 = vadd.f32 %v5720, 0.5
      %v5945 = vadd.f32 %v5721, 0.5
      %v5946 = vadd.f32 %v5722, 0.5
      %v5947 = vadd.f32 %v5723, 0.5
      %v5948 = vadd.f32 %v5724, 0.5
      %v5949 = vadd.f32 %v5725, 0.5
      %v5950 = vadd.f32 %v5726, 0.5
      %v5951 = vadd.f32 %v5727, 0.5
      %v5952 = vadd.f32 %v5728, 0.5
      %v5953 = vadd.f32 %v5729, 0.5
      %v5954 = vadd.f32 %v5730, 0.5
      %v5955 = vadd.f32 %v5731, 0.5
      %v5956 = vadd.f32 %v5732, 0.5
      %v5957 = vadd.f32 %v5733, 0.5
      %v5958 = vadd.f32 %v5734, 0.5
      %v5959 = vadd.f32 %v5735, 0.5
      %v5960 = vadd.f32 %v5736, 0.5
      %v5961 = vadd.f32 %v5737, 0.5
      %v5962 = vadd.f32 %v5738, 0.5
      %v5963 = vadd.f32 %v5739, 0.5
      %v5964 = vadd.f32 %v5740, 0.5
      %v5965 = vadd.f32 %v5741, 0.5
      %v5966 = vadd.f32 %v5742, 0.5
      %v5967 = vadd.f32 %v5743, 0.5
      %v5968 = vadd.f32 %v5744, 0.5
      %v5969 = vadd.f32 %v5745, 0.5
      %v5970 = vadd.f32 %v5746, 0.5
      %v5971 = vadd.f32 %v5747, 0.5
      %v5972 = vadd.f32 %v5748, 0.5
      %v5973 = vadd.f32 %v5749, 0.5
      %v5974 = vadd.f32 %v5750, 0.5
      %v5975 = vadd.f32 %v5751, 0.5
      %v5976 = vadd.f32 %v5752, 0.5
      %v5977 = vadd.f32 %v5753, 0.5
      %v5978 = vadd.f32 %v5754, 0.5
      %v5979 = vadd.f32 %v5755, 0.5
      %v5980 = vadd.f32 %v5756, 0.5
      %5981 = vst [vmem:[%s447] sm:$0xff] %v5757
      %5982 = vst [vmem:[%s447 + $0x8] sm:$0xff] %v5758
      %5983 = vst [vmem:[%s447 + $0x10] sm:$0xff] %v5759
      %5984 = vst [vmem:[%s447 + $0x18] sm:$0xff] %v5760
      %5985 = vst [vmem:[%s447 + $0x20] sm:$0xff] %v5761
      %5986 = vst [vmem:[%s447 + $0x28] sm:$0xff] %v5762
      %5987 = vst.msk [vmem:[%s447 + $0x30] sm:$0xff] %vm1386, %v5763
      %5988 = vst [vmem:[%s447 + $0x38] sm:$0xff] %v5764
      %5989 = vst [vmem:[%s447 + $0x40] sm:$0xff] %v5765
      %5990 = vst [vmem:[%s447 + $0x48] sm:$0xff] %v5766
      %5991 = vst [vmem:[%s447 + $0x50] sm:$0xff] %v5767
      %5992 = vst [vmem:[%s447 + $0x58] sm:$0xff] %v5768
      %5993 = vst [vmem:[%s447 + $0x60] sm:$0xff] %v5769
      %5994 = vst.msk [vmem:[%s447 + $0x68] sm:$0xff] %vm1386, %v5770
      %5995 = vst [vmem:[%s447 + $0x70] sm:$0xff] %v5771
      %5996 = vst [vmem:[%s447 + $0x78] sm:$0xff] %v5772
      %5997 = vst [vmem:[%s447 + $0x80] sm:$0xff] %v5773
      %5998 = vst [vmem:[%s447 + $0x88] sm:$0xff] %v5774
      %5999 = vst [vmem:[%s447 + $0x90] sm:$0xff] %v5775
      %6000 = vst [vmem:[%s447 + $0x98] sm:$0xff] %v5776
      %6001 = vst.msk [vmem:[%s447 + $0xa0] sm:$0xff] %vm1386, %v5777
      %6002 = vst [vmem:[%s447 + $0xa8] sm:$0xff] %v5778
      %6003 = vst [vmem:[%s447 + $0xb0] sm:$0xff] %v5779
      %6004 = vst [vmem:[%s447 + $0xb8] sm:$0xff] %v5780
      %6005 = vst [vmem:[%s447 + $0xc0] sm:$0xff] %v5781
      %6006 = vst [vmem:[%s447 + $0xc8] sm:$0xff] %v5782
      %6007 = vst [vmem:[%s447 + $0xd0] sm:$0xff] %v5783
      %6008 = vst.msk [vmem:[%s447 + $0xd8] sm:$0xff] %vm1386, %v5784
      %6009 = vst [vmem:[%s447 + $0xe0] sm:$0xff] %v5785
      %6010 = vst [vmem:[%s447 + $0xe8] sm:$0xff] %v5786
      %6011 = vst [vmem:[%s447 + $0xf0] sm:$0xff] %v5787
      %6012 = vst [vmem:[%s447 + $0xf8] sm:$0xff] %v5788
      %6013 = vst [vmem:[%s447 + $0x100] sm:$0xff] %v5789
      %6014 = vst [vmem:[%s447 + $0x108] sm:$0xff] %v5790
      %6015 = vst.msk [vmem:[%s447 + $0x110] sm:$0xff] %vm1386, %v5791
      %6016 = vst [vmem:[%s447 + $0x118] sm:$0xff] %v5792
      %6017 = vst [vmem:[%s447 + $0x120] sm:$0xff] %v5793
      %6018 = vst [vmem:[%s447 + $0x128] sm:$0xff] %v5794
      %6019 = vst [vmem:[%s447 + $0x130] sm:$0xff] %v5795
      %6020 = vst [vmem:[%s447 + $0x138] sm:$0xff] %v5796
      %6021 = vst [vmem:[%s447 + $0x140] sm:$0xff] %v5797
      %6022 = vst.msk [vmem:[%s447 + $0x148] sm:$0xff] %vm1386, %v5798
      %6023 = vst [vmem:[%s447 + $0x150] sm:$0xff] %v5799
      %6024 = vst [vmem:[%s447 + $0x158] sm:$0xff] %v5800
      %6025 = vst [vmem:[%s447 + $0x160] sm:$0xff] %v5801
      %6026 = vst [vmem:[%s447 + $0x168] sm:$0xff] %v5802
      %6027 = vst [vmem:[%s447 + $0x170] sm:$0xff] %v5803
      %6028 = vst [vmem:[%s447 + $0x178] sm:$0xff] %v5804
      %6029 = vst.msk [vmem:[%s447 + $0x180] sm:$0xff] %vm1386, %v5805
      %6030 = vst [vmem:[%s447 + $0x188] sm:$0xff] %v5806
      %6031 = vst [vmem:[%s447 + $0x190] sm:$0xff] %v5807
      %6032 = vst [vmem:[%s447 + $0x198] sm:$0xff] %v5808
      %6033 = vst [vmem:[%s447 + $0x1a0] sm:$0xff] %v5809
      %6034 = vst [vmem:[%s447 + $0x1a8] sm:$0xff] %v5810
      %6035 = vst [vmem:[%s447 + $0x1b0] sm:$0xff] %v5811
      %6036 = vst.msk [vmem:[%s447 + $0x1b8] sm:$0xff] %vm1386, %v5812
      %6037 = vst [vmem:[%s447 + $0x1c0] sm:$0xff] %v5813
      %6038 = vst [vmem:[%s447 + $0x1c8] sm:$0xff] %v5814
      %6039 = vst [vmem:[%s447 + $0x1d0] sm:$0xff] %v5815
      %6040 = vst [vmem:[%s447 + $0x1d8] sm:$0xff] %v5816
      %6041 = vst [vmem:[%s447 + $0x1e0] sm:$0xff] %v5817
      %6042 = vst [vmem:[%s447 + $0x1e8] sm:$0xff] %v5818
      %6043 = vst.msk [vmem:[%s447 + $0x1f0] sm:$0xff] %vm1386, %v5819
      %6044 = vst [vmem:[%s447 + $0x1f8] sm:$0xff] %v5820
      %6045 = vst [vmem:[%s447 + $0x200] sm:$0xff] %v5821
      %6046 = vst [vmem:[%s447 + $0x208] sm:$0xff] %v5822
      %6047 = vst [vmem:[%s447 + $0x210] sm:$0xff] %v5823
      %6048 = vst [vmem:[%s447 + $0x218] sm:$0xff] %v5824
      %6049 = vst [vmem:[%s447 + $0x220] sm:$0xff] %v5825
      %6050 = vst.msk [vmem:[%s447 + $0x228] sm:$0xff] %vm1386, %v5826
      %6051 = vst [vmem:[%s447 + $0x230] sm:$0xff] %v5827
      %6052 = vst [vmem:[%s447 + $0x238] sm:$0xff] %v5828
      %6053 = vst [vmem:[%s447 + $0x240] sm:$0xff] %v5829
      %6054 = vst [vmem:[%s447 + $0x248] sm:$0xff] %v5830
      %6055 = vst [vmem:[%s447 + $0x250] sm:$0xff] %v5831
      %6056 = vst [vmem:[%s447 + $0x258] sm:$0xff] %v5832
      %6057 = vst.msk [vmem:[%s447 + $0x260] sm:$0xff] %vm1386, %v5833
      %6058 = vst [vmem:[%s447 + $0x268] sm:$0xff] %v5834
      %6059 = vst [vmem:[%s447 + $0x270] sm:$0xff] %v5835
      %6060 = vst [vmem:[%s447 + $0x278] sm:$0xff] %v5836
      %6061 = vst [vmem:[%s447 + $0x280] sm:$0xff] %v5837
      %6062 = vst [vmem:[%s447 + $0x288] sm:$0xff] %v5838
      %6063 = vst [vmem:[%s447 + $0x290] sm:$0xff] %v5839
      %6064 = vst.msk [vmem:[%s447 + $0x298] sm:$0xff] %vm1386, %v5840
      %6065 = vst [vmem:[%s447 + $0x2a0] sm:$0xff] %v5841
      %6066 = vst [vmem:[%s447 + $0x2a8] sm:$0xff] %v5842
      %6067 = vst [vmem:[%s447 + $0x2b0] sm:$0xff] %v5843
      %6068 = vst [vmem:[%s447 + $0x2b8] sm:$0xff] %v5844
      %6069 = vst [vmem:[%s447 + $0x2c0] sm:$0xff] %v5845
      %6070 = vst [vmem:[%s447 + $0x2c8] sm:$0xff] %v5846
      %6071 = vst.msk [vmem:[%s447 + $0x2d0] sm:$0xff] %vm1386, %v5847
      %6072 = vst [vmem:[%s447 + $0x2d8] sm:$0xff] %v5848
      %6073 = vst [vmem:[%s447 + $0x2e0] sm:$0xff] %v5849
      %6074 = vst [vmem:[%s447 + $0x2e8] sm:$0xff] %v5850
      %6075 = vst [vmem:[%s447 + $0x2f0] sm:$0xff] %v5851
      %6076 = vst [vmem:[%s447 + $0x2f8] sm:$0xff] %v5852
      %6077 = vst [vmem:[%s447 + $0x300] sm:$0xff] %v5853
      %6078 = vst.msk [vmem:[%s447 + $0x308] sm:$0xff] %vm1386, %v5854
      %6079 = vst [vmem:[%s447 + $0x310] sm:$0xff] %v5855
      %6080 = vst [vmem:[%s447 + $0x318] sm:$0xff] %v5856
      %6081 = vst [vmem:[%s447 + $0x320] sm:$0xff] %v5857
      %6082 = vst [vmem:[%s447 + $0x328] sm:$0xff] %v5858
      %6083 = vst [vmem:[%s447 + $0x330] sm:$0xff] %v5859
      %6084 = vst [vmem:[%s447 + $0x338] sm:$0xff] %v5860
      %6085 = vst.msk [vmem:[%s447 + $0x340] sm:$0xff] %vm1386, %v5861
      %6086 = vst [vmem:[%s447 + $0x348] sm:$0xff] %v5862
      %6087 = vst [vmem:[%s447 + $0x350] sm:$0xff] %v5863
      %6088 = vst [vmem:[%s447 + $0x358] sm:$0xff] %v5864
      %6089 = vst [vmem:[%s447 + $0x360] sm:$0xff] %v5865
      %6090 = vst [vmem:[%s447 + $0x368] sm:$0xff] %v5866
      %6091 = vst [vmem:[%s447 + $0x370] sm:$0xff] %v5867
      %6092 = vst.msk [vmem:[%s447 + $0x378] sm:$0xff] %vm1386, %v5868
      %6093 = vst [vmem:[%s447 + $0x380] sm:$0xff] %v5869
      %6094 = vst [vmem:[%s447 + $0x388] sm:$0xff] %v5870
      %6095 = vst [vmem:[%s447 + $0x390] sm:$0xff] %v5871
      %6096 = vst [vmem:[%s447 + $0x398] sm:$0xff] %v5872
      %6097 = vst [vmem:[%s447 + $0x3a0] sm:$0xff] %v5873
      %6098 = vst [vmem:[%s447 + $0x3a8] sm:$0xff] %v5874
      %6099 = vst.msk [vmem:[%s447 + $0x3b0] sm:$0xff] %vm1386, %v5875
      %6100 = vst [vmem:[%s447 + $0x3b8] sm:$0xff] %v5876
      %6101 = vst [vmem:[%s447 + $0x3c0] sm:$0xff] %v5877
      %6102 = vst [vmem:[%s447 + $0x3c8] sm:$0xff] %v5878
      %6103 = vst [vmem:[%s447 + $0x3d0] sm:$0xff] %v5879
      %6104 = vst [vmem:[%s447 + $0x3d8] sm:$0xff] %v5880
      %6105 = vst [vmem:[%s447 + $0x3e0] sm:$0xff] %v5881
      %6106 = vst.msk [vmem:[%s447 + $0x3e8] sm:$0xff] %vm1386, %v5882
      %6107 = vst [vmem:[%s447 + $0x3f0] sm:$0xff] %v5883
      %6108 = vst [vmem:[%s447 + $0x3f8] sm:$0xff] %v5884
      %6109 = vst [vmem:[%s447 + $0x400] sm:$0xff] %v5885
      %6110 = vst [vmem:[%s447 + $0x408] sm:$0xff] %v5886
      %6111 = vst [vmem:[%s447 + $0x410] sm:$0xff] %v5887
      %6112 = vst [vmem:[%s447 + $0x418] sm:$0xff] %v5888
      %6113 = vst.msk [vmem:[%s447 + $0x420] sm:$0xff] %vm1386, %v5889
      %6114 = vst [vmem:[%s447 + $0x428] sm:$0xff] %v5890
      %6115 = vst [vmem:[%s447 + $0x430] sm:$0xff] %v5891
      %6116 = vst [vmem:[%s447 + $0x438] sm:$0xff] %v5892
      %6117 = vst [vmem:[%s447 + $0x440] sm:$0xff] %v5893
      %6118 = vst [vmem:[%s447 + $0x448] sm:$0xff] %v5894
      %6119 = vst [vmem:[%s447 + $0x450] sm:$0xff] %v5895
      %6120 = vst.msk [vmem:[%s447 + $0x458] sm:$0xff] %vm1386, %v5896
      %6121 = vst [vmem:[%s447 + $0x460] sm:$0xff] %v5897
      %6122 = vst [vmem:[%s447 + $0x468] sm:$0xff] %v5898
      %6123 = vst [vmem:[%s447 + $0x470] sm:$0xff] %v5899
      %6124 = vst [vmem:[%s447 + $0x478] sm:$0xff] %v5900
      %6125 = vst [vmem:[%s447 + $0x480] sm:$0xff] %v5901
      %6126 = vst [vmem:[%s447 + $0x488] sm:$0xff] %v5902
      %6127 = vst.msk [vmem:[%s447 + $0x490] sm:$0xff] %vm1386, %v5903
      %6128 = vst [vmem:[%s447 + $0x498] sm:$0xff] %v5904
      %6129 = vst [vmem:[%s447 + $0x4a0] sm:$0xff] %v5905
      %6130 = vst [vmem:[%s447 + $0x4a8] sm:$0xff] %v5906
      %6131 = vst [vmem:[%s447 + $0x4b0] sm:$0xff] %v5907
      %6132 = vst [vmem:[%s447 + $0x4b8] sm:$0xff] %v5908
      %6133 = vst [vmem:[%s447 + $0x4c0] sm:$0xff] %v5909
      %6134 = vst.msk [vmem:[%s447 + $0x4c8] sm:$0xff] %vm1386, %v5910
      %6135 = vst [vmem:[%s447 + $0x4d0] sm:$0xff] %v5911
      %6136 = vst [vmem:[%s447 + $0x4d8] sm:$0xff] %v5912
      %6137 = vst [vmem:[%s447 + $0x4e0] sm:$0xff] %v5913
      %6138 = vst [vmem:[%s447 + $0x4e8] sm:$0xff] %v5914
      %6139 = vst [vmem:[%s447 + $0x4f0] sm:$0xff] %v5915
      %6140 = vst [vmem:[%s447 + $0x4f8] sm:$0xff] %v5916
      %6141 = vst.msk [vmem:[%s447 + $0x500] sm:$0xff] %vm1386, %v5917
      %6142 = vst [vmem:[%s447 + $0x508] sm:$0xff] %v5918
      %6143 = vst [vmem:[%s447 + $0x510] sm:$0xff] %v5919
      %6144 = vst [vmem:[%s447 + $0x518] sm:$0xff] %v5920
      %6145 = vst [vmem:[%s447 + $0x520] sm:$0xff] %v5921
      %6146 = vst [vmem:[%s447 + $0x528] sm:$0xff] %v5922
      %6147 = vst [vmem:[%s447 + $0x530] sm:$0xff] %v5923
      %6148 = vst.msk [vmem:[%s447 + $0x538] sm:$0xff] %vm1386, %v5924
      %6149 = vst [vmem:[%s447 + $0x540] sm:$0xff] %v5925
      %6150 = vst [vmem:[%s447 + $0x548] sm:$0xff] %v5926
      %6151 = vst [vmem:[%s447 + $0x550] sm:$0xff] %v5927
      %6152 = vst [vmem:[%s447 + $0x558] sm:$0xff] %v5928
      %6153 = vst [vmem:[%s447 + $0x560] sm:$0xff] %v5929
      %6154 = vst [vmem:[%s447 + $0x568] sm:$0xff] %v5930
      %6155 = vst.msk [vmem:[%s447 + $0x570] sm:$0xff] %vm1386, %v5931
      %6156 = vst [vmem:[%s447 + $0x578] sm:$0xff] %v5932
      %6157 = vst [vmem:[%s447 + $0x580] sm:$0xff] %v5933
      %6158 = vst [vmem:[%s447 + $0x588] sm:$0xff] %v5934
      %6159 = vst [vmem:[%s447 + $0x590] sm:$0xff] %v5935
      %6160 = vst [vmem:[%s447 + $0x598] sm:$0xff] %v5936
      %6161 = vst [vmem:[%s447 + $0x5a0] sm:$0xff] %v5937
      %6162 = vst.msk [vmem:[%s447 + $0x5a8] sm:$0xff] %vm1386, %v5938
      %6163 = vst [vmem:[%s447 + $0x5b0] sm:$0xff] %v5939
      %6164 = vst [vmem:[%s447 + $0x5b8] sm:$0xff] %v5940
      %6165 = vst [vmem:[%s447 + $0x5c0] sm:$0xff] %v5941
      %6166 = vst [vmem:[%s447 + $0x5c8] sm:$0xff] %v5942
      %6167 = vst [vmem:[%s447 + $0x5d0] sm:$0xff] %v5943
      %6168 = vst [vmem:[%s447 + $0x5d8] sm:$0xff] %v5944
      %6169 = vst.msk [vmem:[%s447 + $0x5e0] sm:$0xff] %vm1386, %v5945
      %6170 = vst [vmem:[%s447 + $0x5e8] sm:$0xff] %v5946
      %6171 = vst [vmem:[%s447 + $0x5f0] sm:$0xff] %v5947
      %6172 = vst [vmem:[%s447 + $0x5f8] sm:$0xff] %v5948
      %6173 = vst [vmem:[%s447 + $0x600] sm:$0xff] %v5949
      %6174 = vst [vmem:[%s447 + $0x608] sm:$0xff] %v5950
      %6175 = vst [vmem:[%s447 + $0x610] sm:$0xff] %v5951
      %6176 = vst.msk [vmem:[%s447 + $0x618] sm:$0xff] %vm1386, %v5952
      %6177 = vst [vmem:[%s447 + $0x620] sm:$0xff] %v5953
      %6178 = vst [vmem:[%s447 + $0x628] sm:$0xff] %v5954
      %6179 = vst [vmem:[%s447 + $0x630] sm:$0xff] %v5955
      %6180 = vst [vmem:[%s447 + $0x638] sm:$0xff] %v5956
      %6181 = vst [vmem:[%s447 + $0x640] sm:$0xff] %v5957
      %6182 = vst [vmem:[%s447 + $0x648] sm:$0xff] %v5958
      %6183 = vst.msk [vmem:[%s447 + $0x650] sm:$0xff] %vm1386, %v5959
      %6184 = vst [vmem:[%s447 + $0x658] sm:$0xff] %v5960
      %6185 = vst [vmem:[%s447 + $0x660] sm:$0xff] %v5961
      %6186 = vst [vmem:[%s447 + $0x668] sm:$0xff] %v5962
      %6187 = vst [vmem:[%s447 + $0x670] sm:$0xff] %v5963
      %6188 = vst [vmem:[%s447 + $0x678] sm:$0xff] %v5964
      %6189 = vst [vmem:[%s447 + $0x680] sm:$0xff] %v5965
      %6190 = vst.msk [vmem:[%s447 + $0x688] sm:$0xff] %vm1386, %v5966
      %6191 = vst [vmem:[%s447 + $0x690] sm:$0xff] %v5967
      %6192 = vst [vmem:[%s447 + $0x698] sm:$0xff] %v5968
      %6193 = vst [vmem:[%s447 + $0x6a0] sm:$0xff] %v5969
      %6194 = vst [vmem:[%s447 + $0x6a8] sm:$0xff] %v5970
      %6195 = vst [vmem:[%s447 + $0x6b0] sm:$0xff] %v5971
      %6196 = vst [vmem:[%s447 + $0x6b8] sm:$0xff] %v5972
      %6197 = vst.msk [vmem:[%s447 + $0x6c0] sm:$0xff] %vm1386, %v5973
      %6198 = vst [vmem:[%s447 + $0x6c8] sm:$0xff] %v5974
      %6199 = vst [vmem:[%s447 + $0x6d0] sm:$0xff] %v5975
      %6200 = vst [vmem:[%s447 + $0x6d8] sm:$0xff] %v5976
      %6201 = vst [vmem:[%s447 + $0x6e0] sm:$0xff] %v5977
      %6202 = vst [vmem:[%s447 + $0x6e8] sm:$0xff] %v5978
      %6203 = vst [vmem:[%s447 + $0x6f0] sm:$0xff] %v5979
      %6204 = vst.msk [vmem:[%s447 + $0x6f8] sm:$0xff] %vm1386, %v5980
      %s6205 = smul.u32 32, %s24
      %p6206 = scmp.lt.s32.totalorder %s6205, 63
      %s6207 = scalar_select %p6206, %s6205, 63
      %s6208 = smul.addr %s6207, 7
      %s6209 = smul.addr %s6208, 8
      %s6210 = scalar_lea.vmem %s13, %s6209
      // Predicated region
      $region73: #{tpu_custom_call.1} parent=71 // pred_check
        %p6211 = pneg %p320
      $region74: #{tpu_custom_call.1} parent=71 // pred_check_branch
        %6213 = sbr.rel (%p6211) target = $region76
      $region75: #{tpu_custom_call.1} parent=71 // pred_region
        %s6214 = smul.u32 32, %s24
      $region76: #{tpu_custom_call.1} parent=71 // pred_fallthru
        _
    $region72: #{tpu_custom_call.1} parent=5 // pred_fallthru
      _
    %p6215 = scmp.le.s32.totalorder 2, %s19
    // Predicated region
    $region77: #{tpu_custom_call.1} parent=5 // pred_check
      %p6216 = pneg %p6215
    $region78: #{tpu_custom_call.1} parent=5 // pred_check_branch
      %6218 = sbr.rel (%p6216) target = $region80
    $region79: #{tpu_custom_call.1} parent=5 // pred_region
      %s6219 = ssub.s32 %s19, 2
      // Predicated region
      $region81: #{tpu_custom_call.1} parent=79 // pred_check
        %p6220 = pneg %p326
      $region82: #{tpu_custom_call.1} parent=79 // pred_check_branch
        %6222 = sbr.rel (%p6220) target = $region84
      $region83: #{tpu_custom_call.1} parent=79 // pred_region
        %s6223 = smul.u32 32, %s25
        %p6224 = scmp.lt.s32.totalorder %s6223, 63
        %s6225 = scalar_select %p6224, %s6223, 63
        %s6226 = smul.addr %s6225, 7
        %s6227 = smul.addr %s6226, 8
        %s6228 = scalar_lea.vmem %s13, %s6227
      $region84: #{tpu_custom_call.1} parent=79 // pred_fallthru
        _
    $region80: #{tpu_custom_call.1} parent=5 // pred_fallthru
      _
  $region6: #{tpu_custom_call.1} parent=0 // loop_footer
    %s23 = sadd.s32 1, %s19
  $region7: #{tpu_custom_call.1} parent=0 // loop_footer_branch
    %18 = sbr.rel target = $region3
  $region8: #{tpu_custom_call.1} parent=0 // loop_exit
    _

</llo_original>
